<compile_context>
chip_gen: v5e
topology: v5e:2x2
jax: 0.10.0
libtpu: 0.0.40
codegen_flags: <defaults>
</compile_context>

<pallas_src>
import jax
import jax.numpy as jnp
from jax.experimental import pallas as pl
from jax.experimental.pallas import tpu as pltpu

EPS = 1e-5


# ----------------------------- kernels ------------------------------------ #

def conv_relu_bn_pool_kernel(xcol_ref, w_ref, b_ref, scale_ref, shift_ref, o_ref, y_scr):
    """Single im2col matmul conv + bias + ReLU + BatchNorm(inference) + 2x2 max-pool s2.

    xcol_ref:  (1, H, W, 9*Cin)   im2col'd input block (taps ordered kh, kw, cin)
    w_ref:     (9*Cin, Cout)      conv weight flattened to tap-major rows
    b_ref:     (1, Cout)
    scale_ref: (1, Cout)          gamma / sqrt(var + eps)
    shift_ref: (1, Cout)          beta - mean * scale
    o_ref:     (1, H//2, W//2, Cout)
    y_scr:     (1, H, W, Cout)    VMEM scratch (pre-pool activations)
    """
    bb, H, W, K = xcol_ref.shape
    Cout = o_ref.shape[-1]
    M = bb * H * W

    # conv1: (1024, 27) @ (27, 32); conv2: (256, 288) @ (288, 64) -- one MXU matmul each.
    patches = xcol_ref[...].reshape(M, K)
    y = jnp.dot(patches, w_ref[...], preferred_element_type=jnp.float32)
    y = y + b_ref[...]                         # conv bias
    y = jnp.maximum(y, 0.0)                    # ReLU (before BN, as in forward())
    y = y * scale_ref[...] + shift_ref[...]    # BatchNorm (inference affine form)
    y_scr[...] = y.reshape(bb, H, W, Cout)

    # 2x2 max-pool, stride 2:
    #   W axis (second-minor): strided sublane loads; H axis (major): split-reshape + max.
    Hh, Wh = H // 2, W // 2
    w_even = y_scr[:, :, pl.ds(0, Wh, stride=2), :]     # (1, H, Wh, Cout)
    w_odd = y_scr[:, :, pl.ds(1, Wh, stride=2), :]
    yw = jnp.maximum(w_even, w_odd)
    yw = yw.reshape(bb, Hh, 2, Wh, Cout)
    o_ref[...] = jnp.max(yw, axis=2)


def fc_fused_kernel(x_ref, w1_ref, b1_ref, s1_ref, t1_ref, w2_ref, b2_ref, o_ref):
    """y = sigmoid( BN1d(ReLU(x @ W1 + b1)) @ W2 + b2 ), BN folded into scale/shift."""
    h = jnp.dot(x_ref[...], w1_ref[...], preferred_element_type=jnp.float32) + b1_ref[...]
    h = jnp.maximum(h, 0.0)
    h = h * s1_ref[...] + t1_ref[...]
    # TODO(synk): nn.Dropout(0.5) is inference-mode identity (training RNG mask omitted).
    y = jnp.dot(h, w2_ref[...], preferred_element_type=jnp.float32) + b2_ref[...]
    # sigmoid: exp on EUP, approximate reciprocal also on EUP (free bundle slot).
    o_ref[...] = pl.reciprocal(1.0 + jnp.exp(-y), approx=True)


# ----------------------------- wrappers ------------------------------------ #

def _bn_fold(gamma, beta, mean, var):
    scale = gamma / jnp.sqrt(var + EPS)
    shift = beta - mean * scale
    return scale, shift


def _im2col_3x3(x_nhwc):
    """(B, H, W, C) -> (B, H, W, 9*C); 'same' padding, taps ordered (kh, kw, c)."""
    B, H, W, C = x_nhwc.shape
    xp = jnp.pad(x_nhwc, ((0, 0), (1, 1), (1, 1), (0, 0)))
    cols = [xp[:, kh:kh + H, kw:kw + W, :] for kh in range(3) for kw in range(3)]
    return jnp.concatenate(cols, axis=-1)


def conv_block(xcol, w, b, scale, shift):
    """Batch-gridded fused conv+ReLU+BN+pool.  One sample per grid step."""
    B, H, W, K = xcol.shape
    Cout = w.shape[1]
    Hh, Wh = H // 2, W // 2
    return pl.pallas_call(
        conv_relu_bn_pool_kernel,
        out_shape=jax.ShapeDtypeStruct((B, Hh, Wh, Cout), jnp.float32),
        grid=(B,),
        in_specs=[
            pl.BlockSpec((1, H, W, K), lambda i: (i, 0, 0, 0)),
            pl.BlockSpec((K, Cout), lambda i: (0, 0)),      # weights resident across steps
            pl.BlockSpec((1, Cout), lambda i: (0, 0)),
            pl.BlockSpec((1, Cout), lambda i: (0, 0)),
            pl.BlockSpec((1, Cout), lambda i: (0, 0)),
        ],
        out_specs=pl.BlockSpec((1, Hh, Wh, Cout), lambda i: (i, 0, 0, 0)),
        scratch_shapes=[pltpu.VMEM((1, H, W, Cout), jnp.float32)],
        compiler_params=pltpu.CompilerParams(dimension_semantics=("parallel",)),
    )(xcol, w, b, scale, shift)


def fc_block(x, w1, b1, s1, t1, w2, b2):
    """Fused fc1+ReLU+BN1d+(dropout identity)+fc2+sigmoid.  Grid-less: everything
    (4 MiB wl1 + activations) co-resides in VMEM; one launch instead of two."""
    B = x.shape[0]
    N = w2.shape[1]
    vspec = pl.BlockSpec(memory_space=pltpu.MemorySpace.VMEM)
    return pl.pallas_call(
        fc_fused_kernel,
        out_shape=jax.ShapeDtypeStruct((B, N), jnp.float32),
        in_specs=[vspec] * 7,
        out_specs=vspec,
    )(x, w1, b1, s1, t1, w2, b2)


def prepare_params(p):
    """One-time parameter prep: fold BN, flatten conv weights to im2col layout,
    permute wl1 rows to NHWC-flatten order, pad fc2 to 256 output columns."""
    q = {}
    # conv1: 3 -> 32
    q["w1"] = p["w1"].reshape(9 * 3, 32)
    q["b1"] = p["b1"].reshape(1, 32)
    s, t = _bn_fold(p["g1"], p["beta1"], p["m1"], p["v1"])
    q["s1"], q["t1"] = s.reshape(1, 32), t.reshape(1, 32)
    # conv2: 32 -> 64
    q["w2"] = p["w2"].reshape(9 * 32, 64)
    q["b2"] = p["b2"].reshape(1, 64)
    s, t = _bn_fold(p["g2"], p["beta2"], p["m2"], p["v2"])
    q["s2"], q["t2"] = s.reshape(1, 64), t.reshape(1, 64)
    # fc1: rows go from PyTorch NCHW-flat order (c*64 + h*8 + w) to NHWC-flat
    # (h*512 + w*64 + c), so the conv output can be flattened without a transpose.
    q["wl1"] = p["wl1"].reshape(64, 8, 8, 256).transpose(1, 2, 0, 3).reshape(4096, 256)
    q["bl1"] = p["bl1"].reshape(1, 256)
    s, t = _bn_fold(p["gfc"], p["betafc"], p["mfc"], p["vfc"])
    q["sfc"], q["tfc"] = s.reshape(1, 256), t.reshape(1, 256)
    # fc2: pad 225 -> 256 output columns for unmasked lane-dense stores.
    q["wl2"] = jnp.pad(p["wl2"], ((0, 0), (0, 256 - 225)))
    q["bl2"] = jnp.pad(p["bl2"], (0, 256 - 225)).reshape(1, 256)
    return q


def cnn_forward(x_nchw, q):
    # NCHW -> NHWC at the boundary (channels ride the 128-lane axis in the kernels).
    x = jnp.transpose(x_nchw, (0, 2, 3, 1))
    x = conv_block(_im2col_3x3(x), q["w1"], q["b1"], q["s1"], q["t1"])   # (B,16,16,32)
    x = conv_block(_im2col_3x3(x), q["w2"], q["b2"], q["s2"], q["t2"])   # (B, 8, 8,64)
    # NHWC flatten is contiguous (free); wl1 was permuted to match at prepare time.
    xf = x.reshape(x.shape[0], -1)                                       # (B, 4096)
    out = fc_block(xf, q["wl1"], q["bl1"], q["sfc"], q["tfc"], q["wl2"], q["bl2"])
    return out[:, :225]                                                  # drop padding


# ----------------------------- params / main -------------------------------- #

def init_params(key):
    ks = jax.random.split(key, 20)
    f32 = jnp.float32
    p = {}
    # conv1: 3 -> 32, 3x3 (HWIO)
    p["w1"] = 0.1 * jax.random.normal(ks[0], (3, 3, 3, 32), f32)
    p["b1"] = 0.1 * jax.random.normal(ks[1], (32,), f32)
    p["g1"] = 1.0 + 0.1 * jax.random.normal(ks[2], (32,), f32)
    p["beta1"] = 0.1 * jax.random.normal(ks[3], (32,), f32)
    p["m1"] = 0.1 * jax.random.normal(ks[4], (32,), f32)
    p["v1"] = 1.0 + 0.1 * jnp.abs(jax.random.normal(ks[5], (32,), f32))
    # conv2: 32 -> 64, 3x3 (HWIO)
    p["w2"] = 0.05 * jax.random.normal(ks[6], (3, 3, 32, 64), f32)
    p["b2"] = 0.1 * jax.random.normal(ks[7], (64,), f32)
    p["g2"] = 1.0 + 0.1 * jax.random.normal(ks[8], (64,), f32)
    p["beta2"] = 0.1 * jax.random.normal(ks[9], (64,), f32)
    p["m2"] = 0.1 * jax.random.normal(ks[10], (64,), f32)
    p["v2"] = 1.0 + 0.1 * jnp.abs(jax.random.normal(ks[11], (64,), f32))
    # linear1: 4096 -> 256 (stored (in, out); in-dim indexed in PyTorch c*64 + h*8 + w order)
    p["wl1"] = 0.02 * jax.random.normal(ks[12], (64 * 8 * 8, 256), f32)
    p["bl1"] = 0.1 * jax.random.normal(ks[13], (256,), f32)
    p["gfc"] = 1.0 + 0.1 * jax.random.normal(ks[14], (256,), f32)
    p["betafc"] = 0.1 * jax.random.normal(ks[15], (256,), f32)
    p["mfc"] = 0.1 * jax.random.normal(ks[16], (256,), f32)
    p["vfc"] = 1.0 + 0.1 * jnp.abs(jax.random.normal(ks[17], (256,), f32))
    # linear2: 256 -> 225
    p["wl2"] = 0.05 * jax.random.normal(ks[18], (256, 225), f32)
    p["bl2"] = 0.1 * jax.random.normal(ks[19], (225,), f32)
    return p


if __name__ == "__main__":
    key = jax.random.PRNGKey(0)
    k_x, k_p = jax.random.split(key)
    # spatial size 32 is forced by linear1 in_features = 64 * 8 * 8
    x = jax.random.normal(k_x, (2, 3, 32, 32), jnp.float32)   # NCHW like PyTorch
    params = init_params(k_p)
    prepared = prepare_params(params)                          # one-time prep (outside jit)

    out = jax.jit(cnn_forward)(x, prepared)
    out = jax.block_until_ready(out)

    assert out.shape == (2, 225), out.shape
    assert bool(jnp.all(jnp.isfinite(out)))
    # approx=True reciprocal has ~2^-12 relative error; allow a tiny slack above 1.
    assert bool(jnp.all((out >= 0.0) & (out <= 1.0 + 1e-3)))
    print("KERNEL_OK")
</pallas_src>

<mosaic_0001>
module attributes {stable_mosaic.version = 11 : i64} {
  func.func @conv_relu_bn_pool_kernel(%arg0: i32, %arg1: memref<1x32x32x27xf32, #tpu.memory_space<vmem>>, %arg2: memref<27x32xf32, #tpu.memory_space<vmem>>, %arg3: memref<1x32xf32, #tpu.memory_space<vmem>>, %arg4: memref<1x32xf32, #tpu.memory_space<vmem>>, %arg5: memref<1x32xf32, #tpu.memory_space<vmem>>, %arg6: memref<1x16x16x32xf32, #tpu.memory_space<vmem>>, %arg7: memref<1x32x32x32xf32, #tpu.memory_space<vmem>>) attributes {dimension_semantics = [#tpu.dimension_semantics<parallel>], iteration_bounds = array<i64: 2>, scalar_prefetch = 0 : i64, scratch_operands = 1 : i64, tpu.core_type = #tpu.core_type<tc>, window_params = [{transform_indices = @transform_0, window_bounds = array<i64: 1, 32, 32, 27>}, {pipeline_mode = #tpu.pipeline_mode<synchronous>, transform_indices = @transform_1, window_bounds = array<i64: 27, 32>}, {pipeline_mode = #tpu.pipeline_mode<synchronous>, transform_indices = @transform_2, window_bounds = array<i64: 1, 32>}, {pipeline_mode = #tpu.pipeline_mode<synchronous>, transform_indices = @transform_3, window_bounds = array<i64: 1, 32>}, {pipeline_mode = #tpu.pipeline_mode<synchronous>, transform_indices = @transform_4, window_bounds = array<i64: 1, 32>}, {transform_indices = @transform_5, window_bounds = array<i64: 1, 16, 16, 32>}]} {
    %c0 = arith.constant 0 : index
    %c0_0 = arith.constant 0 : index
    %c0_1 = arith.constant 0 : index
    %c0_2 = arith.constant 0 : index
    %0 = vector.load %arg1[%c0, %c0_0, %c0_1, %c0_2] : memref<1x32x32x27xf32, #tpu.memory_space<vmem>>, vector<1x32x32x27xf32>
    %1 = vector.shape_cast %0 : vector<1x32x32x27xf32> to vector<1024x27xf32>
    %c0_3 = arith.constant 0 : index
    %c0_4 = arith.constant 0 : index
    %2 = vector.load %arg2[%c0_3, %c0_4] : memref<27x32xf32, #tpu.memory_space<vmem>>, vector<27x32xf32>
    %cst = arith.constant dense<0.000000e+00> : vector<1024x32xf32>
    %3 = tpu.matmul %1, %2, %cst {dimension_numbers = #tpu.dot_dimension_numbers<[1], [0], [0], [1], [0, 0, 1, 1], [], []>} : vector<1024x27xf32>, vector<27x32xf32>, vector<1024x32xf32> -> vector<1024x32xf32>
    %c0_5 = arith.constant 0 : index
    %c0_6 = arith.constant 0 : index
    %4 = vector.load %arg3[%c0_5, %c0_6] : memref<1x32xf32, #tpu.memory_space<vmem>>, vector<1x32xf32>
    %5 = vector.broadcast %4 : vector<1x32xf32> to vector<1024x32xf32>
    %6 = arith.addf %3, %5 : vector<1024x32xf32>
    %cst_7 = arith.constant 0.000000e+00 : f32
    %7 = vector.broadcast %cst_7 : f32 to vector<1024x32xf32>
    %8 = arith.maximumf %6, %7 : vector<1024x32xf32>
    %c0_8 = arith.constant 0 : index
    %c0_9 = arith.constant 0 : index
    %9 = vector.load %arg4[%c0_8, %c0_9] : memref<1x32xf32, #tpu.memory_space<vmem>>, vector<1x32xf32>
    %10 = vector.broadcast %9 : vector<1x32xf32> to vector<1024x32xf32>
    %11 = arith.mulf %8, %10 : vector<1024x32xf32>
    %c0_10 = arith.constant 0 : index
    %c0_11 = arith.constant 0 : index
    %12 = vector.load %arg5[%c0_10, %c0_11] : memref<1x32xf32, #tpu.memory_space<vmem>>, vector<1x32xf32>
    %13 = vector.broadcast %12 : vector<1x32xf32> to vector<1024x32xf32>
    %14 = arith.addf %11, %13 : vector<1024x32xf32>
    %15 = vector.shape_cast %14 : vector<1024x32xf32> to vector<1x32x32x32xf32>
    %c0_12 = arith.constant 0 : index
    %c0_13 = arith.constant 0 : index
    %c0_14 = arith.constant 0 : index
    %c0_15 = arith.constant 0 : index
    %16 = vector.load %arg7[%c0_12, %c0_13, %c0_14, %c0_15] : memref<1x32x32x32xf32, #tpu.memory_space<vmem>>, vector<1x32x32x32xf32>
    tpu.vector_store %arg7[%c0_12, %c0_13, %c0_14, %c0_15], %15 {strides = array<i32>} : memref<1x32x32x32xf32, #tpu.memory_space<vmem>>, vector<1x32x32x32xf32>,
    %c0_16 = arith.constant 0 : index
    %c0_17 = arith.constant 0 : index
    %c0_18 = arith.constant 0 : index
    %c0_19 = arith.constant 0 : index
    %17 = tpu.strided_load %arg7[%c0_16, %c0_17, %c0_18, %c0_19] {strides = array<i32: 1, 1, 2, 1>} : memref<1x32x32x32xf32, #tpu.memory_space<vmem>>, vector<1x32x16x32xf32>
    %c0_20 = arith.constant 0 : index
    %c0_21 = arith.constant 0 : index
    %c1 = arith.constant 1 : index
    %c0_22 = arith.constant 0 : index
    %18 = tpu.strided_load %arg7[%c0_20, %c0_21, %c1, %c0_22] {strides = array<i32: 1, 1, 2, 1>} : memref<1x32x32x32xf32, #tpu.memory_space<vmem>>, vector<1x32x16x32xf32>
    %19 = arith.maximumf %17, %18 : vector<1x32x16x32xf32>
    %20 = vector.shape_cast %19 : vector<1x32x16x32xf32> to vector<1x16x2x16x32xf32>
    %cst_23 = arith.constant dense<0xFF800000> : vector<1x16x16x32xf32>
    %21 = vector.multi_reduction <maximumf>, %20, %cst_23 [2] : vector<1x16x2x16x32xf32> to vector<1x16x16x32xf32>
    %c0_24 = arith.constant 0 : index
    %c0_25 = arith.constant 0 : index
    %c0_26 = arith.constant 0 : index
    %c0_27 = arith.constant 0 : index
    %22 = vector.load %arg6[%c0_24, %c0_25, %c0_26, %c0_27] : memref<1x16x16x32xf32, #tpu.memory_space<vmem>>, vector<1x16x16x32xf32>
    tpu.vector_store %arg6[%c0_24, %c0_25, %c0_26, %c0_27], %21 {strides = array<i32>} : memref<1x16x16x32xf32, #tpu.memory_space<vmem>>, vector<1x16x16x32xf32>,
    return
  }
  func.func @transform_0(%arg0: i32) -> (i32, i32, i32, i32) {
    %c0_i32 = arith.constant 0 : i32
    %c0_i32_0 = arith.constant 0 : i32
    %c0_i32_1 = arith.constant 0 : i32
    %c0_i32_2 = arith.constant 0 : i32
    return %arg0, %c0_i32, %c0_i32_0, %c0_i32_1 : i32, i32, i32, i32
  }
  func.func @transform_1(%arg0: i32) -> (i32, i32) {
    %c0_i32 = arith.constant 0 : i32
    %c0_i32_0 = arith.constant 0 : i32
    %c0_i32_1 = arith.constant 0 : i32
    return %c0_i32, %c0_i32_0 : i32, i32
  }
  func.func @transform_2(%arg0: i32) -> (i32, i32) {
    %c0_i32 = arith.constant 0 : i32
    %c0_i32_0 = arith.constant 0 : i32
    %c0_i32_1 = arith.constant 0 : i32
    return %c0_i32, %c0_i32_0 : i32, i32
  }
  func.func @transform_3(%arg0: i32) -> (i32, i32) {
    %c0_i32 = arith.constant 0 : i32
    %c0_i32_0 = arith.constant 0 : i32
    %c0_i32_1 = arith.constant 0 : i32
    return %c0_i32, %c0_i32_0 : i32, i32
  }
  func.func @transform_4(%arg0: i32) -> (i32, i32) {
    %c0_i32 = arith.constant 0 : i32
    %c0_i32_0 = arith.constant 0 : i32
    %c0_i32_1 = arith.constant 0 : i32
    return %c0_i32, %c0_i32_0 : i32, i32
  }
  func.func @transform_5(%arg0: i32) -> (i32, i32, i32, i32) {
    %c0_i32 = arith.constant 0 : i32
    %c0_i32_0 = arith.constant 0 : i32
    %c0_i32_1 = arith.constant 0 : i32
    %c0_i32_2 = arith.constant 0 : i32
    return %arg0, %c0_i32, %c0_i32_0, %c0_i32_1 : i32, i32, i32, i32
  }
}

module attributes {stable_mosaic.version = 11 : i64} {
  func.func @fc_fused_kernel(%arg0: memref<2x4096xf32, #tpu.memory_space<vmem>>, %arg1: memref<4096x256xf32, #tpu.memory_space<vmem>>, %arg2: memref<1x256xf32, #tpu.memory_space<vmem>>, %arg3: memref<1x256xf32, #tpu.memory_space<vmem>>, %arg4: memref<1x256xf32, #tpu.memory_space<vmem>>, %arg5: memref<256x256xf32, #tpu.memory_space<vmem>>, %arg6: memref<1x256xf32, #tpu.memory_space<vmem>>, %arg7: memref<2x256xf32, #tpu.memory_space<vmem>>) attributes {dimension_semantics = [], scalar_prefetch = 0 : i64, scratch_operands = 0 : i64, tpu.core_type = #tpu.core_type<tc>} {
    %c0 = arith.constant 0 : index
    %c0_0 = arith.constant 0 : index
    %0 = vector.load %arg0[%c0, %c0_0] : memref<2x4096xf32, #tpu.memory_space<vmem>>, vector<2x4096xf32>
    %c0_1 = arith.constant 0 : index
    %c0_2 = arith.constant 0 : index
    %1 = vector.load %arg1[%c0_1, %c0_2] : memref<4096x256xf32, #tpu.memory_space<vmem>>, vector<4096x256xf32>
    %cst = arith.constant dense<0.000000e+00> : vector<2x256xf32>
    %2 = tpu.matmul %0, %1, %cst {dimension_numbers = #tpu.dot_dimension_numbers<[1], [0], [0], [1], [0, 0, 1, 1], [], []>} : vector<2x4096xf32>, vector<4096x256xf32>, vector<2x256xf32> -> vector<2x256xf32>
    %c0_3 = arith.constant 0 : index
    %c0_4 = arith.constant 0 : index
    %3 = vector.load %arg2[%c0_3, %c0_4] : memref<1x256xf32, #tpu.memory_space<vmem>>, vector<1x256xf32>
    %4 = vector.broadcast %3 : vector<1x256xf32> to vector<2x256xf32>
    %5 = arith.addf %2, %4 : vector<2x256xf32>
    %cst_5 = arith.constant 0.000000e+00 : f32
    %6 = vector.broadcast %cst_5 : f32 to vector<2x256xf32>
    %7 = arith.maximumf %5, %6 : vector<2x256xf32>
    %c0_6 = arith.constant 0 : index
    %c0_7 = arith.constant 0 : index
    %8 = vector.load %arg3[%c0_6, %c0_7] : memref<1x256xf32, #tpu.memory_space<vmem>>, vector<1x256xf32>
    %9 = vector.broadcast %8 : vector<1x256xf32> to vector<2x256xf32>
    %10 = arith.mulf %7, %9 : vector<2x256xf32>
    %c0_8 = arith.constant 0 : index
    %c0_9 = arith.constant 0 : index
    %11 = vector.load %arg4[%c0_8, %c0_9] : memref<1x256xf32, #tpu.memory_space<vmem>>, vector<1x256xf32>
    %12 = vector.broadcast %11 : vector<1x256xf32> to vector<2x256xf32>
    %13 = arith.addf %10, %12 : vector<2x256xf32>
    %c0_10 = arith.constant 0 : index
    %c0_11 = arith.constant 0 : index
    %14 = vector.load %arg5[%c0_10, %c0_11] : memref<256x256xf32, #tpu.memory_space<vmem>>, vector<256x256xf32>
    %cst_12 = arith.constant dense<0.000000e+00> : vector<2x256xf32>
    %15 = tpu.matmul %13, %14, %cst_12 {dimension_numbers = #tpu.dot_dimension_numbers<[1], [0], [0], [1], [0, 0, 1, 1], [], []>} : vector<2x256xf32>, vector<256x256xf32>, vector<2x256xf32> -> vector<2x256xf32>
    %c0_13 = arith.constant 0 : index
    %c0_14 = arith.constant 0 : index
    %16 = vector.load %arg6[%c0_13, %c0_14] : memref<1x256xf32, #tpu.memory_space<vmem>>, vector<1x256xf32>
    %17 = vector.broadcast %16 : vector<1x256xf32> to vector<2x256xf32>
    %18 = arith.addf %15, %17 : vector<2x256xf32>
    %cst_15 = arith.constant 0.000000e+00 : f32
    %19 = vector.broadcast %cst_15 : f32 to vector<2x256xf32>
    %20 = arith.subf %19, %18 : vector<2x256xf32>
    %21 = math.exp %20 : vector<2x256xf32>
    %cst_16 = arith.constant 1.000000e+00 : f32
    %22 = vector.broadcast %cst_16 : f32 to vector<2x256xf32>
    %23 = arith.addf %22, %21 : vector<2x256xf32>
    %24 = tpu.reciprocal %23 {approx = true} : vector<2x256xf32> -> vector<2x256xf32>
    %c0_17 = arith.constant 0 : index
    %c0_18 = arith.constant 0 : index
    %25 = vector.load %arg7[%c0_17, %c0_18] : memref<2x256xf32, #tpu.memory_space<vmem>>, vector<2x256xf32>
    tpu.vector_store %arg7[%c0_17, %c0_18], %24 {strides = array<i32>} : memref<2x256xf32, #tpu.memory_space<vmem>>, vector<2x256xf32>,
    return
  }
}

module attributes {stable_mosaic.version = 11 : i64} {
  func.func @conv_relu_bn_pool_kernel(%arg0: i32, %arg1: memref<1x16x16x288xf32, #tpu.memory_space<vmem>>, %arg2: memref<288x64xf32, #tpu.memory_space<vmem>>, %arg3: memref<1x64xf32, #tpu.memory_space<vmem>>, %arg4: memref<1x64xf32, #tpu.memory_space<vmem>>, %arg5: memref<1x64xf32, #tpu.memory_space<vmem>>, %arg6: memref<1x8x8x64xf32, #tpu.memory_space<vmem>>, %arg7: memref<1x16x16x64xf32, #tpu.memory_space<vmem>>) attributes {dimension_semantics = [#tpu.dimension_semantics<parallel>], iteration_bounds = array<i64: 2>, scalar_prefetch = 0 : i64, scratch_operands = 1 : i64, tpu.core_type = #tpu.core_type<tc>, window_params = [{transform_indices = @transform_0, window_bounds = array<i64: 1, 16, 16, 288>}, {pipeline_mode = #tpu.pipeline_mode<synchronous>, transform_indices = @transform_1, window_bounds = array<i64: 288, 64>}, {pipeline_mode = #tpu.pipeline_mode<synchronous>, transform_indices = @transform_2, window_bounds = array<i64: 1, 64>}, {pipeline_mode = #tpu.pipeline_mode<synchronous>, transform_indices = @transform_3, window_bounds = array<i64: 1, 64>}, {pipeline_mode = #tpu.pipeline_mode<synchronous>, transform_indices = @transform_4, window_bounds = array<i64: 1, 64>}, {transform_indices = @transform_5, window_bounds = array<i64: 1, 8, 8, 64>}]} {
    %c0 = arith.constant 0 : index
    %c0_0 = arith.constant 0 : index
    %c0_1 = arith.constant 0 : index
    %c0_2 = arith.constant 0 : index
    %0 = vector.load %arg1[%c0, %c0_0, %c0_1, %c0_2] : memref<1x16x16x288xf32, #tpu.memory_space<vmem>>, vector<1x16x16x288xf32>
    %1 = vector.shape_cast %0 : vector<1x16x16x288xf32> to vector<256x288xf32>
    %c0_3 = arith.constant 0 : index
    %c0_4 = arith.constant 0 : index
    %2 = vector.load %arg2[%c0_3, %c0_4] : memref<288x64xf32, #tpu.memory_space<vmem>>, vector<288x64xf32>
    %cst = arith.constant dense<0.000000e+00> : vector<256x64xf32>
    %3 = tpu.matmul %1, %2, %cst {dimension_numbers = #tpu.dot_dimension_numbers<[1], [0], [0], [1], [0, 0, 1, 1], [], []>} : vector<256x288xf32>, vector<288x64xf32>, vector<256x64xf32> -> vector<256x64xf32>
    %c0_5 = arith.constant 0 : index
    %c0_6 = arith.constant 0 : index
    %4 = vector.load %arg3[%c0_5, %c0_6] : memref<1x64xf32, #tpu.memory_space<vmem>>, vector<1x64xf32>
    %5 = vector.broadcast %4 : vector<1x64xf32> to vector<256x64xf32>
    %6 = arith.addf %3, %5 : vector<256x64xf32>
    %cst_7 = arith.constant 0.000000e+00 : f32
    %7 = vector.broadcast %cst_7 : f32 to vector<256x64xf32>
    %8 = arith.maximumf %6, %7 : vector<256x64xf32>
    %c0_8 = arith.constant 0 : index
    %c0_9 = arith.constant 0 : index
    %9 = vector.load %arg4[%c0_8, %c0_9] : memref<1x64xf32, #tpu.memory_space<vmem>>, vector<1x64xf32>
    %10 = vector.broadcast %9 : vector<1x64xf32> to vector<256x64xf32>
    %11 = arith.mulf %8, %10 : vector<256x64xf32>
    %c0_10 = arith.constant 0 : index
    %c0_11 = arith.constant 0 : index
    %12 = vector.load %arg5[%c0_10, %c0_11] : memref<1x64xf32, #tpu.memory_space<vmem>>, vector<1x64xf32>
    %13 = vector.broadcast %12 : vector<1x64xf32> to vector<256x64xf32>
    %14 = arith.addf %11, %13 : vector<256x64xf32>
    %15 = vector.shape_cast %14 : vector<256x64xf32> to vector<1x16x16x64xf32>
    %c0_12 = arith.constant 0 : index
    %c0_13 = arith.constant 0 : index
    %c0_14 = arith.constant 0 : index
    %c0_15 = arith.constant 0 : index
    %16 = vector.load %arg7[%c0_12, %c0_13, %c0_14, %c0_15] : memref<1x16x16x64xf32, #tpu.memory_space<vmem>>, vector<1x16x16x64xf32>
    tpu.vector_store %arg7[%c0_12, %c0_13, %c0_14, %c0_15], %15 {strides = array<i32>} : memref<1x16x16x64xf32, #tpu.memory_space<vmem>>, vector<1x16x16x64xf32>,
    %c0_16 = arith.constant 0 : index
    %c0_17 = arith.constant 0 : index
    %c0_18 = arith.constant 0 : index
    %c0_19 = arith.constant 0 : index
    %17 = tpu.strided_load %arg7[%c0_16, %c0_17, %c0_18, %c0_19] {strides = array<i32: 1, 1, 2, 1>} : memref<1x16x16x64xf32, #tpu.memory_space<vmem>>, vector<1x16x8x64xf32>
    %c0_20 = arith.constant 0 : index
    %c0_21 = arith.constant 0 : index
    %c1 = arith.constant 1 : index
    %c0_22 = arith.constant 0 : index
    %18 = tpu.strided_load %arg7[%c0_20, %c0_21, %c1, %c0_22] {strides = array<i32: 1, 1, 2, 1>} : memref<1x16x16x64xf32, #tpu.memory_space<vmem>>, vector<1x16x8x64xf32>
    %19 = arith.maximumf %17, %18 : vector<1x16x8x64xf32>
    %20 = vector.shape_cast %19 : vector<1x16x8x64xf32> to vector<1x8x2x8x64xf32>
    %cst_23 = arith.constant dense<0xFF800000> : vector<1x8x8x64xf32>
    %21 = vector.multi_reduction <maximumf>, %20, %cst_23 [2] : vector<1x8x2x8x64xf32> to vector<1x8x8x64xf32>
    %c0_24 = arith.constant 0 : index
    %c0_25 = arith.constant 0 : index
    %c0_26 = arith.constant 0 : index
    %c0_27 = arith.constant 0 : index
    %22 = vector.load %arg6[%c0_24, %c0_25, %c0_26, %c0_27] : memref<1x8x8x64xf32, #tpu.memory_space<vmem>>, vector<1x8x8x64xf32>
    tpu.vector_store %arg6[%c0_24, %c0_25, %c0_26, %c0_27], %21 {strides = array<i32>} : memref<1x8x8x64xf32, #tpu.memory_space<vmem>>, vector<1x8x8x64xf32>,
    return
  }
  func.func @transform_0(%arg0: i32) -> (i32, i32, i32, i32) {
    %c0_i32 = arith.constant 0 : i32
    %c0_i32_0 = arith.constant 0 : i32
    %c0_i32_1 = arith.constant 0 : i32
    %c0_i32_2 = arith.constant 0 : i32
    return %arg0, %c0_i32, %c0_i32_0, %c0_i32_1 : i32, i32, i32, i32
  }
  func.func @transform_1(%arg0: i32) -> (i32, i32) {
    %c0_i32 = arith.constant 0 : i32
    %c0_i32_0 = arith.constant 0 : i32
    %c0_i32_1 = arith.constant 0 : i32
    return %c0_i32, %c0_i32_0 : i32, i32
  }
  func.func @transform_2(%arg0: i32) -> (i32, i32) {
    %c0_i32 = arith.constant 0 : i32
    %c0_i32_0 = arith.constant 0 : i32
    %c0_i32_1 = arith.constant 0 : i32
    return %c0_i32, %c0_i32_0 : i32, i32
  }
  func.func @transform_3(%arg0: i32) -> (i32, i32) {
    %c0_i32 = arith.constant 0 : i32
    %c0_i32_0 = arith.constant 0 : i32
    %c0_i32_1 = arith.constant 0 : i32
    return %c0_i32, %c0_i32_0 : i32, i32
  }
  func.func @transform_4(%arg0: i32) -> (i32, i32) {
    %c0_i32 = arith.constant 0 : i32
    %c0_i32_0 = arith.constant 0 : i32
    %c0_i32_1 = arith.constant 0 : i32
    return %c0_i32, %c0_i32_0 : i32, i32
  }
  func.func @transform_5(%arg0: i32) -> (i32, i32, i32, i32) {
    %c0_i32 = arith.constant 0 : i32
    %c0_i32_0 = arith.constant 0 : i32
    %c0_i32_1 = arith.constant 0 : i32
    %c0_i32_2 = arith.constant 0 : i32
    return %arg0, %c0_i32, %c0_i32_0, %c0_i32_1 : i32, i32, i32, i32
  }
}

</mosaic_0001>

<llo_original>
// kernel: cnn_forward.3
$region0: #{cnn_forward.3}
  #allocation0 [shape = 'u32[]', space=smem, size = 0x4, offset = 0x4, fixed_abs, tag = 'smem constant byte address 0x4 - core index']
  #allocation1 [shape = 'u32[72,128]{1,0:T(1,128)}', space=vmem, size = 0x9000, scoped, tag = 'internal scratch']
  #allocation2 [shape = 'f32[1,32,32,32]{3,2,1,0:T(8,128)}', space=vmem, size = 0x80000, scoped, tag = 'scratch operand']
  %s0 = inlined_call_operand.vmem [shape: f32[2,32,32,27], index: 0, kind: input, shape index: {}]
  %s1 = inlined_call_operand.vmem [shape: f32[27,32], index: 1, kind: input, shape index: {}]
  %s2 = inlined_call_operand.vmem [shape: f32[1,32], index: 2, kind: input, shape index: {}]
  %s3 = inlined_call_operand.vmem [shape: f32[1,32], index: 3, kind: input, shape index: {}]
  %s4 = inlined_call_operand.vmem [shape: f32[1,32], index: 4, kind: input, shape index: {}]
  %s5 = inlined_call_operand.vmem [shape: f32[2,16,16,32], index: 5, kind: output, shape index: {}]
  %s6 = sld [smem:[#allocation0]]
  $region53: #{cnn_forward.3} parent=0
    _
  %s8 = ssub.s32 1, %s6
  %s9 = scalar_select 0, %s8, %s6
  loop: start=0, step=1, limit=4
  $region2: #{cnn_forward.3} parent=0 // loop_pre_header
    _
  $region3: #{cnn_forward.3} parent=0 // loop_header
    %s11 = sphi 0, %s15
    %p12 = scmp.ge.s32.totalorder %s11, 4
    %s21 = sphi 0, %s23
    %s24 = sphi 0, %s21
    %s25 = sphi 0, %s24
    %s41 = sphi 0, %s25
    %s45 = sphi 0, %s45
    %s47 = sphi 0, %s45
    %s48 = sphi 0, %s47
    %s62 = sphi 0, %s48
    %s66 = sphi 0, %s66
    %s68 = sphi 0, %s66
    %s69 = sphi 0, %s68
    %s83 = sphi 0, %s69
    %s87 = sphi 0, %s87
    %s89 = sphi 0, %s87
    %s90 = sphi 0, %s89
    %s104 = sphi 0, %s90
    %s108 = sphi 0, %s108
    %s110 = sphi 0, %s108
    %s111 = sphi 0, %s110
    %s125 = sphi 0, %s111
    %s131 = sphi 0, %s133
    %s134 = sphi 0, %s131
    %s135 = sphi 0, %s134
    %s151 = sphi 0, %s135
  $region4: #{cnn_forward.3} parent=0 // loop_header_branch
    %14 = sbr.rel (%p12) target = $region8
  $region5: #{cnn_forward.3} parent=0 // loop_body
    %s16 = ssub.s32 %s11, 1
    %s17 = ssub.s32 %s11, 2
    %s18 = sadd.s32 %s11, 1
    %s19 = ssub.s32 %s11, %s18
    %p20 = scmp.eq.s32.totalorder %s19, 0
    %s22 = sadd.s32 %s21, 1
    %s23 = scalar_select %p20, %s21, %s22
    %p26 = pneg %p20
    %p27 = scmp.eq.s32.totalorder %s11, 1
    %p28 = por %p26, %p27
    %p29 = scmp.ne.s32.totalorder %s21, %s24
    %p30 = scmp.eq.s32.totalorder %s11, 0
    %p31 = por %p29, %p30
    %p32 = scmp.ne.s32.totalorder %s21, %s24
    %p33 = scmp.eq.s32.totalorder %s16, 1
    %p34 = por %p32, %p33
    %p35 = scmp.ne.s32.totalorder %s24, %s25
    %p36 = scmp.eq.s32.totalorder %s16, 0
    %p37 = por %p35, %p36
    %p38 = scmp.ne.s32.totalorder %s24, %s25
    %p39 = scmp.eq.s32.totalorder %s17, 1
    %p40 = por %p38, %p39
    %p42 = scmp.ne.s32.totalorder %s25, %s41
    %p43 = scmp.eq.s32.totalorder %s17, 0
    %p44 = por %p42, %p43
    %s46 = sadd.s32 %s45, 1
    %p49 = scmp.eq.s32.totalorder %s11, 1
    %p50 = scmp.ne.s32.totalorder %s45, %s47
    %p51 = scmp.eq.s32.totalorder %s11, 0
    %p52 = por %p50, %p51
    %p53 = scmp.ne.s32.totalorder %s45, %s47
    %p54 = scmp.eq.s32.totalorder %s16, 1
    %p55 = por %p53, %p54
    %p56 = scmp.ne.s32.totalorder %s47, %s48
    %p57 = scmp.eq.s32.totalorder %s16, 0
    %p58 = por %p56, %p57
    %p59 = scmp.ne.s32.totalorder %s47, %s48
    %p60 = scmp.eq.s32.totalorder %s17, 1
    %p61 = por %p59, %p60
    %p63 = scmp.ne.s32.totalorder %s48, %s62
    %p64 = scmp.eq.s32.totalorder %s17, 0
    %p65 = por %p63, %p64
    %s67 = sadd.s32 %s66, 1
    %p70 = scmp.eq.s32.totalorder %s11, 1
    %p71 = scmp.ne.s32.totalorder %s66, %s68
    %p72 = scmp.eq.s32.totalorder %s11, 0
    %p73 = por %p71, %p72
    %p74 = scmp.ne.s32.totalorder %s66, %s68
    %p75 = scmp.eq.s32.totalorder %s16, 1
    %p76 = por %p74, %p75
    %p77 = scmp.ne.s32.totalorder %s68, %s69
    %p78 = scmp.eq.s32.totalorder %s16, 0
    %p79 = por %p77, %p78
    %p80 = scmp.ne.s32.totalorder %s68, %s69
    %p81 = scmp.eq.s32.totalorder %s17, 1
    %p82 = por %p80, %p81
    %p84 = scmp.ne.s32.totalorder %s69, %s83
    %p85 = scmp.eq.s32.totalorder %s17, 0
    %p86 = por %p84, %p85
    %s88 = sadd.s32 %s87, 1
    %p91 = scmp.eq.s32.totalorder %s11, 1
    %p92 = scmp.ne.s32.totalorder %s87, %s89
    %p93 = scmp.eq.s32.totalorder %s11, 0
    %p94 = por %p92, %p93
    %p95 = scmp.ne.s32.totalorder %s87, %s89
    %p96 = scmp.eq.s32.totalorder %s16, 1
    %p97 = por %p95, %p96
    %p98 = scmp.ne.s32.totalorder %s89, %s90
    %p99 = scmp.eq.s32.totalorder %s16, 0
    %p100 = por %p98, %p99
    %p101 = scmp.ne.s32.totalorder %s89, %s90
    %p102 = scmp.eq.s32.totalorder %s17, 1
    %p103 = por %p101, %p102
    %p105 = scmp.ne.s32.totalorder %s90, %s104
    %p106 = scmp.eq.s32.totalorder %s17, 0
    %p107 = por %p105, %p106
    %s109 = sadd.s32 %s108, 1
    %p112 = scmp.eq.s32.totalorder %s11, 1
    %p113 = scmp.ne.s32.totalorder %s108, %s110
    %p114 = scmp.eq.s32.totalorder %s11, 0
    %p115 = por %p113, %p114
    %p116 = scmp.ne.s32.totalorder %s108, %s110
    %p117 = scmp.eq.s32.totalorder %s16, 1
    %p118 = por %p116, %p117
    %p119 = scmp.ne.s32.totalorder %s110, %s111
    %p120 = scmp.eq.s32.totalorder %s16, 0
    %p121 = por %p119, %p120
    %p122 = scmp.ne.s32.totalorder %s110, %s111
    %p123 = scmp.eq.s32.totalorder %s17, 1
    %p124 = por %p122, %p123
    %p126 = scmp.ne.s32.totalorder %s111, %s125
    %p127 = scmp.eq.s32.totalorder %s17, 0
    %p128 = por %p126, %p127
    %s129 = ssub.s32 %s11, %s18
    %p130 = scmp.eq.s32.totalorder %s129, 0
    %s132 = sadd.s32 %s131, 1
    %s133 = scalar_select %p130, %s131, %s132
    %p136 = pneg %p130
    %p137 = scmp.eq.s32.totalorder %s11, 1
    %p138 = por %p136, %p137
    %p139 = scmp.ne.s32.totalorder %s131, %s134
    %p140 = scmp.eq.s32.totalorder %s11, 0
    %p141 = por %p139, %p140
    %p142 = scmp.ne.s32.totalorder %s131, %s134
    %p143 = scmp.eq.s32.totalorder %s16, 1
    %p144 = por %p142, %p143
    %p145 = scmp.ne.s32.totalorder %s134, %s135
    %p146 = scmp.eq.s32.totalorder %s16, 0
    %p147 = por %p145, %p146
    %p148 = scmp.ne.s32.totalorder %s134, %s135
    %p149 = scmp.eq.s32.totalorder %s17, 1
    %p150 = por %p148, %p149
    %p152 = scmp.ne.s32.totalorder %s135, %s151
    %p153 = scmp.eq.s32.totalorder %s17, 0
    %p154 = por %p152, %p153
    %p155 = scmp.le.s32.totalorder 1, %s11
    %p156 = scmp.lt.s32.totalorder %s11, 3
    %p157 = pnand %p155, %p156
    %p158 = pneg %p157
    // Predicated region
    $region9: #{cnn_forward.3} parent=5 // pred_check
      _
    $region10: #{cnn_forward.3} parent=5 // pred_check_branch
      %160 = sbr.rel (%p157) target = $region12
    $region11: #{cnn_forward.3} parent=5 // pred_region
      %s161 = ssub.s32 %s11, 1
      // Predicated region
      $region13: #{cnn_forward.3} parent=11 // pred_check
        %p162 = pneg %p58
      $region14: #{cnn_forward.3} parent=11 // pred_check_branch
        %164 = sbr.rel (%p162) target = $region16
      $region15: #{cnn_forward.3} parent=11 // pred_region
        _
      $region16: #{cnn_forward.3} parent=11 // pred_fallthru
        _
      // Predicated region
      $region17: #{cnn_forward.3} parent=11 // pred_check
        %p165 = pneg %p79
      $region18: #{cnn_forward.3} parent=11 // pred_check_branch
        %167 = sbr.rel (%p165) target = $region20
      $region19: #{cnn_forward.3} parent=11 // pred_region
        _
      $region20: #{cnn_forward.3} parent=11 // pred_fallthru
        _
      // Predicated region
      $region21: #{cnn_forward.3} parent=11 // pred_check
        %p168 = pneg %p100
      $region22: #{cnn_forward.3} parent=11 // pred_check_branch
        %170 = sbr.rel (%p168) target = $region24
      $region23: #{cnn_forward.3} parent=11 // pred_region
        _
      $region24: #{cnn_forward.3} parent=11 // pred_fallthru
        _
      // Predicated region
      $region25: #{cnn_forward.3} parent=11 // pred_check
        %p171 = pneg %p121
      $region26: #{cnn_forward.3} parent=11 // pred_check_branch
        %173 = sbr.rel (%p171) target = $region28
      $region27: #{cnn_forward.3} parent=11 // pred_region
        _
      $region28: #{cnn_forward.3} parent=11 // pred_fallthru
        _
    $region12: #{cnn_forward.3} parent=5 // pred_fallthru
      _
    %p174 = scmp.lt.s32.totalorder %s11, 2
    // Predicated region
    $region29: #{cnn_forward.3} parent=5 // pred_check
      %p175 = pneg %p174
    $region30: #{cnn_forward.3} parent=5 // pred_check_branch
      %177 = sbr.rel (%p175) target = $region32
    $region31: #{cnn_forward.3} parent=5 // pred_region
      // Predicated region
      $region33: #{cnn_forward.3} parent=31 // pred_check
        %p178 = pneg %p31
      $region34: #{cnn_forward.3} parent=31 // pred_check_branch
        %180 = sbr.rel (%p178) target = $region36
      $region35: #{cnn_forward.3} parent=31 // pred_region
        %p181 = scmp.lt.s32.totalorder %s11, 1
        %s182 = scalar_select %p181, %s11, 1
        %s183 = smul.addr %s182, 128
        %s184 = smul.addr %s183, 8
        %s185 = scalar_lea.vmem %s0, %s184
      $region36: #{cnn_forward.3} parent=31 // pred_fallthru
        _
    $region32: #{cnn_forward.3} parent=5 // pred_fallthru
      _
    %p186 = scmp.le.s32.totalorder 1, %s11
    %p187 = scmp.lt.s32.totalorder %s11, 3
    %p188 = pnand %p186, %p187
    %p189 = pneg %p188
    // Predicated region
    $region37: #{cnn_forward.3} parent=5 // pred_check
      _
    $region38: #{cnn_forward.3} parent=5 // pred_check_branch
      %191 = sbr.rel (%p188) target = $region40
    $region39: #{cnn_forward.3} parent=5 // pred_region
      %s192 = ssub.s32 %s11, 1
      %p193 = scmp.lt.s32.totalorder %s16, 1
      %s194 = scalar_select %p193, %s16, 1
      %s195 = smul.addr %s194, 128
      %s196 = smul.addr %s195, 8
      %s197 = scalar_lea.vmem %s0, %s196
      %p198 = pneg %p37
      %p199 = pneg %p34
      %p200 = pneg %p58
      %p201 = pneg %p55
      %p202 = pneg %p79
      %p203 = pneg %p76
      %p204 = pneg %p100
      %p205 = pneg %p97
      %p206 = pneg %p121
      %p207 = pneg %p118
      %p208 = pneg %p147
      %p209 = pneg %p144
      %p210 = scmp.lt.s32.totalorder %s16, 1
      %s211 = scalar_select %p210, %s16, 1
      %s212 = smul.addr %s211, 32
      %s213 = smul.addr %s212, 8
      %s214 = scalar_lea.vmem %s5, %s213
      %p215 = scmp.lt.s32.totalorder %s16, 1
      %s216 = scalar_select %p215, %s16, 1
      %s217 = smul.addr %s216, 128
      %s218 = smul.addr %s217, 8
      %s219 = scalar_lea.vmem %s0, %s218
      %p220 = scmp.lt.s32.totalorder %s16, 1
      %s221 = scalar_select %p220, %s16, 1
      %s222 = smul.addr %s221, 32
      %s223 = smul.addr %s222, 8
      %s224 = scalar_lea.vmem %s5, %s223
      %v225 = vld [vmem:[%s219] sm:$0xff]
      %v226 = vld [vmem:[%s219 + $0x8] sm:$0xff]
      %v227 = vld [vmem:[%s219 + $0x10] sm:$0xff]
      %v228 = vld [vmem:[%s219 + $0x18] sm:$0xff]
      %v229 = vld [vmem:[%s219 + $0x20] sm:$0xff]
      %v230 = vld [vmem:[%s219 + $0x28] sm:$0xff]
      %v231 = vld [vmem:[%s219 + $0x30] sm:$0xff]
      %v232 = vld [vmem:[%s219 + $0x38] sm:$0xff]
      %v233 = vld [vmem:[%s219 + $0x40] sm:$0xff]
      %v234 = vld [vmem:[%s219 + $0x48] sm:$0xff]
      %v235 = vld [vmem:[%s219 + $0x50] sm:$0xff]
      %v236 = vld [vmem:[%s219 + $0x58] sm:$0xff]
      %v237 = vld [vmem:[%s219 + $0x60] sm:$0xff]
      %v238 = vld [vmem:[%s219 + $0x68] sm:$0xff]
      %v239 = vld [vmem:[%s219 + $0x70] sm:$0xff]
      %v240 = vld [vmem:[%s219 + $0x78] sm:$0xff]
      %v241 = vld [vmem:[%s219 + $0x80] sm:$0xff]
      %v242 = vld [vmem:[%s219 + $0x88] sm:$0xff]
      %v243 = vld [vmem:[%s219 + $0x90] sm:$0xff]
      %v244 = vld [vmem:[%s219 + $0x98] sm:$0xff]
      %v245 = vld [vmem:[%s219 + $0xa0] sm:$0xff]
      %v246 = vld [vmem:[%s219 + $0xa8] sm:$0xff]
      %v247 = vld [vmem:[%s219 + $0xb0] sm:$0xff]
      %v248 = vld [vmem:[%s219 + $0xb8] sm:$0xff]
      %v249 = vld [vmem:[%s219 + $0xc0] sm:$0xff]
      %v250 = vld [vmem:[%s219 + $0xc8] sm:$0xff]
      %v251 = vld [vmem:[%s219 + $0xd0] sm:$0xff]
      %v252 = vld [vmem:[%s219 + $0xd8] sm:$0xff]
      %v253 = vld [vmem:[%s219 + $0xe0] sm:$0xff]
      %v254 = vld [vmem:[%s219 + $0xe8] sm:$0xff]
      %v255 = vld [vmem:[%s219 + $0xf0] sm:$0xff]
      %v256 = vld [vmem:[%s219 + $0xf8] sm:$0xff]
      %v257 = vld [vmem:[%s219 + $0x100] sm:$0xff]
      %v258 = vld [vmem:[%s219 + $0x108] sm:$0xff]
      %v259 = vld [vmem:[%s219 + $0x110] sm:$0xff]
      %v260 = vld [vmem:[%s219 + $0x118] sm:$0xff]
      %v261 = vld [vmem:[%s219 + $0x120] sm:$0xff]
      %v262 = vld [vmem:[%s219 + $0x128] sm:$0xff]
      %v263 = vld [vmem:[%s219 + $0x130] sm:$0xff]
      %v264 = vld [vmem:[%s219 + $0x138] sm:$0xff]
      %v265 = vld [vmem:[%s219 + $0x140] sm:$0xff]
      %v266 = vld [vmem:[%s219 + $0x148] sm:$0xff]
      %v267 = vld [vmem:[%s219 + $0x150] sm:$0xff]
      %v268 = vld [vmem:[%s219 + $0x158] sm:$0xff]
      %v269 = vld [vmem:[%s219 + $0x160] sm:$0xff]
      %v270 = vld [vmem:[%s219 + $0x168] sm:$0xff]
      %v271 = vld [vmem:[%s219 + $0x170] sm:$0xff]
      %v272 = vld [vmem:[%s219 + $0x178] sm:$0xff]
      %v273 = vld [vmem:[%s219 + $0x180] sm:$0xff]
      %v274 = vld [vmem:[%s219 + $0x188] sm:$0xff]
      %v275 = vld [vmem:[%s219 + $0x190] sm:$0xff]
      %v276 = vld [vmem:[%s219 + $0x198] sm:$0xff]
      %v277 = vld [vmem:[%s219 + $0x1a0] sm:$0xff]
      %v278 = vld [vmem:[%s219 + $0x1a8] sm:$0xff]
      %v279 = vld [vmem:[%s219 + $0x1b0] sm:$0xff]
      %v280 = vld [vmem:[%s219 + $0x1b8] sm:$0xff]
      %v281 = vld [vmem:[%s219 + $0x1c0] sm:$0xff]
      %v282 = vld [vmem:[%s219 + $0x1c8] sm:$0xff]
      %v283 = vld [vmem:[%s219 + $0x1d0] sm:$0xff]
      %v284 = vld [vmem:[%s219 + $0x1d8] sm:$0xff]
      %v285 = vld [vmem:[%s219 + $0x1e0] sm:$0xff]
      %v286 = vld [vmem:[%s219 + $0x1e8] sm:$0xff]
      %v287 = vld [vmem:[%s219 + $0x1f0] sm:$0xff]
      %v288 = vld [vmem:[%s219 + $0x1f8] sm:$0xff]
      %v289 = vld [vmem:[%s219 + $0x200] sm:$0xff]
      %v290 = vld [vmem:[%s219 + $0x208] sm:$0xff]
      %v291 = vld [vmem:[%s219 + $0x210] sm:$0xff]
      %v292 = vld [vmem:[%s219 + $0x218] sm:$0xff]
      %v293 = vld [vmem:[%s219 + $0x220] sm:$0xff]
      %v294 = vld [vmem:[%s219 + $0x228] sm:$0xff]
      %v295 = vld [vmem:[%s219 + $0x230] sm:$0xff]
      %v296 = vld [vmem:[%s219 + $0x238] sm:$0xff]
      %v297 = vld [vmem:[%s219 + $0x240] sm:$0xff]
      %v298 = vld [vmem:[%s219 + $0x248] sm:$0xff]
      %v299 = vld [vmem:[%s219 + $0x250] sm:$0xff]
      %v300 = vld [vmem:[%s219 + $0x258] sm:$0xff]
      %v301 = vld [vmem:[%s219 + $0x260] sm:$0xff]
      %v302 = vld [vmem:[%s219 + $0x268] sm:$0xff]
      %v303 = vld [vmem:[%s219 + $0x270] sm:$0xff]
      %v304 = vld [vmem:[%s219 + $0x278] sm:$0xff]
      %v305 = vld [vmem:[%s219 + $0x280] sm:$0xff]
      %v306 = vld [vmem:[%s219 + $0x288] sm:$0xff]
      %v307 = vld [vmem:[%s219 + $0x290] sm:$0xff]
      %v308 = vld [vmem:[%s219 + $0x298] sm:$0xff]
      %v309 = vld [vmem:[%s219 + $0x2a0] sm:$0xff]
      %v310 = vld [vmem:[%s219 + $0x2a8] sm:$0xff]
      %v311 = vld [vmem:[%s219 + $0x2b0] sm:$0xff]
      %v312 = vld [vmem:[%s219 + $0x2b8] sm:$0xff]
      %v313 = vld [vmem:[%s219 + $0x2c0] sm:$0xff]
      %v314 = vld [vmem:[%s219 + $0x2c8] sm:$0xff]
      %v315 = vld [vmem:[%s219 + $0x2d0] sm:$0xff]
      %v316 = vld [vmem:[%s219 + $0x2d8] sm:$0xff]
      %v317 = vld [vmem:[%s219 + $0x2e0] sm:$0xff]
      %v318 = vld [vmem:[%s219 + $0x2e8] sm:$0xff]
      %v319 = vld [vmem:[%s219 + $0x2f0] sm:$0xff]
      %v320 = vld [vmem:[%s219 + $0x2f8] sm:$0xff]
      %v321 = vld [vmem:[%s219 + $0x300] sm:$0xff]
      %v322 = vld [vmem:[%s219 + $0x308] sm:$0xff]
      %v323 = vld [vmem:[%s219 + $0x310] sm:$0xff]
      %v324 = vld [vmem:[%s219 + $0x318] sm:$0xff]
      %v325 = vld [vmem:[%s219 + $0x320] sm:$0xff]
      %v326 = vld [vmem:[%s219 + $0x328] sm:$0xff]
      %v327 = vld [vmem:[%s219 + $0x330] sm:$0xff]
      %v328 = vld [vmem:[%s219 + $0x338] sm:$0xff]
      %v329 = vld [vmem:[%s219 + $0x340] sm:$0xff]
      %v330 = vld [vmem:[%s219 + $0x348] sm:$0xff]
      %v331 = vld [vmem:[%s219 + $0x350] sm:$0xff]
      %v332 = vld [vmem:[%s219 + $0x358] sm:$0xff]
      %v333 = vld [vmem:[%s219 + $0x360] sm:$0xff]
      %v334 = vld [vmem:[%s219 + $0x368] sm:$0xff]
      %v335 = vld [vmem:[%s219 + $0x370] sm:$0xff]
      %v336 = vld [vmem:[%s219 + $0x378] sm:$0xff]
      %v337 = vld [vmem:[%s219 + $0x380] sm:$0xff]
      %v338 = vld [vmem:[%s219 + $0x388] sm:$0xff]
      %v339 = vld [vmem:[%s219 + $0x390] sm:$0xff]
      %v340 = vld [vmem:[%s219 + $0x398] sm:$0xff]
      %v341 = vld [vmem:[%s219 + $0x3a0] sm:$0xff]
      %v342 = vld [vmem:[%s219 + $0x3a8] sm:$0xff]
      %v343 = vld [vmem:[%s219 + $0x3b0] sm:$0xff]
      %v344 = vld [vmem:[%s219 + $0x3b8] sm:$0xff]
      %v345 = vld [vmem:[%s219 + $0x3c0] sm:$0xff]
      %v346 = vld [vmem:[%s219 + $0x3c8] sm:$0xff]
      %v347 = vld [vmem:[%s219 + $0x3d0] sm:$0xff]
      %v348 = vld [vmem:[%s219 + $0x3d8] sm:$0xff]
      %v349 = vld [vmem:[%s219 + $0x3e0] sm:$0xff]
      %v350 = vld [vmem:[%s219 + $0x3e8] sm:$0xff]
      %v351 = vld [vmem:[%s219 + $0x3f0] sm:$0xff]
      %v352 = vld [vmem:[%s219 + $0x3f8] sm:$0xff]
      %v353 = vld [vmem:[%s1] sm:$0xff]
      %v354 = vld [vmem:[%s1 + $0x8] sm:$0xff]
      %v355 = vld [vmem:[%s1 + $0x10] sm:$0xff]
      %v356 = vld [vmem:[%s1 + $0x18] sm:$0x7]
      %v357 = vld [vmem:[%s2] sm:$0x1]
      %v359 = vperm.slane %v357, 0
      %vm361 = vcmask 220160
      %v363 = vsel %vm361, %v225, 0
      %v366 = vsel %vm361, %v226, 0
      %v369 = vsel %vm361, %v227, 0
      %v372 = vsel %vm361, %v228, 0
      %v375 = vsel %vm361, %v229, 0
      %v378 = vsel %vm361, %v230, 0
      %v381 = vsel %vm361, %v231, 0
      %v384 = vsel %vm361, %v232, 0
      %v387 = vsel %vm361, %v233, 0
      %v390 = vsel %vm361, %v234, 0
      %v393 = vsel %vm361, %v235, 0
      %v396 = vsel %vm361, %v236, 0
      %v399 = vsel %vm361, %v237, 0
      %v402 = vsel %vm361, %v238, 0
      %v405 = vsel %vm361, %v239, 0
      %v408 = vsel %vm361, %v240, 0
      %v411 = vsel %vm361, %v241, 0
      %v414 = vsel %vm361, %v242, 0
      %v417 = vsel %vm361, %v243, 0
      %v420 = vsel %vm361, %v244, 0
      %v423 = vsel %vm361, %v245, 0
      %v426 = vsel %vm361, %v246, 0
      %v429 = vsel %vm361, %v247, 0
      %v432 = vsel %vm361, %v248, 0
      %v435 = vsel %vm361, %v249, 0
      %v438 = vsel %vm361, %v250, 0
      %v441 = vsel %vm361, %v251, 0
      %v444 = vsel %vm361, %v252, 0
      %v447 = vsel %vm361, %v253, 0
      %v450 = vsel %vm361, %v254, 0
      %v453 = vsel %vm361, %v255, 0
      %v456 = vsel %vm361, %v256, 0
      %v459 = vsel %vm361, %v257, 0
      %v462 = vsel %vm361, %v258, 0
      %v465 = vsel %vm361, %v259, 0
      %v468 = vsel %vm361, %v260, 0
      %v471 = vsel %vm361, %v261, 0
      %v474 = vsel %vm361, %v262, 0
      %v477 = vsel %vm361, %v263, 0
      %v480 = vsel %vm361, %v264, 0
      %v483 = vsel %vm361, %v265, 0
      %v486 = vsel %vm361, %v266, 0
      %v489 = vsel %vm361, %v267, 0
      %v492 = vsel %vm361, %v268, 0
      %v495 = vsel %vm361, %v269, 0
      %v498 = vsel %vm361, %v270, 0
      %v501 = vsel %vm361, %v271, 0
      %v504 = vsel %vm361, %v272, 0
      %v507 = vsel %vm361, %v273, 0
      %v510 = vsel %vm361, %v274, 0
      %v513 = vsel %vm361, %v275, 0
      %v516 = vsel %vm361, %v276, 0
      %v519 = vsel %vm361, %v277, 0
      %v522 = vsel %vm361, %v278, 0
      %v525 = vsel %vm361, %v279, 0
      %v528 = vsel %vm361, %v280, 0
      %v531 = vsel %vm361, %v281, 0
      %v534 = vsel %vm361, %v282, 0
      %v537 = vsel %vm361, %v283, 0
      %v540 = vsel %vm361, %v284, 0
      %v543 = vsel %vm361, %v285, 0
      %v546 = vsel %vm361, %v286, 0
      %v549 = vsel %vm361, %v287, 0
      %v552 = vsel %vm361, %v288, 0
      %v555 = vsel %vm361, %v289, 0
      %v558 = vsel %vm361, %v290, 0
      %v561 = vsel %vm361, %v291, 0
      %v564 = vsel %vm361, %v292, 0
      %v567 = vsel %vm361, %v293, 0
      %v570 = vsel %vm361, %v294, 0
      %v573 = vsel %vm361, %v295, 0
      %v576 = vsel %vm361, %v296, 0
      %v579 = vsel %vm361, %v297, 0
      %v582 = vsel %vm361, %v298, 0
      %v585 = vsel %vm361, %v299, 0
      %v588 = vsel %vm361, %v300, 0
      %v591 = vsel %vm361, %v301, 0
      %v594 = vsel %vm361, %v302, 0
      %v597 = vsel %vm361, %v303, 0
      %v600 = vsel %vm361, %v304, 0
      %v603 = vsel %vm361, %v305, 0
      %v606 = vsel %vm361, %v306, 0
      %v609 = vsel %vm361, %v307, 0
      %v612 = vsel %vm361, %v308, 0
      %v615 = vsel %vm361, %v309, 0
      %v618 = vsel %vm361, %v310, 0
      %v621 = vsel %vm361, %v311, 0
      %v624 = vsel %vm361, %v312, 0
      %v627 = vsel %vm361, %v313, 0
      %v630 = vsel %vm361, %v314, 0
      %v633 = vsel %vm361, %v315, 0
      %v636 = vsel %vm361, %v316, 0
      %v639 = vsel %vm361, %v317, 0
      %v642 = vsel %vm361, %v318, 0
      %v645 = vsel %vm361, %v319, 0
      %v648 = vsel %vm361, %v320, 0
      %v651 = vsel %vm361, %v321, 0
      %v654 = vsel %vm361, %v322, 0
      %v657 = vsel %vm361, %v323, 0
      %v660 = vsel %vm361, %v324, 0
      %v663 = vsel %vm361, %v325, 0
      %v666 = vsel %vm361, %v326, 0
      %v669 = vsel %vm361, %v327, 0
      %v672 = vsel %vm361, %v328, 0
      %v675 = vsel %vm361, %v329, 0
      %v678 = vsel %vm361, %v330, 0
      %v681 = vsel %vm361, %v331, 0
      %v684 = vsel %vm361, %v332, 0
      %v687 = vsel %vm361, %v333, 0
      %v690 = vsel %vm361, %v334, 0
      %v693 = vsel %vm361, %v335, 0
      %v696 = vsel %vm361, %v336, 0
      %v699 = vsel %vm361, %v337, 0
      %v702 = vsel %vm361, %v338, 0
      %v705 = vsel %vm361, %v339, 0
      %v708 = vsel %vm361, %v340, 0
      %v711 = vsel %vm361, %v341, 0
      %v714 = vsel %vm361, %v342, 0
      %v717 = vsel %vm361, %v343, 0
      %v720 = vsel %vm361, %v344, 0
      %v723 = vsel %vm361, %v345, 0
      %v726 = vsel %vm361, %v346, 0
      %v729 = vsel %vm361, %v347, 0
      %v732 = vsel %vm361, %v348, 0
      %v735 = vsel %vm361, %v349, 0
      %v738 = vsel %vm361, %v350, 0
      %v741 = vsel %vm361, %v351, 0
      %v744 = vsel %vm361, %v352, 0
      %vm746 = vcmask 1042432
      %v748 = vsel %vm746, %v356, 0
      %750 = vmatpush.msra.mxu0 0.0
      %751 = vmatpush.msra.mxu0 0.0
      %752 = vmatpush.msra.mxu0 0.0
      %753 = vmatpush.msra.mxu0 0.0
      %754 = vmatpush.msra.mxu0 0.0
      %755 = vmatpush.msra.mxu0 0.0
      %756 = vmatpush.msra.mxu0 0.0
      %757 = vmatpush.msra.mxu0 0.0
      %758 = vmatpush.msra.mxu0 0.0
      %759 = vmatpush.msra.mxu0 0.0
      %760 = vmatpush.msra.mxu0 0.0
      %761 = vmatpush.msra.mxu0 0.0
      %762 = vmatpush.msra.mxu0 %v748
      %763 = vmatpush.msra.mxu0 %v355
      %764 = vmatpush.msra.mxu0 %v354
      %765 = vmatpush.msra.mxu0 %v353
      %766 = vmatmul.f32.gmra.mxu0 %v363
      %v767 = vpop.f32.mrf.mxu0
      %v768 = vadd.f32 %v359, %v767
      %769 = vmatmul.f32.gmra.mxu0 %v366
      %v770 = vpop.f32.mrf.mxu0
      %v771 = vadd.f32 %v359, %v770
      %772 = vmatmul.f32.gmra.mxu0 %v369
      %v773 = vpop.f32.mrf.mxu0
      %v774 = vadd.f32 %v359, %v773
      %775 = vmatmul.f32.gmra.mxu0 %v372
      %v776 = vpop.f32.mrf.mxu0
      %v777 = vadd.f32 %v359, %v776
      %778 = vmatmul.f32.gmra.mxu0 %v375
      %v779 = vpop.f32.mrf.mxu0
      %v780 = vadd.f32 %v359, %v779
      %781 = vmatmul.f32.gmra.mxu0 %v378
      %v782 = vpop.f32.mrf.mxu0
      %v783 = vadd.f32 %v359, %v782
      %784 = vmatmul.f32.gmra.mxu0 %v381
      %v785 = vpop.f32.mrf.mxu0
      %v786 = vadd.f32 %v359, %v785
      %787 = vmatmul.f32.gmra.mxu0 %v384
      %v788 = vpop.f32.mrf.mxu0
      %v789 = vadd.f32 %v359, %v788
      %790 = vmatmul.f32.gmra.mxu0 %v387
      %v791 = vpop.f32.mrf.mxu0
      %v792 = vadd.f32 %v359, %v791
      %793 = vmatmul.f32.gmra.mxu0 %v390
      %v794 = vpop.f32.mrf.mxu0
      %v795 = vadd.f32 %v359, %v794
      %796 = vmatmul.f32.gmra.mxu0 %v393
      %v797 = vpop.f32.mrf.mxu0
      %v798 = vadd.f32 %v359, %v797
      %799 = vmatmul.f32.gmra.mxu0 %v396
      %v800 = vpop.f32.mrf.mxu0
      %v801 = vadd.f32 %v359, %v800
      %802 = vmatmul.f32.gmra.mxu0 %v399
      %v803 = vpop.f32.mrf.mxu0
      %v804 = vadd.f32 %v359, %v803
      %805 = vmatmul.f32.gmra.mxu0 %v402
      %v806 = vpop.f32.mrf.mxu0
      %v807 = vadd.f32 %v359, %v806
      %808 = vmatmul.f32.gmra.mxu0 %v405
      %v809 = vpop.f32.mrf.mxu0
      %v810 = vadd.f32 %v359, %v809
      %811 = vmatmul.f32.gmra.mxu0 %v408
      %v812 = vpop.f32.mrf.mxu0
      %v813 = vadd.f32 %v359, %v812
      %814 = vmatmul.f32.gmra.mxu0 %v411
      %v815 = vpop.f32.mrf.mxu0
      %v816 = vadd.f32 %v359, %v815
      %817 = vmatmul.f32.gmra.mxu0 %v414
      %v818 = vpop.f32.mrf.mxu0
      %v819 = vadd.f32 %v359, %v818
      %820 = vmatmul.f32.gmra.mxu0 %v417
      %v821 = vpop.f32.mrf.mxu0
      %v822 = vadd.f32 %v359, %v821
      %823 = vmatmul.f32.gmra.mxu0 %v420
      %v824 = vpop.f32.mrf.mxu0
      %v825 = vadd.f32 %v359, %v824
      %826 = vmatmul.f32.gmra.mxu0 %v423
      %v827 = vpop.f32.mrf.mxu0
      %v828 = vadd.f32 %v359, %v827
      %829 = vmatmul.f32.gmra.mxu0 %v426
      %v830 = vpop.f32.mrf.mxu0
      %v831 = vadd.f32 %v359, %v830
      %832 = vmatmul.f32.gmra.mxu0 %v429
      %v833 = vpop.f32.mrf.mxu0
      %v834 = vadd.f32 %v359, %v833
      %835 = vmatmul.f32.gmra.mxu0 %v432
      %v836 = vpop.f32.mrf.mxu0
      %v837 = vadd.f32 %v359, %v836
      %838 = vmatmul.f32.gmra.mxu0 %v435
      %v839 = vpop.f32.mrf.mxu0
      %v840 = vadd.f32 %v359, %v839
      %841 = vmatmul.f32.gmra.mxu0 %v438
      %v842 = vpop.f32.mrf.mxu0
      %v843 = vadd.f32 %v359, %v842
      %844 = vmatmul.f32.gmra.mxu0 %v441
      %v845 = vpop.f32.mrf.mxu0
      %v846 = vadd.f32 %v359, %v845
      %847 = vmatmul.f32.gmra.mxu0 %v444
      %v848 = vpop.f32.mrf.mxu0
      %v849 = vadd.f32 %v359, %v848
      %850 = vmatmul.f32.gmra.mxu0 %v447
      %v851 = vpop.f32.mrf.mxu0
      %v852 = vadd.f32 %v359, %v851
      %853 = vmatmul.f32.gmra.mxu0 %v450
      %v854 = vpop.f32.mrf.mxu0
      %v855 = vadd.f32 %v359, %v854
      %856 = vmatmul.f32.gmra.mxu0 %v453
      %v857 = vpop.f32.mrf.mxu0
      %v858 = vadd.f32 %v359, %v857
      %859 = vmatmul.f32.gmra.mxu0 %v456
      %v860 = vpop.f32.mrf.mxu0
      %v861 = vadd.f32 %v359, %v860
      %862 = vmatmul.f32.gmra.mxu0 %v459
      %v863 = vpop.f32.mrf.mxu0
      %v864 = vadd.f32 %v359, %v863
      %865 = vmatmul.f32.gmra.mxu0 %v462
      %v866 = vpop.f32.mrf.mxu0
      %v867 = vadd.f32 %v359, %v866
      %868 = vmatmul.f32.gmra.mxu0 %v465
      %v869 = vpop.f32.mrf.mxu0
      %v870 = vadd.f32 %v359, %v869
      %871 = vmatmul.f32.gmra.mxu0 %v468
      %v872 = vpop.f32.mrf.mxu0
      %v873 = vadd.f32 %v359, %v872
      %874 = vmatmul.f32.gmra.mxu0 %v471
      %v875 = vpop.f32.mrf.mxu0
      %v876 = vadd.f32 %v359, %v875
      %877 = vmatmul.f32.gmra.mxu0 %v474
      %v878 = vpop.f32.mrf.mxu0
      %v879 = vadd.f32 %v359, %v878
      %880 = vmatmul.f32.gmra.mxu0 %v477
      %v881 = vpop.f32.mrf.mxu0
      %v882 = vadd.f32 %v359, %v881
      %883 = vmatmul.f32.gmra.mxu0 %v480
      %v884 = vpop.f32.mrf.mxu0
      %v885 = vadd.f32 %v359, %v884
      %886 = vmatmul.f32.gmra.mxu0 %v483
      %v887 = vpop.f32.mrf.mxu0
      %v888 = vadd.f32 %v359, %v887
      %889 = vmatmul.f32.gmra.mxu0 %v486
      %v890 = vpop.f32.mrf.mxu0
      %v891 = vadd.f32 %v359, %v890
      %892 = vmatmul.f32.gmra.mxu0 %v489
      %v893 = vpop.f32.mrf.mxu0
      %v894 = vadd.f32 %v359, %v893
      %895 = vmatmul.f32.gmra.mxu0 %v492
      %v896 = vpop.f32.mrf.mxu0
      %v897 = vadd.f32 %v359, %v896
      %898 = vmatmul.f32.gmra.mxu0 %v495
      %v899 = vpop.f32.mrf.mxu0
      %v900 = vadd.f32 %v359, %v899
      %901 = vmatmul.f32.gmra.mxu0 %v498
      %v902 = vpop.f32.mrf.mxu0
      %v903 = vadd.f32 %v359, %v902
      %904 = vmatmul.f32.gmra.mxu0 %v501
      %v905 = vpop.f32.mrf.mxu0
      %v906 = vadd.f32 %v359, %v905
      %907 = vmatmul.f32.gmra.mxu0 %v504
      %v908 = vpop.f32.mrf.mxu0
      %v909 = vadd.f32 %v359, %v908
      %910 = vmatmul.f32.gmra.mxu0 %v507
      %v911 = vpop.f32.mrf.mxu0
      %v912 = vadd.f32 %v359, %v911
      %913 = vmatmul.f32.gmra.mxu0 %v510
      %v914 = vpop.f32.mrf.mxu0
      %v915 = vadd.f32 %v359, %v914
      %916 = vmatmul.f32.gmra.mxu0 %v513
      %v917 = vpop.f32.mrf.mxu0
      %v918 = vadd.f32 %v359, %v917
      %919 = vmatmul.f32.gmra.mxu0 %v516
      %v920 = vpop.f32.mrf.mxu0
      %v921 = vadd.f32 %v359, %v920
      %922 = vmatmul.f32.gmra.mxu0 %v519
      %v923 = vpop.f32.mrf.mxu0
      %v924 = vadd.f32 %v359, %v923
      %925 = vmatmul.f32.gmra.mxu0 %v522
      %v926 = vpop.f32.mrf.mxu0
      %v927 = vadd.f32 %v359, %v926
      %928 = vmatmul.f32.gmra.mxu0 %v525
      %v929 = vpop.f32.mrf.mxu0
      %v930 = vadd.f32 %v359, %v929
      %931 = vmatmul.f32.gmra.mxu0 %v528
      %v932 = vpop.f32.mrf.mxu0
      %v933 = vadd.f32 %v359, %v932
      %934 = vmatmul.f32.gmra.mxu0 %v531
      %v935 = vpop.f32.mrf.mxu0
      %v936 = vadd.f32 %v359, %v935
      %937 = vmatmul.f32.gmra.mxu0 %v534
      %v938 = vpop.f32.mrf.mxu0
      %v939 = vadd.f32 %v359, %v938
      %940 = vmatmul.f32.gmra.mxu0 %v537
      %v941 = vpop.f32.mrf.mxu0
      %v942 = vadd.f32 %v359, %v941
      %943 = vmatmul.f32.gmra.mxu0 %v540
      %v944 = vpop.f32.mrf.mxu0
      %v945 = vadd.f32 %v359, %v944
      %946 = vmatmul.f32.gmra.mxu0 %v543
      %v947 = vpop.f32.mrf.mxu0
      %v948 = vadd.f32 %v359, %v947
      %949 = vmatmul.f32.gmra.mxu0 %v546
      %v950 = vpop.f32.mrf.mxu0
      %v951 = vadd.f32 %v359, %v950
      %952 = vmatmul.f32.gmra.mxu0 %v549
      %v953 = vpop.f32.mrf.mxu0
      %v954 = vadd.f32 %v359, %v953
      %955 = vmatmul.f32.gmra.mxu0 %v552
      %v956 = vpop.f32.mrf.mxu0
      %v957 = vadd.f32 %v359, %v956
      %958 = vmatmul.f32.gmra.mxu0 %v555
      %v959 = vpop.f32.mrf.mxu0
      %v960 = vadd.f32 %v359, %v959
      %961 = vmatmul.f32.gmra.mxu0 %v558
      %v962 = vpop.f32.mrf.mxu0
      %v963 = vadd.f32 %v359, %v962
      %964 = vmatmul.f32.gmra.mxu0 %v561
      %v965 = vpop.f32.mrf.mxu0
      %v966 = vadd.f32 %v359, %v965
      %967 = vmatmul.f32.gmra.mxu0 %v564
      %v968 = vpop.f32.mrf.mxu0
      %v969 = vadd.f32 %v359, %v968
      %970 = vmatmul.f32.gmra.mxu0 %v567
      %v971 = vpop.f32.mrf.mxu0
      %v972 = vadd.f32 %v359, %v971
      %973 = vmatmul.f32.gmra.mxu0 %v570
      %v974 = vpop.f32.mrf.mxu0
      %v975 = vadd.f32 %v359, %v974
      %976 = vmatmul.f32.gmra.mxu0 %v573
      %v977 = vpop.f32.mrf.mxu0
      %v978 = vadd.f32 %v359, %v977
      %979 = vmatmul.f32.gmra.mxu0 %v576
      %v980 = vpop.f32.mrf.mxu0
      %v981 = vadd.f32 %v359, %v980
      %982 = vmatmul.f32.gmra.mxu0 %v579
      %v983 = vpop.f32.mrf.mxu0
      %v984 = vadd.f32 %v359, %v983
      %985 = vmatmul.f32.gmra.mxu0 %v582
      %v986 = vpop.f32.mrf.mxu0
      %v987 = vadd.f32 %v359, %v986
      %988 = vmatmul.f32.gmra.mxu0 %v585
      %v989 = vpop.f32.mrf.mxu0
      %v990 = vadd.f32 %v359, %v989
      %991 = vmatmul.f32.gmra.mxu0 %v588
      %v992 = vpop.f32.mrf.mxu0
      %v993 = vadd.f32 %v359, %v992
      %994 = vmatmul.f32.gmra.mxu0 %v591
      %v995 = vpop.f32.mrf.mxu0
      %v996 = vadd.f32 %v359, %v995
      %997 = vmatmul.f32.gmra.mxu0 %v594
      %v998 = vpop.f32.mrf.mxu0
      %v999 = vadd.f32 %v359, %v998
      %1000 = vmatmul.f32.gmra.mxu0 %v597
      %v1001 = vpop.f32.mrf.mxu0
      %v1002 = vadd.f32 %v359, %v1001
      %1003 = vmatmul.f32.gmra.mxu0 %v600
      %v1004 = vpop.f32.mrf.mxu0
      %v1005 = vadd.f32 %v359, %v1004
      %1006 = vmatmul.f32.gmra.mxu0 %v603
      %v1007 = vpop.f32.mrf.mxu0
      %v1008 = vadd.f32 %v359, %v1007
      %1009 = vmatmul.f32.gmra.mxu0 %v606
      %v1010 = vpop.f32.mrf.mxu0
      %v1011 = vadd.f32 %v359, %v1010
      %1012 = vmatmul.f32.gmra.mxu0 %v609
      %v1013 = vpop.f32.mrf.mxu0
      %v1014 = vadd.f32 %v359, %v1013
      %1015 = vmatmul.f32.gmra.mxu0 %v612
      %v1016 = vpop.f32.mrf.mxu0
      %v1017 = vadd.f32 %v359, %v1016
      %1018 = vmatmul.f32.gmra.mxu0 %v615
      %v1019 = vpop.f32.mrf.mxu0
      %v1020 = vadd.f32 %v359, %v1019
      %1021 = vmatmul.f32.gmra.mxu0 %v618
      %v1022 = vpop.f32.mrf.mxu0
      %v1023 = vadd.f32 %v359, %v1022
      %1024 = vmatmul.f32.gmra.mxu0 %v621
      %v1025 = vpop.f32.mrf.mxu0
      %v1026 = vadd.f32 %v359, %v1025
      %1027 = vmatmul.f32.gmra.mxu0 %v624
      %v1028 = vpop.f32.mrf.mxu0
      %v1029 = vadd.f32 %v359, %v1028
      %1030 = vmatmul.f32.gmra.mxu0 %v627
      %v1031 = vpop.f32.mrf.mxu0
      %v1032 = vadd.f32 %v359, %v1031
      %1033 = vmatmul.f32.gmra.mxu0 %v630
      %v1034 = vpop.f32.mrf.mxu0
      %v1035 = vadd.f32 %v359, %v1034
      %1036 = vmatmul.f32.gmra.mxu0 %v633
      %v1037 = vpop.f32.mrf.mxu0
      %v1038 = vadd.f32 %v359, %v1037
      %1039 = vmatmul.f32.gmra.mxu0 %v636
      %v1040 = vpop.f32.mrf.mxu0
      %v1041 = vadd.f32 %v359, %v1040
      %1042 = vmatmul.f32.gmra.mxu0 %v639
      %v1043 = vpop.f32.mrf.mxu0
      %v1044 = vadd.f32 %v359, %v1043
      %1045 = vmatmul.f32.gmra.mxu0 %v642
      %v1046 = vpop.f32.mrf.mxu0
      %v1047 = vadd.f32 %v359, %v1046
      %1048 = vmatmul.f32.gmra.mxu0 %v645
      %v1049 = vpop.f32.mrf.mxu0
      %v1050 = vadd.f32 %v359, %v1049
      %1051 = vmatmul.f32.gmra.mxu0 %v648
      %v1052 = vpop.f32.mrf.mxu0
      %v1053 = vadd.f32 %v359, %v1052
      %1054 = vmatmul.f32.gmra.mxu0 %v651
      %v1055 = vpop.f32.mrf.mxu0
      %v1056 = vadd.f32 %v359, %v1055
      %1057 = vmatmul.f32.gmra.mxu0 %v654
      %v1058 = vpop.f32.mrf.mxu0
      %v1059 = vadd.f32 %v359, %v1058
      %1060 = vmatmul.f32.gmra.mxu0 %v657
      %v1061 = vpop.f32.mrf.mxu0
      %v1062 = vadd.f32 %v359, %v1061
      %1063 = vmatmul.f32.gmra.mxu0 %v660
      %v1064 = vpop.f32.mrf.mxu0
      %v1065 = vadd.f32 %v359, %v1064
      %1066 = vmatmul.f32.gmra.mxu0 %v663
      %v1067 = vpop.f32.mrf.mxu0
      %v1068 = vadd.f32 %v359, %v1067
      %1069 = vmatmul.f32.gmra.mxu0 %v666
      %v1070 = vpop.f32.mrf.mxu0
      %v1071 = vadd.f32 %v359, %v1070
      %1072 = vmatmul.f32.gmra.mxu0 %v669
      %v1073 = vpop.f32.mrf.mxu0
      %v1074 = vadd.f32 %v359, %v1073
      %1075 = vmatmul.f32.gmra.mxu0 %v672
      %v1076 = vpop.f32.mrf.mxu0
      %v1077 = vadd.f32 %v359, %v1076
      %1078 = vmatmul.f32.gmra.mxu0 %v675
      %v1079 = vpop.f32.mrf.mxu0
      %v1080 = vadd.f32 %v359, %v1079
      %1081 = vmatmul.f32.gmra.mxu0 %v678
      %v1082 = vpop.f32.mrf.mxu0
      %v1083 = vadd.f32 %v359, %v1082
      %1084 = vmatmul.f32.gmra.mxu0 %v681
      %v1085 = vpop.f32.mrf.mxu0
      %v1086 = vadd.f32 %v359, %v1085
      %1087 = vmatmul.f32.gmra.mxu0 %v684
      %v1088 = vpop.f32.mrf.mxu0
      %v1089 = vadd.f32 %v359, %v1088
      %1090 = vmatmul.f32.gmra.mxu0 %v687
      %v1091 = vpop.f32.mrf.mxu0
      %v1092 = vadd.f32 %v359, %v1091
      %1093 = vmatmul.f32.gmra.mxu0 %v690
      %v1094 = vpop.f32.mrf.mxu0
      %v1095 = vadd.f32 %v359, %v1094
      %1096 = vmatmul.f32.gmra.mxu0 %v693
      %v1097 = vpop.f32.mrf.mxu0
      %v1098 = vadd.f32 %v359, %v1097
      %1099 = vmatmul.f32.gmra.mxu0 %v696
      %v1100 = vpop.f32.mrf.mxu0
      %v1101 = vadd.f32 %v359, %v1100
      %1102 = vmatmul.f32.gmra.mxu0 %v699
      %v1103 = vpop.f32.mrf.mxu0
      %v1104 = vadd.f32 %v359, %v1103
      %1105 = vmatmul.f32.gmra.mxu0 %v702
      %v1106 = vpop.f32.mrf.mxu0
      %v1107 = vadd.f32 %v359, %v1106
      %1108 = vmatmul.f32.gmra.mxu0 %v705
      %v1109 = vpop.f32.mrf.mxu0
      %v1110 = vadd.f32 %v359, %v1109
      %1111 = vmatmul.f32.gmra.mxu0 %v708
      %v1112 = vpop.f32.mrf.mxu0
      %v1113 = vadd.f32 %v359, %v1112
      %1114 = vmatmul.f32.gmra.mxu0 %v711
      %v1115 = vpop.f32.mrf.mxu0
      %v1116 = vadd.f32 %v359, %v1115
      %1117 = vmatmul.f32.gmra.mxu0 %v714
      %v1118 = vpop.f32.mrf.mxu0
      %v1119 = vadd.f32 %v359, %v1118
      %1120 = vmatmul.f32.gmra.mxu0 %v717
      %v1121 = vpop.f32.mrf.mxu0
      %v1122 = vadd.f32 %v359, %v1121
      %1123 = vmatmul.f32.gmra.mxu0 %v720
      %v1124 = vpop.f32.mrf.mxu0
      %v1125 = vadd.f32 %v359, %v1124
      %1126 = vmatmul.f32.gmra.mxu0 %v723
      %v1127 = vpop.f32.mrf.mxu0
      %v1128 = vadd.f32 %v359, %v1127
      %1129 = vmatmul.f32.gmra.mxu0 %v726
      %v1130 = vpop.f32.mrf.mxu0
      %v1131 = vadd.f32 %v359, %v1130
      %1132 = vmatmul.f32.gmra.mxu0 %v729
      %v1133 = vpop.f32.mrf.mxu0
      %v1134 = vadd.f32 %v359, %v1133
      %1135 = vmatmul.f32.gmra.mxu0 %v732
      %v1136 = vpop.f32.mrf.mxu0
      %v1137 = vadd.f32 %v359, %v1136
      %1138 = vmatmul.f32.gmra.mxu0 %v735
      %v1139 = vpop.f32.mrf.mxu0
      %v1140 = vadd.f32 %v359, %v1139
      %1141 = vmatmul.f32.gmra.mxu0 %v738
      %v1142 = vpop.f32.mrf.mxu0
      %v1143 = vadd.f32 %v359, %v1142
      %1144 = vmatmul.f32.gmra.mxu0 %v741
      %v1145 = vpop.f32.mrf.mxu0
      %v1146 = vadd.f32 %v359, %v1145
      %1147 = vmatmul.f32.gmra.mxu0 %v744
      %v1148 = vpop.f32.mrf.mxu0
      %v1149 = vadd.f32 %v359, %v1148
      %1150 = vdwg.mxu0
      %v1151 = vmax.f32 %v768, 0.0
      %v1152 = vmax.f32 %v771, 0.0
      %v1153 = vmax.f32 %v774, 0.0
      %v1154 = vmax.f32 %v777, 0.0
      %v1155 = vmax.f32 %v780, 0.0
      %v1156 = vmax.f32 %v783, 0.0
      %v1157 = vmax.f32 %v786, 0.0
      %v1158 = vmax.f32 %v789, 0.0
      %v1159 = vmax.f32 %v792, 0.0
      %v1160 = vmax.f32 %v795, 0.0
      %v1161 = vmax.f32 %v798, 0.0
      %v1162 = vmax.f32 %v801, 0.0
      %v1163 = vmax.f32 %v804, 0.0
      %v1164 = vmax.f32 %v807, 0.0
      %v1165 = vmax.f32 %v810, 0.0
      %v1166 = vmax.f32 %v813, 0.0
      %v1167 = vmax.f32 %v816, 0.0
      %v1168 = vmax.f32 %v819, 0.0
      %v1169 = vmax.f32 %v822, 0.0
      %v1170 = vmax.f32 %v825, 0.0
      %v1171 = vmax.f32 %v828, 0.0
      %v1172 = vmax.f32 %v831, 0.0
      %v1173 = vmax.f32 %v834, 0.0
      %v1174 = vmax.f32 %v837, 0.0
      %v1175 = vmax.f32 %v840, 0.0
      %v1176 = vmax.f32 %v843, 0.0
      %v1177 = vmax.f32 %v846, 0.0
      %v1178 = vmax.f32 %v849, 0.0
      %v1179 = vmax.f32 %v852, 0.0
      %v1180 = vmax.f32 %v855, 0.0
      %v1181 = vmax.f32 %v858, 0.0
      %v1182 = vmax.f32 %v861, 0.0
      %v1183 = vmax.f32 %v864, 0.0
      %v1184 = vmax.f32 %v867, 0.0
      %v1185 = vmax.f32 %v870, 0.0
      %v1186 = vmax.f32 %v873, 0.0
      %v1187 = vmax.f32 %v876, 0.0
      %v1188 = vmax.f32 %v879, 0.0
      %v1189 = vmax.f32 %v882, 0.0
      %v1190 = vmax.f32 %v885, 0.0
      %v1191 = vmax.f32 %v888, 0.0
      %v1192 = vmax.f32 %v891, 0.0
      %v1193 = vmax.f32 %v894, 0.0
      %v1194 = vmax.f32 %v897, 0.0
      %v1195 = vmax.f32 %v900, 0.0
      %v1196 = vmax.f32 %v903, 0.0
      %v1197 = vmax.f32 %v906, 0.0
      %v1198 = vmax.f32 %v909, 0.0
      %v1199 = vmax.f32 %v912, 0.0
      %v1200 = vmax.f32 %v915, 0.0
      %v1201 = vmax.f32 %v918, 0.0
      %v1202 = vmax.f32 %v921, 0.0
      %v1203 = vmax.f32 %v924, 0.0
      %v1204 = vmax.f32 %v927, 0.0
      %v1205 = vmax.f32 %v930, 0.0
      %v1206 = vmax.f32 %v933, 0.0
      %v1207 = vmax.f32 %v936, 0.0
      %v1208 = vmax.f32 %v939, 0.0
      %v1209 = vmax.f32 %v942, 0.0
      %v1210 = vmax.f32 %v945, 0.0
      %v1211 = vmax.f32 %v948, 0.0
      %v1212 = vmax.f32 %v951, 0.0
      %v1213 = vmax.f32 %v954, 0.0
      %v1214 = vmax.f32 %v957, 0.0
      %v1215 = vmax.f32 %v960, 0.0
      %v1216 = vmax.f32 %v963, 0.0
      %v1217 = vmax.f32 %v966, 0.0
      %v1218 = vmax.f32 %v969, 0.0
      %v1219 = vmax.f32 %v972, 0.0
      %v1220 = vmax.f32 %v975, 0.0
      %v1221 = vmax.f32 %v978, 0.0
      %v1222 = vmax.f32 %v981, 0.0
      %v1223 = vmax.f32 %v984, 0.0
      %v1224 = vmax.f32 %v987, 0.0
      %v1225 = vmax.f32 %v990, 0.0
      %v1226 = vmax.f32 %v993, 0.0
      %v1227 = vmax.f32 %v996, 0.0
      %v1228 = vmax.f32 %v999, 0.0
      %v1229 = vmax.f32 %v1002, 0.0
      %v1230 = vmax.f32 %v1005, 0.0
      %v1231 = vmax.f32 %v1008, 0.0
      %v1232 = vmax.f32 %v1011, 0.0
      %v1233 = vmax.f32 %v1014, 0.0
      %v1234 = vmax.f32 %v1017, 0.0
      %v1235 = vmax.f32 %v1020, 0.0
      %v1236 = vmax.f32 %v1023, 0.0
      %v1237 = vmax.f32 %v1026, 0.0
      %v1238 = vmax.f32 %v1029, 0.0
      %v1239 = vmax.f32 %v1032, 0.0
      %v1240 = vmax.f32 %v1035, 0.0
      %v1241 = vmax.f32 %v1038, 0.0
      %v1242 = vmax.f32 %v1041, 0.0
      %v1243 = vmax.f32 %v1044, 0.0
      %v1244 = vmax.f32 %v1047, 0.0
      %v1245 = vmax.f32 %v1050, 0.0
      %v1246 = vmax.f32 %v1053, 0.0
      %v1247 = vmax.f32 %v1056, 0.0
      %v1248 = vmax.f32 %v1059, 0.0
      %v1249 = vmax.f32 %v1062, 0.0
      %v1250 = vmax.f32 %v1065, 0.0
      %v1251 = vmax.f32 %v1068, 0.0
      %v1252 = vmax.f32 %v1071, 0.0
      %v1253 = vmax.f32 %v1074, 0.0
      %v1254 = vmax.f32 %v1077, 0.0
      %v1255 = vmax.f32 %v1080, 0.0
      %v1256 = vmax.f32 %v1083, 0.0
      %v1257 = vmax.f32 %v1086, 0.0
      %v1258 = vmax.f32 %v1089, 0.0
      %v1259 = vmax.f32 %v1092, 0.0
      %v1260 = vmax.f32 %v1095, 0.0
      %v1261 = vmax.f32 %v1098, 0.0
      %v1262 = vmax.f32 %v1101, 0.0
      %v1263 = vmax.f32 %v1104, 0.0
      %v1264 = vmax.f32 %v1107, 0.0
      %v1265 = vmax.f32 %v1110, 0.0
      %v1266 = vmax.f32 %v1113, 0.0
      %v1267 = vmax.f32 %v1116, 0.0
      %v1268 = vmax.f32 %v1119, 0.0
      %v1269 = vmax.f32 %v1122, 0.0
      %v1270 = vmax.f32 %v1125, 0.0
      %v1271 = vmax.f32 %v1128, 0.0
      %v1272 = vmax.f32 %v1131, 0.0
      %v1273 = vmax.f32 %v1134, 0.0
      %v1274 = vmax.f32 %v1137, 0.0
      %v1275 = vmax.f32 %v1140, 0.0
      %v1276 = vmax.f32 %v1143, 0.0
      %v1277 = vmax.f32 %v1146, 0.0
      %v1278 = vmax.f32 %v1149, 0.0
      %v1279 = vld [vmem:[%s3] sm:$0x1]
      %v1281 = vperm.slane %v1279, 0
      %v1283 = vmul.f32 %v1151, %v1281
      %v1284 = vmul.f32 %v1152, %v1281
      %v1285 = vmul.f32 %v1153, %v1281
      %v1286 = vmul.f32 %v1154, %v1281
      %v1287 = vmul.f32 %v1155, %v1281
      %v1288 = vmul.f32 %v1156, %v1281
      %v1289 = vmul.f32 %v1157, %v1281
      %v1290 = vmul.f32 %v1158, %v1281
      %v1291 = vmul.f32 %v1159, %v1281
      %v1292 = vmul.f32 %v1160, %v1281
      %v1293 = vmul.f32 %v1161, %v1281
      %v1294 = vmul.f32 %v1162, %v1281
      %v1295 = vmul.f32 %v1163, %v1281
      %v1296 = vmul.f32 %v1164, %v1281
      %v1297 = vmul.f32 %v1165, %v1281
      %v1298 = vmul.f32 %v1166, %v1281
      %v1299 = vmul.f32 %v1167, %v1281
      %v1300 = vmul.f32 %v1168, %v1281
      %v1301 = vmul.f32 %v1169, %v1281
      %v1302 = vmul.f32 %v1170, %v1281
      %v1303 = vmul.f32 %v1171, %v1281
      %v1304 = vmul.f32 %v1172, %v1281
      %v1305 = vmul.f32 %v1173, %v1281
      %v1306 = vmul.f32 %v1174, %v1281
      %v1307 = vmul.f32 %v1175, %v1281
      %v1308 = vmul.f32 %v1176, %v1281
      %v1309 = vmul.f32 %v1177, %v1281
      %v1310 = vmul.f32 %v1178, %v1281
      %v1311 = vmul.f32 %v1179, %v1281
      %v1312 = vmul.f32 %v1180, %v1281
      %v1313 = vmul.f32 %v1181, %v1281
      %v1314 = vmul.f32 %v1182, %v1281
      %v1315 = vmul.f32 %v1183, %v1281
      %v1316 = vmul.f32 %v1184, %v1281
      %v1317 = vmul.f32 %v1185, %v1281
      %v1318 = vmul.f32 %v1186, %v1281
      %v1319 = vmul.f32 %v1187, %v1281
      %v1320 = vmul.f32 %v1188, %v1281
      %v1321 = vmul.f32 %v1189, %v1281
      %v1322 = vmul.f32 %v1190, %v1281
      %v1323 = vmul.f32 %v1191, %v1281
      %v1324 = vmul.f32 %v1192, %v1281
      %v1325 = vmul.f32 %v1193, %v1281
      %v1326 = vmul.f32 %v1194, %v1281
      %v1327 = vmul.f32 %v1195, %v1281
      %v1328 = vmul.f32 %v1196, %v1281
      %v1329 = vmul.f32 %v1197, %v1281
      %v1330 = vmul.f32 %v1198, %v1281
      %v1331 = vmul.f32 %v1199, %v1281
      %v1332 = vmul.f32 %v1200, %v1281
      %v1333 = vmul.f32 %v1201, %v1281
      %v1334 = vmul.f32 %v1202, %v1281
      %v1335 = vmul.f32 %v1203, %v1281
      %v1336 = vmul.f32 %v1204, %v1281
      %v1337 = vmul.f32 %v1205, %v1281
      %v1338 = vmul.f32 %v1206, %v1281
      %v1339 = vmul.f32 %v1207, %v1281
      %v1340 = vmul.f32 %v1208, %v1281
      %v1341 = vmul.f32 %v1209, %v1281
      %v1342 = vmul.f32 %v1210, %v1281
      %v1343 = vmul.f32 %v1211, %v1281
      %v1344 = vmul.f32 %v1212, %v1281
      %v1345 = vmul.f32 %v1213, %v1281
      %v1346 = vmul.f32 %v1214, %v1281
      %v1347 = vmul.f32 %v1215, %v1281
      %v1348 = vmul.f32 %v1216, %v1281
      %v1349 = vmul.f32 %v1217, %v1281
      %v1350 = vmul.f32 %v1218, %v1281
      %v1351 = vmul.f32 %v1219, %v1281
      %v1352 = vmul.f32 %v1220, %v1281
      %v1353 = vmul.f32 %v1221, %v1281
      %v1354 = vmul.f32 %v1222, %v1281
      %v1355 = vmul.f32 %v1223, %v1281
      %v1356 = vmul.f32 %v1224, %v1281
      %v1357 = vmul.f32 %v1225, %v1281
      %v1358 = vmul.f32 %v1226, %v1281
      %v1359 = vmul.f32 %v1227, %v1281
      %v1360 = vmul.f32 %v1228, %v1281
      %v1361 = vmul.f32 %v1229, %v1281
      %v1362 = vmul.f32 %v1230, %v1281
      %v1363 = vmul.f32 %v1231, %v1281
      %v1364 = vmul.f32 %v1232, %v1281
      %v1365 = vmul.f32 %v1233, %v1281
      %v1366 = vmul.f32 %v1234, %v1281
      %v1367 = vmul.f32 %v1235, %v1281
      %v1368 = vmul.f32 %v1236, %v1281
      %v1369 = vmul.f32 %v1237, %v1281
      %v1370 = vmul.f32 %v1238, %v1281
      %v1371 = vmul.f32 %v1239, %v1281
      %v1372 = vmul.f32 %v1240, %v1281
      %v1373 = vmul.f32 %v1241, %v1281
      %v1374 = vmul.f32 %v1242, %v1281
      %v1375 = vmul.f32 %v1243, %v1281
      %v1376 = vmul.f32 %v1244, %v1281
      %v1377 = vmul.f32 %v1245, %v1281
      %v1378 = vmul.f32 %v1246, %v1281
      %v1379 = vmul.f32 %v1247, %v1281
      %v1380 = vmul.f32 %v1248, %v1281
      %v1381 = vmul.f32 %v1249, %v1281
      %v1382 = vmul.f32 %v1250, %v1281
      %v1383 = vmul.f32 %v1251, %v1281
      %v1384 = vmul.f32 %v1252, %v1281
      %v1385 = vmul.f32 %v1253, %v1281
      %v1386 = vmul.f32 %v1254, %v1281
      %v1387 = vmul.f32 %v1255, %v1281
      %v1388 = vmul.f32 %v1256, %v1281
      %v1389 = vmul.f32 %v1257, %v1281
      %v1390 = vmul.f32 %v1258, %v1281
      %v1391 = vmul.f32 %v1259, %v1281
      %v1392 = vmul.f32 %v1260, %v1281
      %v1393 = vmul.f32 %v1261, %v1281
      %v1394 = vmul.f32 %v1262, %v1281
      %v1395 = vmul.f32 %v1263, %v1281
      %v1396 = vmul.f32 %v1264, %v1281
      %v1397 = vmul.f32 %v1265, %v1281
      %v1398 = vmul.f32 %v1266, %v1281
      %v1399 = vmul.f32 %v1267, %v1281
      %v1400 = vmul.f32 %v1268, %v1281
      %v1401 = vmul.f32 %v1269, %v1281
      %v1402 = vmul.f32 %v1270, %v1281
      %v1403 = vmul.f32 %v1271, %v1281
      %v1404 = vmul.f32 %v1272, %v1281
      %v1405 = vmul.f32 %v1273, %v1281
      %v1406 = vmul.f32 %v1274, %v1281
      %v1407 = vmul.f32 %v1275, %v1281
      %v1408 = vmul.f32 %v1276, %v1281
      %v1409 = vmul.f32 %v1277, %v1281
      %v1410 = vmul.f32 %v1278, %v1281
      %v1411 = vld [vmem:[%s4] sm:$0x1]
      %v1413 = vperm.slane %v1411, 0
      %v1415 = vadd.f32 %v1283, %v1413
      %v1416 = vadd.f32 %v1284, %v1413
      %v1417 = vadd.f32 %v1285, %v1413
      %v1418 = vadd.f32 %v1286, %v1413
      %v1419 = vadd.f32 %v1287, %v1413
      %v1420 = vadd.f32 %v1288, %v1413
      %v1421 = vadd.f32 %v1289, %v1413
      %v1422 = vadd.f32 %v1290, %v1413
      %v1423 = vadd.f32 %v1291, %v1413
      %v1424 = vadd.f32 %v1292, %v1413
      %v1425 = vadd.f32 %v1293, %v1413
      %v1426 = vadd.f32 %v1294, %v1413
      %v1427 = vadd.f32 %v1295, %v1413
      %v1428 = vadd.f32 %v1296, %v1413
      %v1429 = vadd.f32 %v1297, %v1413
      %v1430 = vadd.f32 %v1298, %v1413
      %v1431 = vadd.f32 %v1299, %v1413
      %v1432 = vadd.f32 %v1300, %v1413
      %v1433 = vadd.f32 %v1301, %v1413
      %v1434 = vadd.f32 %v1302, %v1413
      %v1435 = vadd.f32 %v1303, %v1413
      %v1436 = vadd.f32 %v1304, %v1413
      %v1437 = vadd.f32 %v1305, %v1413
      %v1438 = vadd.f32 %v1306, %v1413
      %v1439 = vadd.f32 %v1307, %v1413
      %v1440 = vadd.f32 %v1308, %v1413
      %v1441 = vadd.f32 %v1309, %v1413
      %v1442 = vadd.f32 %v1310, %v1413
      %v1443 = vadd.f32 %v1311, %v1413
      %v1444 = vadd.f32 %v1312, %v1413
      %v1445 = vadd.f32 %v1313, %v1413
      %v1446 = vadd.f32 %v1314, %v1413
      %v1447 = vadd.f32 %v1315, %v1413
      %v1448 = vadd.f32 %v1316, %v1413
      %v1449 = vadd.f32 %v1317, %v1413
      %v1450 = vadd.f32 %v1318, %v1413
      %v1451 = vadd.f32 %v1319, %v1413
      %v1452 = vadd.f32 %v1320, %v1413
      %v1453 = vadd.f32 %v1321, %v1413
      %v1454 = vadd.f32 %v1322, %v1413
      %v1455 = vadd.f32 %v1323, %v1413
      %v1456 = vadd.f32 %v1324, %v1413
      %v1457 = vadd.f32 %v1325, %v1413
      %v1458 = vadd.f32 %v1326, %v1413
      %v1459 = vadd.f32 %v1327, %v1413
      %v1460 = vadd.f32 %v1328, %v1413
      %v1461 = vadd.f32 %v1329, %v1413
      %v1462 = vadd.f32 %v1330, %v1413
      %v1463 = vadd.f32 %v1331, %v1413
      %v1464 = vadd.f32 %v1332, %v1413
      %v1465 = vadd.f32 %v1333, %v1413
      %v1466 = vadd.f32 %v1334, %v1413
      %v1467 = vadd.f32 %v1335, %v1413
      %v1468 = vadd.f32 %v1336, %v1413
      %v1469 = vadd.f32 %v1337, %v1413
      %v1470 = vadd.f32 %v1338, %v1413
      %v1471 = vadd.f32 %v1339, %v1413
      %v1472 = vadd.f32 %v1340, %v1413
      %v1473 = vadd.f32 %v1341, %v1413
      %v1474 = vadd.f32 %v1342, %v1413
      %v1475 = vadd.f32 %v1343, %v1413
      %v1476 = vadd.f32 %v1344, %v1413
      %v1477 = vadd.f32 %v1345, %v1413
      %v1478 = vadd.f32 %v1346, %v1413
      %v1479 = vadd.f32 %v1347, %v1413
      %v1480 = vadd.f32 %v1348, %v1413
      %v1481 = vadd.f32 %v1349, %v1413
      %v1482 = vadd.f32 %v1350, %v1413
      %v1483 = vadd.f32 %v1351, %v1413
      %v1484 = vadd.f32 %v1352, %v1413
      %v1485 = vadd.f32 %v1353, %v1413
      %v1486 = vadd.f32 %v1354, %v1413
      %v1487 = vadd.f32 %v1355, %v1413
      %v1488 = vadd.f32 %v1356, %v1413
      %v1489 = vadd.f32 %v1357, %v1413
      %v1490 = vadd.f32 %v1358, %v1413
      %v1491 = vadd.f32 %v1359, %v1413
      %v1492 = vadd.f32 %v1360, %v1413
      %v1493 = vadd.f32 %v1361, %v1413
      %v1494 = vadd.f32 %v1362, %v1413
      %v1495 = vadd.f32 %v1363, %v1413
      %v1496 = vadd.f32 %v1364, %v1413
      %v1497 = vadd.f32 %v1365, %v1413
      %v1498 = vadd.f32 %v1366, %v1413
      %v1499 = vadd.f32 %v1367, %v1413
      %v1500 = vadd.f32 %v1368, %v1413
      %v1501 = vadd.f32 %v1369, %v1413
      %v1502 = vadd.f32 %v1370, %v1413
      %v1503 = vadd.f32 %v1371, %v1413
      %v1504 = vadd.f32 %v1372, %v1413
      %v1505 = vadd.f32 %v1373, %v1413
      %v1506 = vadd.f32 %v1374, %v1413
      %v1507 = vadd.f32 %v1375, %v1413
      %v1508 = vadd.f32 %v1376, %v1413
      %v1509 = vadd.f32 %v1377, %v1413
      %v1510 = vadd.f32 %v1378, %v1413
      %v1511 = vadd.f32 %v1379, %v1413
      %v1512 = vadd.f32 %v1380, %v1413
      %v1513 = vadd.f32 %v1381, %v1413
      %v1514 = vadd.f32 %v1382, %v1413
      %v1515 = vadd.f32 %v1383, %v1413
      %v1516 = vadd.f32 %v1384, %v1413
      %v1517 = vadd.f32 %v1385, %v1413
      %v1518 = vadd.f32 %v1386, %v1413
      %v1519 = vadd.f32 %v1387, %v1413
      %v1520 = vadd.f32 %v1388, %v1413
      %v1521 = vadd.f32 %v1389, %v1413
      %v1522 = vadd.f32 %v1390, %v1413
      %v1523 = vadd.f32 %v1391, %v1413
      %v1524 = vadd.f32 %v1392, %v1413
      %v1525 = vadd.f32 %v1393, %v1413
      %v1526 = vadd.f32 %v1394, %v1413
      %v1527 = vadd.f32 %v1395, %v1413
      %v1528 = vadd.f32 %v1396, %v1413
      %v1529 = vadd.f32 %v1397, %v1413
      %v1530 = vadd.f32 %v1398, %v1413
      %v1531 = vadd.f32 %v1399, %v1413
      %v1532 = vadd.f32 %v1400, %v1413
      %v1533 = vadd.f32 %v1401, %v1413
      %v1534 = vadd.f32 %v1402, %v1413
      %v1535 = vadd.f32 %v1403, %v1413
      %v1536 = vadd.f32 %v1404, %v1413
      %v1537 = vadd.f32 %v1405, %v1413
      %v1538 = vadd.f32 %v1406, %v1413
      %v1539 = vadd.f32 %v1407, %v1413
      %v1540 = vadd.f32 %v1408, %v1413
      %v1541 = vadd.f32 %v1409, %v1413
      %v1542 = vadd.f32 %v1410, %v1413
      %vm1543 = vcmask 261120
      %1544 = vst.msk [vmem:[#allocation2] sm:$0xff] %vm1543, %v1415
      %1545 = vst.msk [vmem:[#allocation2 + $0x8] sm:$0xff] %vm1543, %v1416
      %1546 = vst.msk [vmem:[#allocation2 + $0x10] sm:$0xff] %vm1543, %v1417
      %1547 = vst.msk [vmem:[#allocation2 + $0x18] sm:$0xff] %vm1543, %v1418
      %1548 = vst.msk [vmem:[#allocation2 + $0x20] sm:$0xff] %vm1543, %v1419
      %1549 = vst.msk [vmem:[#allocation2 + $0x28] sm:$0xff] %vm1543, %v1420
      %1550 = vst.msk [vmem:[#allocation2 + $0x30] sm:$0xff] %vm1543, %v1421
      %1551 = vst.msk [vmem:[#allocation2 + $0x38] sm:$0xff] %vm1543, %v1422
      %1552 = vst.msk [vmem:[#allocation2 + $0x40] sm:$0xff] %vm1543, %v1423
      %1553 = vst.msk [vmem:[#allocation2 + $0x48] sm:$0xff] %vm1543, %v1424
      %1554 = vst.msk [vmem:[#allocation2 + $0x50] sm:$0xff] %vm1543, %v1425
      %1555 = vst.msk [vmem:[#allocation2 + $0x58] sm:$0xff] %vm1543, %v1426
      %1556 = vst.msk [vmem:[#allocation2 + $0x60] sm:$0xff] %vm1543, %v1427
      %1557 = vst.msk [vmem:[#allocation2 + $0x68] sm:$0xff] %vm1543, %v1428
      %1558 = vst.msk [vmem:[#allocation2 + $0x70] sm:$0xff] %vm1543, %v1429
      %1559 = vst.msk [vmem:[#allocation2 + $0x78] sm:$0xff] %vm1543, %v1430
      %1560 = vst.msk [vmem:[#allocation2 + $0x80] sm:$0xff] %vm1543, %v1431
      %1561 = vst.msk [vmem:[#allocation2 + $0x88] sm:$0xff] %vm1543, %v1432
      %1562 = vst.msk [vmem:[#allocation2 + $0x90] sm:$0xff] %vm1543, %v1433
      %1563 = vst.msk [vmem:[#allocation2 + $0x98] sm:$0xff] %vm1543, %v1434
      %1564 = vst.msk [vmem:[#allocation2 + $0xa0] sm:$0xff] %vm1543, %v1435
      %1565 = vst.msk [vmem:[#allocation2 + $0xa8] sm:$0xff] %vm1543, %v1436
      %1566 = vst.msk [vmem:[#allocation2 + $0xb0] sm:$0xff] %vm1543, %v1437
      %1567 = vst.msk [vmem:[#allocation2 + $0xb8] sm:$0xff] %vm1543, %v1438
      %1568 = vst.msk [vmem:[#allocation2 + $0xc0] sm:$0xff] %vm1543, %v1439
      %1569 = vst.msk [vmem:[#allocation2 + $0xc8] sm:$0xff] %vm1543, %v1440
      %1570 = vst.msk [vmem:[#allocation2 + $0xd0] sm:$0xff] %vm1543, %v1441
      %1571 = vst.msk [vmem:[#allocation2 + $0xd8] sm:$0xff] %vm1543, %v1442
      %1572 = vst.msk [vmem:[#allocation2 + $0xe0] sm:$0xff] %vm1543, %v1443
      %1573 = vst.msk [vmem:[#allocation2 + $0xe8] sm:$0xff] %vm1543, %v1444
      %1574 = vst.msk [vmem:[#allocation2 + $0xf0] sm:$0xff] %vm1543, %v1445
      %1575 = vst.msk [vmem:[#allocation2 + $0xf8] sm:$0xff] %vm1543, %v1446
      %1576 = vst.msk [vmem:[#allocation2 + $0x100] sm:$0xff] %vm1543, %v1447
      %1577 = vst.msk [vmem:[#allocation2 + $0x108] sm:$0xff] %vm1543, %v1448
      %1578 = vst.msk [vmem:[#allocation2 + $0x110] sm:$0xff] %vm1543, %v1449
      %1579 = vst.msk [vmem:[#allocation2 + $0x118] sm:$0xff] %vm1543, %v1450
      %1580 = vst.msk [vmem:[#allocation2 + $0x120] sm:$0xff] %vm1543, %v1451
      %1581 = vst.msk [vmem:[#allocation2 + $0x128] sm:$0xff] %vm1543, %v1452
      %1582 = vst.msk [vmem:[#allocation2 + $0x130] sm:$0xff] %vm1543, %v1453
      %1583 = vst.msk [vmem:[#allocation2 + $0x138] sm:$0xff] %vm1543, %v1454
      %1584 = vst.msk [vmem:[#allocation2 + $0x140] sm:$0xff] %vm1543, %v1455
      %1585 = vst.msk [vmem:[#allocation2 + $0x148] sm:$0xff] %vm1543, %v1456
      %1586 = vst.msk [vmem:[#allocation2 + $0x150] sm:$0xff] %vm1543, %v1457
      %1587 = vst.msk [vmem:[#allocation2 + $0x158] sm:$0xff] %vm1543, %v1458
      %1588 = vst.msk [vmem:[#allocation2 + $0x160] sm:$0xff] %vm1543, %v1459
      %1589 = vst.msk [vmem:[#allocation2 + $0x168] sm:$0xff] %vm1543, %v1460
      %1590 = vst.msk [vmem:[#allocation2 + $0x170] sm:$0xff] %vm1543, %v1461
      %1591 = vst.msk [vmem:[#allocation2 + $0x178] sm:$0xff] %vm1543, %v1462
      %1592 = vst.msk [vmem:[#allocation2 + $0x180] sm:$0xff] %vm1543, %v1463
      %1593 = vst.msk [vmem:[#allocation2 + $0x188] sm:$0xff] %vm1543, %v1464
      %1594 = vst.msk [vmem:[#allocation2 + $0x190] sm:$0xff] %vm1543, %v1465
      %1595 = vst.msk [vmem:[#allocation2 + $0x198] sm:$0xff] %vm1543, %v1466
      %1596 = vst.msk [vmem:[#allocation2 + $0x1a0] sm:$0xff] %vm1543, %v1467
      %1597 = vst.msk [vmem:[#allocation2 + $0x1a8] sm:$0xff] %vm1543, %v1468
      %1598 = vst.msk [vmem:[#allocation2 + $0x1b0] sm:$0xff] %vm1543, %v1469
      %1599 = vst.msk [vmem:[#allocation2 + $0x1b8] sm:$0xff] %vm1543, %v1470
      %1600 = vst.msk [vmem:[#allocation2 + $0x1c0] sm:$0xff] %vm1543, %v1471
      %1601 = vst.msk [vmem:[#allocation2 + $0x1c8] sm:$0xff] %vm1543, %v1472
      %1602 = vst.msk [vmem:[#allocation2 + $0x1d0] sm:$0xff] %vm1543, %v1473
      %1603 = vst.msk [vmem:[#allocation2 + $0x1d8] sm:$0xff] %vm1543, %v1474
      %1604 = vst.msk [vmem:[#allocation2 + $0x1e0] sm:$0xff] %vm1543, %v1475
      %1605 = vst.msk [vmem:[#allocation2 + $0x1e8] sm:$0xff] %vm1543, %v1476
      %1606 = vst.msk [vmem:[#allocation2 + $0x1f0] sm:$0xff] %vm1543, %v1477
      %1607 = vst.msk [vmem:[#allocation2 + $0x1f8] sm:$0xff] %vm1543, %v1478
      %1608 = vst.msk [vmem:[#allocation2 + $0x200] sm:$0xff] %vm1543, %v1479
      %1609 = vst.msk [vmem:[#allocation2 + $0x208] sm:$0xff] %vm1543, %v1480
      %1610 = vst.msk [vmem:[#allocation2 + $0x210] sm:$0xff] %vm1543, %v1481
      %1611 = vst.msk [vmem:[#allocation2 + $0x218] sm:$0xff] %vm1543, %v1482
      %1612 = vst.msk [vmem:[#allocation2 + $0x220] sm:$0xff] %vm1543, %v1483
      %1613 = vst.msk [vmem:[#allocation2 + $0x228] sm:$0xff] %vm1543, %v1484
      %1614 = vst.msk [vmem:[#allocation2 + $0x230] sm:$0xff] %vm1543, %v1485
      %1615 = vst.msk [vmem:[#allocation2 + $0x238] sm:$0xff] %vm1543, %v1486
      %1616 = vst.msk [vmem:[#allocation2 + $0x240] sm:$0xff] %vm1543, %v1487
      %1617 = vst.msk [vmem:[#allocation2 + $0x248] sm:$0xff] %vm1543, %v1488
      %1618 = vst.msk [vmem:[#allocation2 + $0x250] sm:$0xff] %vm1543, %v1489
      %1619 = vst.msk [vmem:[#allocation2 + $0x258] sm:$0xff] %vm1543, %v1490
      %1620 = vst.msk [vmem:[#allocation2 + $0x260] sm:$0xff] %vm1543, %v1491
      %1621 = vst.msk [vmem:[#allocation2 + $0x268] sm:$0xff] %vm1543, %v1492
      %1622 = vst.msk [vmem:[#allocation2 + $0x270] sm:$0xff] %vm1543, %v1493
      %1623 = vst.msk [vmem:[#allocation2 + $0x278] sm:$0xff] %vm1543, %v1494
      %1624 = vst.msk [vmem:[#allocation2 + $0x280] sm:$0xff] %vm1543, %v1495
      %1625 = vst.msk [vmem:[#allocation2 + $0x288] sm:$0xff] %vm1543, %v1496
      %1626 = vst.msk [vmem:[#allocation2 + $0x290] sm:$0xff] %vm1543, %v1497
      %1627 = vst.msk [vmem:[#allocation2 + $0x298] sm:$0xff] %vm1543, %v1498
      %1628 = vst.msk [vmem:[#allocation2 + $0x2a0] sm:$0xff] %vm1543, %v1499
      %1629 = vst.msk [vmem:[#allocation2 + $0x2a8] sm:$0xff] %vm1543, %v1500
      %1630 = vst.msk [vmem:[#allocation2 + $0x2b0] sm:$0xff] %vm1543, %v1501
      %1631 = vst.msk [vmem:[#allocation2 + $0x2b8] sm:$0xff] %vm1543, %v1502
      %1632 = vst.msk [vmem:[#allocation2 + $0x2c0] sm:$0xff] %vm1543, %v1503
      %1633 = vst.msk [vmem:[#allocation2 + $0x2c8] sm:$0xff] %vm1543, %v1504
      %1634 = vst.msk [vmem:[#allocation2 + $0x2d0] sm:$0xff] %vm1543, %v1505
      %1635 = vst.msk [vmem:[#allocation2 + $0x2d8] sm:$0xff] %vm1543, %v1506
      %1636 = vst.msk [vmem:[#allocation2 + $0x2e0] sm:$0xff] %vm1543, %v1507
      %1637 = vst.msk [vmem:[#allocation2 + $0x2e8] sm:$0xff] %vm1543, %v1508
      %1638 = vst.msk [vmem:[#allocation2 + $0x2f0] sm:$0xff] %vm1543, %v1509
      %1639 = vst.msk [vmem:[#allocation2 + $0x2f8] sm:$0xff] %vm1543, %v1510
      %1640 = vst.msk [vmem:[#allocation2 + $0x300] sm:$0xff] %vm1543, %v1511
      %1641 = vst.msk [vmem:[#allocation2 + $0x308] sm:$0xff] %vm1543, %v1512
      %1642 = vst.msk [vmem:[#allocation2 + $0x310] sm:$0xff] %vm1543, %v1513
      %1643 = vst.msk [vmem:[#allocation2 + $0x318] sm:$0xff] %vm1543, %v1514
      %1644 = vst.msk [vmem:[#allocation2 + $0x320] sm:$0xff] %vm1543, %v1515
      %1645 = vst.msk [vmem:[#allocation2 + $0x328] sm:$0xff] %vm1543, %v1516
      %1646 = vst.msk [vmem:[#allocation2 + $0x330] sm:$0xff] %vm1543, %v1517
      %1647 = vst.msk [vmem:[#allocation2 + $0x338] sm:$0xff] %vm1543, %v1518
      %1648 = vst.msk [vmem:[#allocation2 + $0x340] sm:$0xff] %vm1543, %v1519
      %1649 = vst.msk [vmem:[#allocation2 + $0x348] sm:$0xff] %vm1543, %v1520
      %1650 = vst.msk [vmem:[#allocation2 + $0x350] sm:$0xff] %vm1543, %v1521
      %1651 = vst.msk [vmem:[#allocation2 + $0x358] sm:$0xff] %vm1543, %v1522
      %1652 = vst.msk [vmem:[#allocation2 + $0x360] sm:$0xff] %vm1543, %v1523
      %1653 = vst.msk [vmem:[#allocation2 + $0x368] sm:$0xff] %vm1543, %v1524
      %1654 = vst.msk [vmem:[#allocation2 + $0x370] sm:$0xff] %vm1543, %v1525
      %1655 = vst.msk [vmem:[#allocation2 + $0x378] sm:$0xff] %vm1543, %v1526
      %1656 = vst.msk [vmem:[#allocation2 + $0x380] sm:$0xff] %vm1543, %v1527
      %1657 = vst.msk [vmem:[#allocation2 + $0x388] sm:$0xff] %vm1543, %v1528
      %1658 = vst.msk [vmem:[#allocation2 + $0x390] sm:$0xff] %vm1543, %v1529
      %1659 = vst.msk [vmem:[#allocation2 + $0x398] sm:$0xff] %vm1543, %v1530
      %1660 = vst.msk [vmem:[#allocation2 + $0x3a0] sm:$0xff] %vm1543, %v1531
      %1661 = vst.msk [vmem:[#allocation2 + $0x3a8] sm:$0xff] %vm1543, %v1532
      %1662 = vst.msk [vmem:[#allocation2 + $0x3b0] sm:$0xff] %vm1543, %v1533
      %1663 = vst.msk [vmem:[#allocation2 + $0x3b8] sm:$0xff] %vm1543, %v1534
      %1664 = vst.msk [vmem:[#allocation2 + $0x3c0] sm:$0xff] %vm1543, %v1535
      %1665 = vst.msk [vmem:[#allocation2 + $0x3c8] sm:$0xff] %vm1543, %v1536
      %1666 = vst.msk [vmem:[#allocation2 + $0x3d0] sm:$0xff] %vm1543, %v1537
      %1667 = vst.msk [vmem:[#allocation2 + $0x3d8] sm:$0xff] %vm1543, %v1538
      %1668 = vst.msk [vmem:[#allocation2 + $0x3e0] sm:$0xff] %vm1543, %v1539
      %1669 = vst.msk [vmem:[#allocation2 + $0x3e8] sm:$0xff] %vm1543, %v1540
      %1670 = vst.msk [vmem:[#allocation2 + $0x3f0] sm:$0xff] %vm1543, %v1541
      %1671 = vst.msk [vmem:[#allocation2 + $0x3f8] sm:$0xff] %vm1543, %v1542
      %v1672 = vld [vmem:[#allocation2] ss:$2 sm:$0xff]
      %s1673 = scalar_lea.vmem [#allocation2], 16
      %v1674 = vld [vmem:[%s1673] ss:$2 sm:$0xff]
      %s1675 = scalar_lea.vmem [#allocation2], 32
      %v1676 = vld [vmem:[%s1675] ss:$2 sm:$0xff]
      %s1677 = scalar_lea.vmem [#allocation2], 48
      %v1678 = vld [vmem:[%s1677] ss:$2 sm:$0xff]
      %s1679 = scalar_lea.vmem [#allocation2], 64
      %v1680 = vld [vmem:[%s1679] ss:$2 sm:$0xff]
      %s1681 = scalar_lea.vmem [#allocation2], 80
      %v1682 = vld [vmem:[%s1681] ss:$2 sm:$0xff]
      %s1683 = scalar_lea.vmem [#allocation2], 96
      %v1684 = vld [vmem:[%s1683] ss:$2 sm:$0xff]
      %s1685 = scalar_lea.vmem [#allocation2], 112
      %v1686 = vld [vmem:[%s1685] ss:$2 sm:$0xff]
      %s1687 = scalar_lea.vmem [#allocation2], 128
      %v1688 = vld [vmem:[%s1687] ss:$2 sm:$0xff]
      %s1689 = scalar_lea.vmem [#allocation2], 144
      %v1690 = vld [vmem:[%s1689] ss:$2 sm:$0xff]
      %s1691 = scalar_lea.vmem [#allocation2], 160
      %v1692 = vld [vmem:[%s1691] ss:$2 sm:$0xff]
      %s1693 = scalar_lea.vmem [#allocation2], 176
      %v1694 = vld [vmem:[%s1693] ss:$2 sm:$0xff]
      %s1695 = scalar_lea.vmem [#allocation2], 192
      %v1696 = vld [vmem:[%s1695] ss:$2 sm:$0xff]
      %s1697 = scalar_lea.vmem [#allocation2], 208
      %v1698 = vld [vmem:[%s1697] ss:$2 sm:$0xff]
      %s1699 = scalar_lea.vmem [#allocation2], 224
      %v1700 = vld [vmem:[%s1699] ss:$2 sm:$0xff]
      %s1701 = scalar_lea.vmem [#allocation2], 240
      %v1702 = vld [vmem:[%s1701] ss:$2 sm:$0xff]
      %s1703 = scalar_lea.vmem [#allocation2], 256
      %v1704 = vld [vmem:[%s1703] ss:$2 sm:$0xff]
      %s1705 = scalar_lea.vmem [#allocation2], 272
      %v1706 = vld [vmem:[%s1705] ss:$2 sm:$0xff]
      %s1707 = scalar_lea.vmem [#allocation2], 288
      %v1708 = vld [vmem:[%s1707] ss:$2 sm:$0xff]
      %s1709 = scalar_lea.vmem [#allocation2], 304
      %v1710 = vld [vmem:[%s1709] ss:$2 sm:$0xff]
      %s1711 = scalar_lea.vmem [#allocation2], 320
      %v1712 = vld [vmem:[%s1711] ss:$2 sm:$0xff]
      %s1713 = scalar_lea.vmem [#allocation2], 336
      %v1714 = vld [vmem:[%s1713] ss:$2 sm:$0xff]
      %s1715 = scalar_lea.vmem [#allocation2], 352
      %v1716 = vld [vmem:[%s1715] ss:$2 sm:$0xff]
      %s1717 = scalar_lea.vmem [#allocation2], 368
      %v1718 = vld [vmem:[%s1717] ss:$2 sm:$0xff]
      %s1719 = scalar_lea.vmem [#allocation2], 384
      %v1720 = vld [vmem:[%s1719] ss:$2 sm:$0xff]
      %s1721 = scalar_lea.vmem [#allocation2], 400
      %v1722 = vld [vmem:[%s1721] ss:$2 sm:$0xff]
      %s1723 = scalar_lea.vmem [#allocation2], 416
      %v1724 = vld [vmem:[%s1723] ss:$2 sm:$0xff]
      %s1725 = scalar_lea.vmem [#allocation2], 432
      %v1726 = vld [vmem:[%s1725] ss:$2 sm:$0xff]
      %s1727 = scalar_lea.vmem [#allocation2], 448
      %v1728 = vld [vmem:[%s1727] ss:$2 sm:$0xff]
      %s1729 = scalar_lea.vmem [#allocation2], 464
      %v1730 = vld [vmem:[%s1729] ss:$2 sm:$0xff]
      %s1731 = scalar_lea.vmem [#allocation2], 480
      %v1732 = vld [vmem:[%s1731] ss:$2 sm:$0xff]
      %s1733 = scalar_lea.vmem [#allocation2], 496
      %v1734 = vld [vmem:[%s1733] ss:$2 sm:$0xff]
      %s1735 = scalar_lea.vmem [#allocation2], 512
      %v1736 = vld [vmem:[%s1735] ss:$2 sm:$0xff]
      %s1737 = scalar_lea.vmem [#allocation2], 528
      %v1738 = vld [vmem:[%s1737] ss:$2 sm:$0xff]
      %s1739 = scalar_lea.vmem [#allocation2], 544
      %v1740 = vld [vmem:[%s1739] ss:$2 sm:$0xff]
      %s1741 = scalar_lea.vmem [#allocation2], 560
      %v1742 = vld [vmem:[%s1741] ss:$2 sm:$0xff]
      %s1743 = scalar_lea.vmem [#allocation2], 576
      %v1744 = vld [vmem:[%s1743] ss:$2 sm:$0xff]
      %s1745 = scalar_lea.vmem [#allocation2], 592
      %v1746 = vld [vmem:[%s1745] ss:$2 sm:$0xff]
      %s1747 = scalar_lea.vmem [#allocation2], 608
      %v1748 = vld [vmem:[%s1747] ss:$2 sm:$0xff]
      %s1749 = scalar_lea.vmem [#allocation2], 624
      %v1750 = vld [vmem:[%s1749] ss:$2 sm:$0xff]
      %s1751 = scalar_lea.vmem [#allocation2], 640
      %v1752 = vld [vmem:[%s1751] ss:$2 sm:$0xff]
      %s1753 = scalar_lea.vmem [#allocation2], 656
      %v1754 = vld [vmem:[%s1753] ss:$2 sm:$0xff]
      %s1755 = scalar_lea.vmem [#allocation2], 672
      %v1756 = vld [vmem:[%s1755] ss:$2 sm:$0xff]
      %s1757 = scalar_lea.vmem [#allocation2], 688
      %v1758 = vld [vmem:[%s1757] ss:$2 sm:$0xff]
      %s1759 = scalar_lea.vmem [#allocation2], 704
      %v1760 = vld [vmem:[%s1759] ss:$2 sm:$0xff]
      %s1761 = scalar_lea.vmem [#allocation2], 720
      %v1762 = vld [vmem:[%s1761] ss:$2 sm:$0xff]
      %s1763 = scalar_lea.vmem [#allocation2], 736
      %v1764 = vld [vmem:[%s1763] ss:$2 sm:$0xff]
      %s1765 = scalar_lea.vmem [#allocation2], 752
      %v1766 = vld [vmem:[%s1765] ss:$2 sm:$0xff]
      %s1767 = scalar_lea.vmem [#allocation2], 768
      %v1768 = vld [vmem:[%s1767] ss:$2 sm:$0xff]
      %s1769 = scalar_lea.vmem [#allocation2], 784
      %v1770 = vld [vmem:[%s1769] ss:$2 sm:$0xff]
      %s1771 = scalar_lea.vmem [#allocation2], 800
      %v1772 = vld [vmem:[%s1771] ss:$2 sm:$0xff]
      %s1773 = scalar_lea.vmem [#allocation2], 816
      %v1774 = vld [vmem:[%s1773] ss:$2 sm:$0xff]
      %s1775 = scalar_lea.vmem [#allocation2], 832
      %v1776 = vld [vmem:[%s1775] ss:$2 sm:$0xff]
      %s1777 = scalar_lea.vmem [#allocation2], 848
      %v1778 = vld [vmem:[%s1777] ss:$2 sm:$0xff]
      %s1779 = scalar_lea.vmem [#allocation2], 864
      %v1780 = vld [vmem:[%s1779] ss:$2 sm:$0xff]
      %s1781 = scalar_lea.vmem [#allocation2], 880
      %v1782 = vld [vmem:[%s1781] ss:$2 sm:$0xff]
      %s1783 = scalar_lea.vmem [#allocation2], 896
      %v1784 = vld [vmem:[%s1783] ss:$2 sm:$0xff]
      %s1785 = scalar_lea.vmem [#allocation2], 912
      %v1786 = vld [vmem:[%s1785] ss:$2 sm:$0xff]
      %s1787 = scalar_lea.vmem [#allocation2], 928
      %v1788 = vld [vmem:[%s1787] ss:$2 sm:$0xff]
      %s1789 = scalar_lea.vmem [#allocation2], 944
      %v1790 = vld [vmem:[%s1789] ss:$2 sm:$0xff]
      %s1791 = scalar_lea.vmem [#allocation2], 960
      %v1792 = vld [vmem:[%s1791] ss:$2 sm:$0xff]
      %s1793 = scalar_lea.vmem [#allocation2], 976
      %v1794 = vld [vmem:[%s1793] ss:$2 sm:$0xff]
      %s1795 = scalar_lea.vmem [#allocation2], 992
      %v1796 = vld [vmem:[%s1795] ss:$2 sm:$0xff]
      %s1797 = scalar_lea.vmem [#allocation2], 1008
      %v1798 = vld [vmem:[%s1797] ss:$2 sm:$0xff]
      %s1799 = scalar_lea.vmem [#allocation2], 1
      %v1800 = vld [vmem:[%s1799] ss:$2 sm:$0xff]
      %s1801 = scalar_lea.vmem [#allocation2], 17
      %v1802 = vld [vmem:[%s1801] ss:$2 sm:$0xff]
      %s1803 = scalar_lea.vmem [#allocation2], 33
      %v1804 = vld [vmem:[%s1803] ss:$2 sm:$0xff]
      %s1805 = scalar_lea.vmem [#allocation2], 49
      %v1806 = vld [vmem:[%s1805] ss:$2 sm:$0xff]
      %s1807 = scalar_lea.vmem [#allocation2], 65
      %v1808 = vld [vmem:[%s1807] ss:$2 sm:$0xff]
      %s1809 = scalar_lea.vmem [#allocation2], 81
      %v1810 = vld [vmem:[%s1809] ss:$2 sm:$0xff]
      %s1811 = scalar_lea.vmem [#allocation2], 97
      %v1812 = vld [vmem:[%s1811] ss:$2 sm:$0xff]
      %s1813 = scalar_lea.vmem [#allocation2], 113
      %v1814 = vld [vmem:[%s1813] ss:$2 sm:$0xff]
      %s1815 = scalar_lea.vmem [#allocation2], 129
      %v1816 = vld [vmem:[%s1815] ss:$2 sm:$0xff]
      %s1817 = scalar_lea.vmem [#allocation2], 145
      %v1818 = vld [vmem:[%s1817] ss:$2 sm:$0xff]
      %s1819 = scalar_lea.vmem [#allocation2], 161
      %v1820 = vld [vmem:[%s1819] ss:$2 sm:$0xff]
      %s1821 = scalar_lea.vmem [#allocation2], 177
      %v1822 = vld [vmem:[%s1821] ss:$2 sm:$0xff]
      %s1823 = scalar_lea.vmem [#allocation2], 193
      %v1824 = vld [vmem:[%s1823] ss:$2 sm:$0xff]
      %s1825 = scalar_lea.vmem [#allocation2], 209
      %v1826 = vld [vmem:[%s1825] ss:$2 sm:$0xff]
      %s1827 = scalar_lea.vmem [#allocation2], 225
      %v1828 = vld [vmem:[%s1827] ss:$2 sm:$0xff]
      %s1829 = scalar_lea.vmem [#allocation2], 241
      %v1830 = vld [vmem:[%s1829] ss:$2 sm:$0xff]
      %s1831 = scalar_lea.vmem [#allocation2], 257
      %v1832 = vld [vmem:[%s1831] ss:$2 sm:$0xff]
      %s1833 = scalar_lea.vmem [#allocation2], 273
      %v1834 = vld [vmem:[%s1833] ss:$2 sm:$0xff]
      %s1835 = scalar_lea.vmem [#allocation2], 289
      %v1836 = vld [vmem:[%s1835] ss:$2 sm:$0xff]
      %s1837 = scalar_lea.vmem [#allocation2], 305
      %v1838 = vld [vmem:[%s1837] ss:$2 sm:$0xff]
      %s1839 = scalar_lea.vmem [#allocation2], 321
      %v1840 = vld [vmem:[%s1839] ss:$2 sm:$0xff]
      %s1841 = scalar_lea.vmem [#allocation2], 337
      %v1842 = vld [vmem:[%s1841] ss:$2 sm:$0xff]
      %s1843 = scalar_lea.vmem [#allocation2], 353
      %v1844 = vld [vmem:[%s1843] ss:$2 sm:$0xff]
      %s1845 = scalar_lea.vmem [#allocation2], 369
      %v1846 = vld [vmem:[%s1845] ss:$2 sm:$0xff]
      %s1847 = scalar_lea.vmem [#allocation2], 385
      %v1848 = vld [vmem:[%s1847] ss:$2 sm:$0xff]
      %s1849 = scalar_lea.vmem [#allocation2], 401
      %v1850 = vld [vmem:[%s1849] ss:$2 sm:$0xff]
      %s1851 = scalar_lea.vmem [#allocation2], 417
      %v1852 = vld [vmem:[%s1851] ss:$2 sm:$0xff]
      %s1853 = scalar_lea.vmem [#allocation2], 433
      %v1854 = vld [vmem:[%s1853] ss:$2 sm:$0xff]
      %s1855 = scalar_lea.vmem [#allocation2], 449
      %v1856 = vld [vmem:[%s1855] ss:$2 sm:$0xff]
      %s1857 = scalar_lea.vmem [#allocation2], 465
      %v1858 = vld [vmem:[%s1857] ss:$2 sm:$0xff]
      %s1859 = scalar_lea.vmem [#allocation2], 481
      %v1860 = vld [vmem:[%s1859] ss:$2 sm:$0xff]
      %s1861 = scalar_lea.vmem [#allocation2], 497
      %v1862 = vld [vmem:[%s1861] ss:$2 sm:$0xff]
      %s1863 = scalar_lea.vmem [#allocation2], 513
      %v1864 = vld [vmem:[%s1863] ss:$2 sm:$0xff]
      %s1865 = scalar_lea.vmem [#allocation2], 529
      %v1866 = vld [vmem:[%s1865] ss:$2 sm:$0xff]
      %s1867 = scalar_lea.vmem [#allocation2], 545
      %v1868 = vld [vmem:[%s1867] ss:$2 sm:$0xff]
      %s1869 = scalar_lea.vmem [#allocation2], 561
      %v1870 = vld [vmem:[%s1869] ss:$2 sm:$0xff]
      %s1871 = scalar_lea.vmem [#allocation2], 577
      %v1872 = vld [vmem:[%s1871] ss:$2 sm:$0xff]
      %s1873 = scalar_lea.vmem [#allocation2], 593
      %v1874 = vld [vmem:[%s1873] ss:$2 sm:$0xff]
      %s1875 = scalar_lea.vmem [#allocation2], 609
      %v1876 = vld [vmem:[%s1875] ss:$2 sm:$0xff]
      %s1877 = scalar_lea.vmem [#allocation2], 625
      %v1878 = vld [vmem:[%s1877] ss:$2 sm:$0xff]
      %s1879 = scalar_lea.vmem [#allocation2], 641
      %v1880 = vld [vmem:[%s1879] ss:$2 sm:$0xff]
      %s1881 = scalar_lea.vmem [#allocation2], 657
      %v1882 = vld [vmem:[%s1881] ss:$2 sm:$0xff]
      %s1883 = scalar_lea.vmem [#allocation2], 673
      %v1884 = vld [vmem:[%s1883] ss:$2 sm:$0xff]
      %s1885 = scalar_lea.vmem [#allocation2], 689
      %v1886 = vld [vmem:[%s1885] ss:$2 sm:$0xff]
      %s1887 = scalar_lea.vmem [#allocation2], 705
      %v1888 = vld [vmem:[%s1887] ss:$2 sm:$0xff]
      %s1889 = scalar_lea.vmem [#allocation2], 721
      %v1890 = vld [vmem:[%s1889] ss:$2 sm:$0xff]
      %s1891 = scalar_lea.vmem [#allocation2], 737
      %v1892 = vld [vmem:[%s1891] ss:$2 sm:$0xff]
      %s1893 = scalar_lea.vmem [#allocation2], 753
      %v1894 = vld [vmem:[%s1893] ss:$2 sm:$0xff]
      %s1895 = scalar_lea.vmem [#allocation2], 769
      %v1896 = vld [vmem:[%s1895] ss:$2 sm:$0xff]
      %s1897 = scalar_lea.vmem [#allocation2], 785
      %v1898 = vld [vmem:[%s1897] ss:$2 sm:$0xff]
      %s1899 = scalar_lea.vmem [#allocation2], 801
      %v1900 = vld [vmem:[%s1899] ss:$2 sm:$0xff]
      %s1901 = scalar_lea.vmem [#allocation2], 817
      %v1902 = vld [vmem:[%s1901] ss:$2 sm:$0xff]
      %s1903 = scalar_lea.vmem [#allocation2], 833
      %v1904 = vld [vmem:[%s1903] ss:$2 sm:$0xff]
      %s1905 = scalar_lea.vmem [#allocation2], 849
      %v1906 = vld [vmem:[%s1905] ss:$2 sm:$0xff]
      %s1907 = scalar_lea.vmem [#allocation2], 865
      %v1908 = vld [vmem:[%s1907] ss:$2 sm:$0xff]
      %s1909 = scalar_lea.vmem [#allocation2], 881
      %v1910 = vld [vmem:[%s1909] ss:$2 sm:$0xff]
      %s1911 = scalar_lea.vmem [#allocation2], 897
      %v1912 = vld [vmem:[%s1911] ss:$2 sm:$0xff]
      %s1913 = scalar_lea.vmem [#allocation2], 913
      %v1914 = vld [vmem:[%s1913] ss:$2 sm:$0xff]
      %s1915 = scalar_lea.vmem [#allocation2], 929
      %v1916 = vld [vmem:[%s1915] ss:$2 sm:$0xff]
      %s1917 = scalar_lea.vmem [#allocation2], 945
      %v1918 = vld [vmem:[%s1917] ss:$2 sm:$0xff]
      %s1919 = scalar_lea.vmem [#allocation2], 961
      %v1920 = vld [vmem:[%s1919] ss:$2 sm:$0xff]
      %s1921 = scalar_lea.vmem [#allocation2], 977
      %v1922 = vld [vmem:[%s1921] ss:$2 sm:$0xff]
      %s1923 = scalar_lea.vmem [#allocation2], 993
      %v1924 = vld [vmem:[%s1923] ss:$2 sm:$0xff]
      %s1925 = scalar_lea.vmem [#allocation2], 1009
      %v1926 = vld [vmem:[%s1925] ss:$2 sm:$0xff]
      %v1927 = vmax.f32 %v1672, %v1800
      %v1928 = vmax.f32 %v1674, %v1802
      %v1929 = vmax.f32 %v1676, %v1804
      %v1930 = vmax.f32 %v1678, %v1806
      %v1931 = vmax.f32 %v1680, %v1808
      %v1932 = vmax.f32 %v1682, %v1810
      %v1933 = vmax.f32 %v1684, %v1812
      %v1934 = vmax.f32 %v1686, %v1814
      %v1935 = vmax.f32 %v1688, %v1816
      %v1936 = vmax.f32 %v1690, %v1818
      %v1937 = vmax.f32 %v1692, %v1820
      %v1938 = vmax.f32 %v1694, %v1822
      %v1939 = vmax.f32 %v1696, %v1824
      %v1940 = vmax.f32 %v1698, %v1826
      %v1941 = vmax.f32 %v1700, %v1828
      %v1942 = vmax.f32 %v1702, %v1830
      %v1943 = vmax.f32 %v1704, %v1832
      %v1944 = vmax.f32 %v1706, %v1834
      %v1945 = vmax.f32 %v1708, %v1836
      %v1946 = vmax.f32 %v1710, %v1838
      %v1947 = vmax.f32 %v1712, %v1840
      %v1948 = vmax.f32 %v1714, %v1842
      %v1949 = vmax.f32 %v1716, %v1844
      %v1950 = vmax.f32 %v1718, %v1846
      %v1951 = vmax.f32 %v1720, %v1848
      %v1952 = vmax.f32 %v1722, %v1850
      %v1953 = vmax.f32 %v1724, %v1852
      %v1954 = vmax.f32 %v1726, %v1854
      %v1955 = vmax.f32 %v1728, %v1856
      %v1956 = vmax.f32 %v1730, %v1858
      %v1957 = vmax.f32 %v1732, %v1860
      %v1958 = vmax.f32 %v1734, %v1862
      %v1959 = vmax.f32 %v1736, %v1864
      %v1960 = vmax.f32 %v1738, %v1866
      %v1961 = vmax.f32 %v1740, %v1868
      %v1962 = vmax.f32 %v1742, %v1870
      %v1963 = vmax.f32 %v1744, %v1872
      %v1964 = vmax.f32 %v1746, %v1874
      %v1965 = vmax.f32 %v1748, %v1876
      %v1966 = vmax.f32 %v1750, %v1878
      %v1967 = vmax.f32 %v1752, %v1880
      %v1968 = vmax.f32 %v1754, %v1882
      %v1969 = vmax.f32 %v1756, %v1884
      %v1970 = vmax.f32 %v1758, %v1886
      %v1971 = vmax.f32 %v1760, %v1888
      %v1972 = vmax.f32 %v1762, %v1890
      %v1973 = vmax.f32 %v1764, %v1892
      %v1974 = vmax.f32 %v1766, %v1894
      %v1975 = vmax.f32 %v1768, %v1896
      %v1976 = vmax.f32 %v1770, %v1898
      %v1977 = vmax.f32 %v1772, %v1900
      %v1978 = vmax.f32 %v1774, %v1902
      %v1979 = vmax.f32 %v1776, %v1904
      %v1980 = vmax.f32 %v1778, %v1906
      %v1981 = vmax.f32 %v1780, %v1908
      %v1982 = vmax.f32 %v1782, %v1910
      %v1983 = vmax.f32 %v1784, %v1912
      %v1984 = vmax.f32 %v1786, %v1914
      %v1985 = vmax.f32 %v1788, %v1916
      %v1986 = vmax.f32 %v1790, %v1918
      %v1987 = vmax.f32 %v1792, %v1920
      %v1988 = vmax.f32 %v1794, %v1922
      %v1989 = vmax.f32 %v1796, %v1924
      %v1990 = vmax.f32 %v1798, %v1926
      %v1991 = vsel %vm1543, %v1927, -inf
      %v1992 = vsel %vm1543, %v1929, -inf
      %v1993 = vmax.f32 %v1991, %v1992
      %v1994 = vsel %vm1543, %v1928, -inf
      %v1995 = vsel %vm1543, %v1930, -inf
      %v1996 = vmax.f32 %v1994, %v1995
      %v1997 = vsel %vm1543, %v1931, -inf
      %v1998 = vsel %vm1543, %v1933, -inf
      %v1999 = vmax.f32 %v1997, %v1998
      %v2000 = vsel %vm1543, %v1932, -inf
      %v2001 = vsel %vm1543, %v1934, -inf
      %v2002 = vmax.f32 %v2000, %v2001
      %v2003 = vsel %vm1543, %v1935, -inf
      %v2004 = vsel %vm1543, %v1937, -inf
      %v2005 = vmax.f32 %v2003, %v2004
      %v2006 = vsel %vm1543, %v1936, -inf
      %v2007 = vsel %vm1543, %v1938, -inf
      %v2008 = vmax.f32 %v2006, %v2007
      %v2009 = vsel %vm1543, %v1939, -inf
      %v2010 = vsel %vm1543, %v1941, -inf
      %v2011 = vmax.f32 %v2009, %v2010
      %v2012 = vsel %vm1543, %v1940, -inf
      %v2013 = vsel %vm1543, %v1942, -inf
      %v2014 = vmax.f32 %v2012, %v2013
      %v2015 = vsel %vm1543, %v1943, -inf
      %v2016 = vsel %vm1543, %v1945, -inf
      %v2017 = vmax.f32 %v2015, %v2016
      %v2018 = vsel %vm1543, %v1944, -inf
      %v2019 = vsel %vm1543, %v1946, -inf
      %v2020 = vmax.f32 %v2018, %v2019
      %v2021 = vsel %vm1543, %v1947, -inf
      %v2022 = vsel %vm1543, %v1949, -inf
      %v2023 = vmax.f32 %v2021, %v2022
      %v2024 = vsel %vm1543, %v1948, -inf
      %v2025 = vsel %vm1543, %v1950, -inf
      %v2026 = vmax.f32 %v2024, %v2025
      %v2027 = vsel %vm1543, %v1951, -inf
      %v2028 = vsel %vm1543, %v1953, -inf
      %v2029 = vmax.f32 %v2027, %v2028
      %v2030 = vsel %vm1543, %v1952, -inf
      %v2031 = vsel %vm1543, %v1954, -inf
      %v2032 = vmax.f32 %v2030, %v2031
      %v2033 = vsel %vm1543, %v1955, -inf
      %v2034 = vsel %vm1543, %v1957, -inf
      %v2035 = vmax.f32 %v2033, %v2034
      %v2036 = vsel %vm1543, %v1956, -inf
      %v2037 = vsel %vm1543, %v1958, -inf
      %v2038 = vmax.f32 %v2036, %v2037
      %v2039 = vsel %vm1543, %v1959, -inf
      %v2040 = vsel %vm1543, %v1961, -inf
      %v2041 = vmax.f32 %v2039, %v2040
      %v2042 = vsel %vm1543, %v1960, -inf
      %v2043 = vsel %vm1543, %v1962, -inf
      %v2044 = vmax.f32 %v2042, %v2043
      %v2045 = vsel %vm1543, %v1963, -inf
      %v2046 = vsel %vm1543, %v1965, -inf
      %v2047 = vmax.f32 %v2045, %v2046
      %v2048 = vsel %vm1543, %v1964, -inf
      %v2049 = vsel %vm1543, %v1966, -inf
      %v2050 = vmax.f32 %v2048, %v2049
      %v2051 = vsel %vm1543, %v1967, -inf
      %v2052 = vsel %vm1543, %v1969, -inf
      %v2053 = vmax.f32 %v2051, %v2052
      %v2054 = vsel %vm1543, %v1968, -inf
      %v2055 = vsel %vm1543, %v1970, -inf
      %v2056 = vmax.f32 %v2054, %v2055
      %v2057 = vsel %vm1543, %v1971, -inf
      %v2058 = vsel %vm1543, %v1973, -inf
      %v2059 = vmax.f32 %v2057, %v2058
      %v2060 = vsel %vm1543, %v1972, -inf
      %v2061 = vsel %vm1543, %v1974, -inf
      %v2062 = vmax.f32 %v2060, %v2061
      %v2063 = vsel %vm1543, %v1975, -inf
      %v2064 = vsel %vm1543, %v1977, -inf
      %v2065 = vmax.f32 %v2063, %v2064
      %v2066 = vsel %vm1543, %v1976, -inf
      %v2067 = vsel %vm1543, %v1978, -inf
      %v2068 = vmax.f32 %v2066, %v2067
      %v2069 = vsel %vm1543, %v1979, -inf
      %v2070 = vsel %vm1543, %v1981, -inf
      %v2071 = vmax.f32 %v2069, %v2070
      %v2072 = vsel %vm1543, %v1980, -inf
      %v2073 = vsel %vm1543, %v1982, -inf
      %v2074 = vmax.f32 %v2072, %v2073
      %v2075 = vsel %vm1543, %v1983, -inf
      %v2076 = vsel %vm1543, %v1985, -inf
      %v2077 = vmax.f32 %v2075, %v2076
      %v2078 = vsel %vm1543, %v1984, -inf
      %v2079 = vsel %vm1543, %v1986, -inf
      %v2080 = vmax.f32 %v2078, %v2079
      %v2081 = vsel %vm1543, %v1987, -inf
      %v2082 = vsel %vm1543, %v1989, -inf
      %v2083 = vmax.f32 %v2081, %v2082
      %v2084 = vsel %vm1543, %v1988, -inf
      %v2085 = vsel %vm1543, %v1990, -inf
      %v2086 = vmax.f32 %v2084, %v2085
      %2087 = vst.msk [vmem:[%s224] sm:$0xff] %vm1543, %v1993
      %2088 = vst.msk [vmem:[%s224 + $0x8] sm:$0xff] %vm1543, %v1996
      %2089 = vst.msk [vmem:[%s224 + $0x10] sm:$0xff] %vm1543, %v1999
      %2090 = vst.msk [vmem:[%s224 + $0x18] sm:$0xff] %vm1543, %v2002
      %2091 = vst.msk [vmem:[%s224 + $0x20] sm:$0xff] %vm1543, %v2005
      %2092 = vst.msk [vmem:[%s224 + $0x28] sm:$0xff] %vm1543, %v2008
      %2093 = vst.msk [vmem:[%s224 + $0x30] sm:$0xff] %vm1543, %v2011
      %2094 = vst.msk [vmem:[%s224 + $0x38] sm:$0xff] %vm1543, %v2014
      %2095 = vst.msk [vmem:[%s224 + $0x40] sm:$0xff] %vm1543, %v2017
      %2096 = vst.msk [vmem:[%s224 + $0x48] sm:$0xff] %vm1543, %v2020
      %2097 = vst.msk [vmem:[%s224 + $0x50] sm:$0xff] %vm1543, %v2023
      %2098 = vst.msk [vmem:[%s224 + $0x58] sm:$0xff] %vm1543, %v2026
      %2099 = vst.msk [vmem:[%s224 + $0x60] sm:$0xff] %vm1543, %v2029
      %2100 = vst.msk [vmem:[%s224 + $0x68] sm:$0xff] %vm1543, %v2032
      %2101 = vst.msk [vmem:[%s224 + $0x70] sm:$0xff] %vm1543, %v2035
      %2102 = vst.msk [vmem:[%s224 + $0x78] sm:$0xff] %vm1543, %v2038
      %2103 = vst.msk [vmem:[%s224 + $0x80] sm:$0xff] %vm1543, %v2041
      %2104 = vst.msk [vmem:[%s224 + $0x88] sm:$0xff] %vm1543, %v2044
      %2105 = vst.msk [vmem:[%s224 + $0x90] sm:$0xff] %vm1543, %v2047
      %2106 = vst.msk [vmem:[%s224 + $0x98] sm:$0xff] %vm1543, %v2050
      %2107 = vst.msk [vmem:[%s224 + $0xa0] sm:$0xff] %vm1543, %v2053
      %2108 = vst.msk [vmem:[%s224 + $0xa8] sm:$0xff] %vm1543, %v2056
      %2109 = vst.msk [vmem:[%s224 + $0xb0] sm:$0xff] %vm1543, %v2059
      %2110 = vst.msk [vmem:[%s224 + $0xb8] sm:$0xff] %vm1543, %v2062
      %2111 = vst.msk [vmem:[%s224 + $0xc0] sm:$0xff] %vm1543, %v2065
      %2112 = vst.msk [vmem:[%s224 + $0xc8] sm:$0xff] %vm1543, %v2068
      %2113 = vst.msk [vmem:[%s224 + $0xd0] sm:$0xff] %vm1543, %v2071
      %2114 = vst.msk [vmem:[%s224 + $0xd8] sm:$0xff] %vm1543, %v2074
      %2115 = vst.msk [vmem:[%s224 + $0xe0] sm:$0xff] %vm1543, %v2077
      %2116 = vst.msk [vmem:[%s224 + $0xe8] sm:$0xff] %vm1543, %v2080
      %2117 = vst.msk [vmem:[%s224 + $0xf0] sm:$0xff] %vm1543, %v2083
      %2118 = vst.msk [vmem:[%s224 + $0xf8] sm:$0xff] %vm1543, %v2086
      %p2119 = scmp.lt.s32.totalorder %s16, 1
      %s2120 = scalar_select %p2119, %s16, 1
      %s2121 = smul.addr %s2120, 32
      %s2122 = smul.addr %s2121, 8
      %s2123 = scalar_lea.vmem %s5, %s2122
      // Predicated region
      $region41: #{cnn_forward.3} parent=39 // pred_check
        %p2124 = pneg %p144
      $region42: #{cnn_forward.3} parent=39 // pred_check_branch
        %2126 = sbr.rel (%p2124) target = $region44
      $region43: #{cnn_forward.3} parent=39 // pred_region
        _
      $region44: #{cnn_forward.3} parent=39 // pred_fallthru
        _
    $region40: #{cnn_forward.3} parent=5 // pred_fallthru
      _
    %p2127 = scmp.le.s32.totalorder 2, %s11
    // Predicated region
    $region45: #{cnn_forward.3} parent=5 // pred_check
      %p2128 = pneg %p2127
    $region46: #{cnn_forward.3} parent=5 // pred_check_branch
      %2130 = sbr.rel (%p2128) target = $region48
    $region47: #{cnn_forward.3} parent=5 // pred_region
      %s2131 = ssub.s32 %s11, 2
      // Predicated region
      $region49: #{cnn_forward.3} parent=47 // pred_check
        %p2132 = pneg %p150
      $region50: #{cnn_forward.3} parent=47 // pred_check_branch
        %2134 = sbr.rel (%p2132) target = $region52
      $region51: #{cnn_forward.3} parent=47 // pred_region
        %p2135 = scmp.lt.s32.totalorder %s17, 1
        %s2136 = scalar_select %p2135, %s17, 1
        %s2137 = smul.addr %s2136, 32
        %s2138 = smul.addr %s2137, 8
        %s2139 = scalar_lea.vmem %s5, %s2138
      $region52: #{cnn_forward.3} parent=47 // pred_fallthru
        _
    $region48: #{cnn_forward.3} parent=5 // pred_fallthru
      _
  $region6: #{cnn_forward.3} parent=0 // loop_footer
    %s15 = sadd.s32 1, %s11
  $region7: #{cnn_forward.3} parent=0 // loop_footer_branch
    %10 = sbr.rel target = $region3
  $region8: #{cnn_forward.3} parent=0 // loop_exit
    _

// kernel: cnn_forward.4
$region0: #{cnn_forward.4}
  #allocation0 [shape = 'u32[]', space=smem, size = 0x4, offset = 0x4, fixed_abs, tag = 'smem constant byte address 0x4 - core index']
  #allocation1 [shape = 'u32[72,128]{1,0:T(1,128)}', space=vmem, size = 0x9000, scoped, tag = 'internal scratch']
  #allocation2 [shape = 'f32[1,16,16,64]{3,2,1,0:T(8,128)}', space=vmem, size = 0x20000, scoped, tag = 'scratch operand']
  %s0 = inlined_call_operand.vmem [shape: f32[2,16,16,288], index: 0, kind: input, shape index: {}]
  %s1 = inlined_call_operand.vmem [shape: f32[288,64], index: 1, kind: input, shape index: {}]
  %s2 = inlined_call_operand.vmem [shape: f32[1,64], index: 2, kind: input, shape index: {}]
  %s3 = inlined_call_operand.vmem [shape: f32[1,64], index: 3, kind: input, shape index: {}]
  %s4 = inlined_call_operand.vmem [shape: f32[1,64], index: 4, kind: input, shape index: {}]
  %s5 = inlined_call_operand.vmem [shape: f32[2,8,8,64], index: 5, kind: output, shape index: {}]
  %s6 = sld [smem:[#allocation0]]
  $region53: #{cnn_forward.4} parent=0
    _
  %s8 = ssub.s32 1, %s6
  %s9 = scalar_select 0, %s8, %s6
  loop: start=0, step=1, limit=4
  $region2: #{cnn_forward.4} parent=0 // loop_pre_header
    _
  $region3: #{cnn_forward.4} parent=0 // loop_header
    %s11 = sphi 0, %s15
    %p12 = scmp.ge.s32.totalorder %s11, 4
    %s21 = sphi 0, %s23
    %s24 = sphi 0, %s21
    %s25 = sphi 0, %s24
    %s41 = sphi 0, %s25
    %s45 = sphi 0, %s45
    %s47 = sphi 0, %s45
    %s48 = sphi 0, %s47
    %s62 = sphi 0, %s48
    %s66 = sphi 0, %s66
    %s68 = sphi 0, %s66
    %s69 = sphi 0, %s68
    %s83 = sphi 0, %s69
    %s87 = sphi 0, %s87
    %s89 = sphi 0, %s87
    %s90 = sphi 0, %s89
    %s104 = sphi 0, %s90
    %s108 = sphi 0, %s108
    %s110 = sphi 0, %s108
    %s111 = sphi 0, %s110
    %s125 = sphi 0, %s111
    %s131 = sphi 0, %s133
    %s134 = sphi 0, %s131
    %s135 = sphi 0, %s134
    %s151 = sphi 0, %s135
  $region4: #{cnn_forward.4} parent=0 // loop_header_branch
    %14 = sbr.rel (%p12) target = $region8
  $region5: #{cnn_forward.4} parent=0 // loop_body
    %s16 = ssub.s32 %s11, 1
    %s17 = ssub.s32 %s11, 2
    %s18 = sadd.s32 %s11, 1
    %s19 = ssub.s32 %s11, %s18
    %p20 = scmp.eq.s32.totalorder %s19, 0
    %s22 = sadd.s32 %s21, 1
    %s23 = scalar_select %p20, %s21, %s22
    %p26 = pneg %p20
    %p27 = scmp.eq.s32.totalorder %s11, 1
    %p28 = por %p26, %p27
    %p29 = scmp.ne.s32.totalorder %s21, %s24
    %p30 = scmp.eq.s32.totalorder %s11, 0
    %p31 = por %p29, %p30
    %p32 = scmp.ne.s32.totalorder %s21, %s24
    %p33 = scmp.eq.s32.totalorder %s16, 1
    %p34 = por %p32, %p33
    %p35 = scmp.ne.s32.totalorder %s24, %s25
    %p36 = scmp.eq.s32.totalorder %s16, 0
    %p37 = por %p35, %p36
    %p38 = scmp.ne.s32.totalorder %s24, %s25
    %p39 = scmp.eq.s32.totalorder %s17, 1
    %p40 = por %p38, %p39
    %p42 = scmp.ne.s32.totalorder %s25, %s41
    %p43 = scmp.eq.s32.totalorder %s17, 0
    %p44 = por %p42, %p43
    %s46 = sadd.s32 %s45, 1
    %p49 = scmp.eq.s32.totalorder %s11, 1
    %p50 = scmp.ne.s32.totalorder %s45, %s47
    %p51 = scmp.eq.s32.totalorder %s11, 0
    %p52 = por %p50, %p51
    %p53 = scmp.ne.s32.totalorder %s45, %s47
    %p54 = scmp.eq.s32.totalorder %s16, 1
    %p55 = por %p53, %p54
    %p56 = scmp.ne.s32.totalorder %s47, %s48
    %p57 = scmp.eq.s32.totalorder %s16, 0
    %p58 = por %p56, %p57
    %p59 = scmp.ne.s32.totalorder %s47, %s48
    %p60 = scmp.eq.s32.totalorder %s17, 1
    %p61 = por %p59, %p60
    %p63 = scmp.ne.s32.totalorder %s48, %s62
    %p64 = scmp.eq.s32.totalorder %s17, 0
    %p65 = por %p63, %p64
    %s67 = sadd.s32 %s66, 1
    %p70 = scmp.eq.s32.totalorder %s11, 1
    %p71 = scmp.ne.s32.totalorder %s66, %s68
    %p72 = scmp.eq.s32.totalorder %s11, 0
    %p73 = por %p71, %p72
    %p74 = scmp.ne.s32.totalorder %s66, %s68
    %p75 = scmp.eq.s32.totalorder %s16, 1
    %p76 = por %p74, %p75
    %p77 = scmp.ne.s32.totalorder %s68, %s69
    %p78 = scmp.eq.s32.totalorder %s16, 0
    %p79 = por %p77, %p78
    %p80 = scmp.ne.s32.totalorder %s68, %s69
    %p81 = scmp.eq.s32.totalorder %s17, 1
    %p82 = por %p80, %p81
    %p84 = scmp.ne.s32.totalorder %s69, %s83
    %p85 = scmp.eq.s32.totalorder %s17, 0
    %p86 = por %p84, %p85
    %s88 = sadd.s32 %s87, 1
    %p91 = scmp.eq.s32.totalorder %s11, 1
    %p92 = scmp.ne.s32.totalorder %s87, %s89
    %p93 = scmp.eq.s32.totalorder %s11, 0
    %p94 = por %p92, %p93
    %p95 = scmp.ne.s32.totalorder %s87, %s89
    %p96 = scmp.eq.s32.totalorder %s16, 1
    %p97 = por %p95, %p96
    %p98 = scmp.ne.s32.totalorder %s89, %s90
    %p99 = scmp.eq.s32.totalorder %s16, 0
    %p100 = por %p98, %p99
    %p101 = scmp.ne.s32.totalorder %s89, %s90
    %p102 = scmp.eq.s32.totalorder %s17, 1
    %p103 = por %p101, %p102
    %p105 = scmp.ne.s32.totalorder %s90, %s104
    %p106 = scmp.eq.s32.totalorder %s17, 0
    %p107 = por %p105, %p106
    %s109 = sadd.s32 %s108, 1
    %p112 = scmp.eq.s32.totalorder %s11, 1
    %p113 = scmp.ne.s32.totalorder %s108, %s110
    %p114 = scmp.eq.s32.totalorder %s11, 0
    %p115 = por %p113, %p114
    %p116 = scmp.ne.s32.totalorder %s108, %s110
    %p117 = scmp.eq.s32.totalorder %s16, 1
    %p118 = por %p116, %p117
    %p119 = scmp.ne.s32.totalorder %s110, %s111
    %p120 = scmp.eq.s32.totalorder %s16, 0
    %p121 = por %p119, %p120
    %p122 = scmp.ne.s32.totalorder %s110, %s111
    %p123 = scmp.eq.s32.totalorder %s17, 1
    %p124 = por %p122, %p123
    %p126 = scmp.ne.s32.totalorder %s111, %s125
    %p127 = scmp.eq.s32.totalorder %s17, 0
    %p128 = por %p126, %p127
    %s129 = ssub.s32 %s11, %s18
    %p130 = scmp.eq.s32.totalorder %s129, 0
    %s132 = sadd.s32 %s131, 1
    %s133 = scalar_select %p130, %s131, %s132
    %p136 = pneg %p130
    %p137 = scmp.eq.s32.totalorder %s11, 1
    %p138 = por %p136, %p137
    %p139 = scmp.ne.s32.totalorder %s131, %s134
    %p140 = scmp.eq.s32.totalorder %s11, 0
    %p141 = por %p139, %p140
    %p142 = scmp.ne.s32.totalorder %s131, %s134
    %p143 = scmp.eq.s32.totalorder %s16, 1
    %p144 = por %p142, %p143
    %p145 = scmp.ne.s32.totalorder %s134, %s135
    %p146 = scmp.eq.s32.totalorder %s16, 0
    %p147 = por %p145, %p146
    %p148 = scmp.ne.s32.totalorder %s134, %s135
    %p149 = scmp.eq.s32.totalorder %s17, 1
    %p150 = por %p148, %p149
    %p152 = scmp.ne.s32.totalorder %s135, %s151
    %p153 = scmp.eq.s32.totalorder %s17, 0
    %p154 = por %p152, %p153
    %p155 = scmp.le.s32.totalorder 1, %s11
    %p156 = scmp.lt.s32.totalorder %s11, 3
    %p157 = pnand %p155, %p156
    %p158 = pneg %p157
    // Predicated region
    $region9: #{cnn_forward.4} parent=5 // pred_check
      _
    $region10: #{cnn_forward.4} parent=5 // pred_check_branch
      %160 = sbr.rel (%p157) target = $region12
    $region11: #{cnn_forward.4} parent=5 // pred_region
      %s161 = ssub.s32 %s11, 1
      // Predicated region
      $region13: #{cnn_forward.4} parent=11 // pred_check
        %p162 = pneg %p58
      $region14: #{cnn_forward.4} parent=11 // pred_check_branch
        %164 = sbr.rel (%p162) target = $region16
      $region15: #{cnn_forward.4} parent=11 // pred_region
        _
      $region16: #{cnn_forward.4} parent=11 // pred_fallthru
        _
      // Predicated region
      $region17: #{cnn_forward.4} parent=11 // pred_check
        %p165 = pneg %p79
      $region18: #{cnn_forward.4} parent=11 // pred_check_branch
        %167 = sbr.rel (%p165) target = $region20
      $region19: #{cnn_forward.4} parent=11 // pred_region
        _
      $region20: #{cnn_forward.4} parent=11 // pred_fallthru
        _
      // Predicated region
      $region21: #{cnn_forward.4} parent=11 // pred_check
        %p168 = pneg %p100
      $region22: #{cnn_forward.4} parent=11 // pred_check_branch
        %170 = sbr.rel (%p168) target = $region24
      $region23: #{cnn_forward.4} parent=11 // pred_region
        _
      $region24: #{cnn_forward.4} parent=11 // pred_fallthru
        _
      // Predicated region
      $region25: #{cnn_forward.4} parent=11 // pred_check
        %p171 = pneg %p121
      $region26: #{cnn_forward.4} parent=11 // pred_check_branch
        %173 = sbr.rel (%p171) target = $region28
      $region27: #{cnn_forward.4} parent=11 // pred_region
        _
      $region28: #{cnn_forward.4} parent=11 // pred_fallthru
        _
    $region12: #{cnn_forward.4} parent=5 // pred_fallthru
      _
    %p174 = scmp.lt.s32.totalorder %s11, 2
    // Predicated region
    $region29: #{cnn_forward.4} parent=5 // pred_check
      %p175 = pneg %p174
    $region30: #{cnn_forward.4} parent=5 // pred_check_branch
      %177 = sbr.rel (%p175) target = $region32
    $region31: #{cnn_forward.4} parent=5 // pred_region
      // Predicated region
      $region33: #{cnn_forward.4} parent=31 // pred_check
        %p178 = pneg %p31
      $region34: #{cnn_forward.4} parent=31 // pred_check_branch
        %180 = sbr.rel (%p178) target = $region36
      $region35: #{cnn_forward.4} parent=31 // pred_region
        %p181 = scmp.lt.s32.totalorder %s11, 1
        %s182 = scalar_select %p181, %s11, 1
        %s183 = smul.addr %s182, 96
        %s184 = smul.addr %s183, 8
        %s185 = scalar_lea.vmem %s0, %s184
      $region36: #{cnn_forward.4} parent=31 // pred_fallthru
        _
    $region32: #{cnn_forward.4} parent=5 // pred_fallthru
      _
    %p186 = scmp.le.s32.totalorder 1, %s11
    %p187 = scmp.lt.s32.totalorder %s11, 3
    %p188 = pnand %p186, %p187
    %p189 = pneg %p188
    // Predicated region
    $region37: #{cnn_forward.4} parent=5 // pred_check
      _
    $region38: #{cnn_forward.4} parent=5 // pred_check_branch
      %191 = sbr.rel (%p188) target = $region40
    $region39: #{cnn_forward.4} parent=5 // pred_region
      %s192 = ssub.s32 %s11, 1
      %p193 = scmp.lt.s32.totalorder %s16, 1
      %s194 = scalar_select %p193, %s16, 1
      %s195 = smul.addr %s194, 96
      %s196 = smul.addr %s195, 8
      %s197 = scalar_lea.vmem %s0, %s196
      %p198 = pneg %p37
      %p199 = pneg %p34
      %p200 = pneg %p58
      %p201 = pneg %p55
      %p202 = pneg %p79
      %p203 = pneg %p76
      %p204 = pneg %p100
      %p205 = pneg %p97
      %p206 = pneg %p121
      %p207 = pneg %p118
      %p208 = pneg %p147
      %p209 = pneg %p144
      %p210 = scmp.lt.s32.totalorder %s16, 1
      %s211 = scalar_select %p210, %s16, 1
      %s212 = smul.addr %s211, 8
      %s213 = smul.addr %s212, 8
      %s214 = scalar_lea.vmem %s5, %s213
      %p215 = scmp.lt.s32.totalorder %s16, 1
      %s216 = scalar_select %p215, %s16, 1
      %s217 = smul.addr %s216, 96
      %s218 = smul.addr %s217, 8
      %s219 = scalar_lea.vmem %s0, %s218
      %p220 = scmp.lt.s32.totalorder %s16, 1
      %s221 = scalar_select %p220, %s16, 1
      %s222 = smul.addr %s221, 8
      %s223 = smul.addr %s222, 8
      %s224 = scalar_lea.vmem %s5, %s223
      %v225 = vld [vmem:[%s219] sm:$0xff]
      %v226 = vld [vmem:[%s219 + $0x8] sm:$0xff]
      %v227 = vld [vmem:[%s219 + $0x10] sm:$0xff]
      %v228 = vld [vmem:[%s219 + $0x18] sm:$0xff]
      %v229 = vld [vmem:[%s219 + $0x20] sm:$0xff]
      %v230 = vld [vmem:[%s219 + $0x28] sm:$0xff]
      %v231 = vld [vmem:[%s219 + $0x30] sm:$0xff]
      %v232 = vld [vmem:[%s219 + $0x38] sm:$0xff]
      %v233 = vld [vmem:[%s219 + $0x40] sm:$0xff]
      %v234 = vld [vmem:[%s219 + $0x48] sm:$0xff]
      %v235 = vld [vmem:[%s219 + $0x50] sm:$0xff]
      %v236 = vld [vmem:[%s219 + $0x58] sm:$0xff]
      %v237 = vld [vmem:[%s219 + $0x60] sm:$0xff]
      %v238 = vld [vmem:[%s219 + $0x68] sm:$0xff]
      %v239 = vld [vmem:[%s219 + $0x70] sm:$0xff]
      %v240 = vld [vmem:[%s219 + $0x78] sm:$0xff]
      %v241 = vld [vmem:[%s219 + $0x80] sm:$0xff]
      %v242 = vld [vmem:[%s219 + $0x88] sm:$0xff]
      %v243 = vld [vmem:[%s219 + $0x90] sm:$0xff]
      %v244 = vld [vmem:[%s219 + $0x98] sm:$0xff]
      %v245 = vld [vmem:[%s219 + $0xa0] sm:$0xff]
      %v246 = vld [vmem:[%s219 + $0xa8] sm:$0xff]
      %v247 = vld [vmem:[%s219 + $0xb0] sm:$0xff]
      %v248 = vld [vmem:[%s219 + $0xb8] sm:$0xff]
      %v249 = vld [vmem:[%s219 + $0xc0] sm:$0xff]
      %v250 = vld [vmem:[%s219 + $0xc8] sm:$0xff]
      %v251 = vld [vmem:[%s219 + $0xd0] sm:$0xff]
      %v252 = vld [vmem:[%s219 + $0xd8] sm:$0xff]
      %v253 = vld [vmem:[%s219 + $0xe0] sm:$0xff]
      %v254 = vld [vmem:[%s219 + $0xe8] sm:$0xff]
      %v255 = vld [vmem:[%s219 + $0xf0] sm:$0xff]
      %v256 = vld [vmem:[%s219 + $0xf8] sm:$0xff]
      %v257 = vld [vmem:[%s219 + $0x100] sm:$0xff]
      %v258 = vld [vmem:[%s219 + $0x108] sm:$0xff]
      %v259 = vld [vmem:[%s219 + $0x110] sm:$0xff]
      %v260 = vld [vmem:[%s219 + $0x118] sm:$0xff]
      %v261 = vld [vmem:[%s219 + $0x120] sm:$0xff]
      %v262 = vld [vmem:[%s219 + $0x128] sm:$0xff]
      %v263 = vld [vmem:[%s219 + $0x130] sm:$0xff]
      %v264 = vld [vmem:[%s219 + $0x138] sm:$0xff]
      %v265 = vld [vmem:[%s219 + $0x140] sm:$0xff]
      %v266 = vld [vmem:[%s219 + $0x148] sm:$0xff]
      %v267 = vld [vmem:[%s219 + $0x150] sm:$0xff]
      %v268 = vld [vmem:[%s219 + $0x158] sm:$0xff]
      %v269 = vld [vmem:[%s219 + $0x160] sm:$0xff]
      %v270 = vld [vmem:[%s219 + $0x168] sm:$0xff]
      %v271 = vld [vmem:[%s219 + $0x170] sm:$0xff]
      %v272 = vld [vmem:[%s219 + $0x178] sm:$0xff]
      %v273 = vld [vmem:[%s219 + $0x180] sm:$0xff]
      %v274 = vld [vmem:[%s219 + $0x188] sm:$0xff]
      %v275 = vld [vmem:[%s219 + $0x190] sm:$0xff]
      %v276 = vld [vmem:[%s219 + $0x198] sm:$0xff]
      %v277 = vld [vmem:[%s219 + $0x1a0] sm:$0xff]
      %v278 = vld [vmem:[%s219 + $0x1a8] sm:$0xff]
      %v279 = vld [vmem:[%s219 + $0x1b0] sm:$0xff]
      %v280 = vld [vmem:[%s219 + $0x1b8] sm:$0xff]
      %v281 = vld [vmem:[%s219 + $0x1c0] sm:$0xff]
      %v282 = vld [vmem:[%s219 + $0x1c8] sm:$0xff]
      %v283 = vld [vmem:[%s219 + $0x1d0] sm:$0xff]
      %v284 = vld [vmem:[%s219 + $0x1d8] sm:$0xff]
      %v285 = vld [vmem:[%s219 + $0x1e0] sm:$0xff]
      %v286 = vld [vmem:[%s219 + $0x1e8] sm:$0xff]
      %v287 = vld [vmem:[%s219 + $0x1f0] sm:$0xff]
      %v288 = vld [vmem:[%s219 + $0x1f8] sm:$0xff]
      %v289 = vld [vmem:[%s219 + $0x200] sm:$0xff]
      %v290 = vld [vmem:[%s219 + $0x208] sm:$0xff]
      %v291 = vld [vmem:[%s219 + $0x210] sm:$0xff]
      %v292 = vld [vmem:[%s219 + $0x218] sm:$0xff]
      %v293 = vld [vmem:[%s219 + $0x220] sm:$0xff]
      %v294 = vld [vmem:[%s219 + $0x228] sm:$0xff]
      %v295 = vld [vmem:[%s219 + $0x230] sm:$0xff]
      %v296 = vld [vmem:[%s219 + $0x238] sm:$0xff]
      %v297 = vld [vmem:[%s219 + $0x240] sm:$0xff]
      %v298 = vld [vmem:[%s219 + $0x248] sm:$0xff]
      %v299 = vld [vmem:[%s219 + $0x250] sm:$0xff]
      %v300 = vld [vmem:[%s219 + $0x258] sm:$0xff]
      %v301 = vld [vmem:[%s219 + $0x260] sm:$0xff]
      %v302 = vld [vmem:[%s219 + $0x268] sm:$0xff]
      %v303 = vld [vmem:[%s219 + $0x270] sm:$0xff]
      %v304 = vld [vmem:[%s219 + $0x278] sm:$0xff]
      %v305 = vld [vmem:[%s219 + $0x280] sm:$0xff]
      %v306 = vld [vmem:[%s219 + $0x288] sm:$0xff]
      %v307 = vld [vmem:[%s219 + $0x290] sm:$0xff]
      %v308 = vld [vmem:[%s219 + $0x298] sm:$0xff]
      %v309 = vld [vmem:[%s219 + $0x2a0] sm:$0xff]
      %v310 = vld [vmem:[%s219 + $0x2a8] sm:$0xff]
      %v311 = vld [vmem:[%s219 + $0x2b0] sm:$0xff]
      %v312 = vld [vmem:[%s219 + $0x2b8] sm:$0xff]
      %v313 = vld [vmem:[%s219 + $0x2c0] sm:$0xff]
      %v314 = vld [vmem:[%s219 + $0x2c8] sm:$0xff]
      %v315 = vld [vmem:[%s219 + $0x2d0] sm:$0xff]
      %v316 = vld [vmem:[%s219 + $0x2d8] sm:$0xff]
      %v317 = vld [vmem:[%s219 + $0x2e0] sm:$0xff]
      %v318 = vld [vmem:[%s219 + $0x2e8] sm:$0xff]
      %v319 = vld [vmem:[%s219 + $0x2f0] sm:$0xff]
      %v320 = vld [vmem:[%s219 + $0x2f8] sm:$0xff]
      %v321 = vld [vmem:[%s1] sm:$0xff]
      %v322 = vld [vmem:[%s1 + $0x8] sm:$0xff]
      %v323 = vld [vmem:[%s1 + $0x10] sm:$0xff]
      %v324 = vld [vmem:[%s1 + $0x18] sm:$0xff]
      %v325 = vld [vmem:[%s1 + $0x20] sm:$0xff]
      %v326 = vld [vmem:[%s1 + $0x28] sm:$0xff]
      %v327 = vld [vmem:[%s1 + $0x30] sm:$0xff]
      %v328 = vld [vmem:[%s1 + $0x38] sm:$0xff]
      %v329 = vld [vmem:[%s1 + $0x40] sm:$0xff]
      %v330 = vld [vmem:[%s1 + $0x48] sm:$0xff]
      %v331 = vld [vmem:[%s1 + $0x50] sm:$0xff]
      %v332 = vld [vmem:[%s1 + $0x58] sm:$0xff]
      %v333 = vld [vmem:[%s1 + $0x60] sm:$0xff]
      %v334 = vld [vmem:[%s1 + $0x68] sm:$0xff]
      %v335 = vld [vmem:[%s1 + $0x70] sm:$0xff]
      %v336 = vld [vmem:[%s1 + $0x78] sm:$0xff]
      %v337 = vld [vmem:[%s1 + $0x80] sm:$0xff]
      %v338 = vld [vmem:[%s1 + $0x88] sm:$0xff]
      %v339 = vld [vmem:[%s1 + $0x90] sm:$0xff]
      %v340 = vld [vmem:[%s1 + $0x98] sm:$0xff]
      %v341 = vld [vmem:[%s1 + $0xa0] sm:$0xff]
      %v342 = vld [vmem:[%s1 + $0xa8] sm:$0xff]
      %v343 = vld [vmem:[%s1 + $0xb0] sm:$0xff]
      %v344 = vld [vmem:[%s1 + $0xb8] sm:$0xff]
      %v345 = vld [vmem:[%s1 + $0xc0] sm:$0xff]
      %v346 = vld [vmem:[%s1 + $0xc8] sm:$0xff]
      %v347 = vld [vmem:[%s1 + $0xd0] sm:$0xff]
      %v348 = vld [vmem:[%s1 + $0xd8] sm:$0xff]
      %v349 = vld [vmem:[%s1 + $0xe0] sm:$0xff]
      %v350 = vld [vmem:[%s1 + $0xe8] sm:$0xff]
      %v351 = vld [vmem:[%s1 + $0xf0] sm:$0xff]
      %v352 = vld [vmem:[%s1 + $0xf8] sm:$0xff]
      %v353 = vld [vmem:[%s1 + $0x100] sm:$0xff]
      %v354 = vld [vmem:[%s1 + $0x108] sm:$0xff]
      %v355 = vld [vmem:[%s1 + $0x110] sm:$0xff]
      %v356 = vld [vmem:[%s1 + $0x118] sm:$0xff]
      %v357 = vld [vmem:[%s2] sm:$0x1]
      %v359 = vperm.slane %v357, 0
      %vm361 = vcmask 261120
      %v363 = vsel %vm361, %v227, 0
      %v366 = vsel %vm361, %v230, 0
      %v369 = vsel %vm361, %v233, 0
      %v372 = vsel %vm361, %v236, 0
      %v375 = vsel %vm361, %v239, 0
      %v378 = vsel %vm361, %v242, 0
      %v381 = vsel %vm361, %v245, 0
      %v384 = vsel %vm361, %v248, 0
      %v387 = vsel %vm361, %v251, 0
      %v390 = vsel %vm361, %v254, 0
      %v393 = vsel %vm361, %v257, 0
      %v396 = vsel %vm361, %v260, 0
      %v399 = vsel %vm361, %v263, 0
      %v402 = vsel %vm361, %v266, 0
      %v405 = vsel %vm361, %v269, 0
      %v408 = vsel %vm361, %v272, 0
      %v411 = vsel %vm361, %v275, 0
      %v414 = vsel %vm361, %v278, 0
      %v417 = vsel %vm361, %v281, 0
      %v420 = vsel %vm361, %v284, 0
      %v423 = vsel %vm361, %v287, 0
      %v426 = vsel %vm361, %v290, 0
      %v429 = vsel %vm361, %v293, 0
      %v432 = vsel %vm361, %v296, 0
      %v435 = vsel %vm361, %v299, 0
      %v438 = vsel %vm361, %v302, 0
      %v441 = vsel %vm361, %v305, 0
      %v444 = vsel %vm361, %v308, 0
      %v447 = vsel %vm361, %v311, 0
      %v450 = vsel %vm361, %v314, 0
      %v453 = vsel %vm361, %v317, 0
      %v456 = vsel %vm361, %v320, 0
      %458 = vmatpush.msra.mxu0 %v336
      %459 = vmatpush.msra.mxu0 %v335
      %460 = vmatpush.msra.mxu0 %v334
      %461 = vmatpush.msra.mxu0 %v333
      %462 = vmatpush.msra.mxu0 %v332
      %463 = vmatpush.msra.mxu0 %v331
      %464 = vmatpush.msra.mxu0 %v330
      %465 = vmatpush.msra.mxu0 %v329
      %466 = vmatpush.msra.mxu0 %v328
      %467 = vmatpush.msra.mxu0 %v327
      %468 = vmatpush.msra.mxu0 %v326
      %469 = vmatpush.msra.mxu0 %v325
      %470 = vmatpush.msra.mxu0 %v324
      %471 = vmatpush.msra.mxu0 %v323
      %472 = vmatpush.msra.mxu0 %v322
      %473 = vmatpush.msra.mxu0 %v321
      %474 = vmatmul.f32.gmra.mxu0 %v225
      %v475 = vpop.f32.mrf.mxu0
      %v476 = vadd.f32 %v359, %v475
      %477 = vmatmul.f32.gmra.mxu0 %v228
      %v478 = vpop.f32.mrf.mxu0
      %v479 = vadd.f32 %v359, %v478
      %480 = vmatmul.f32.gmra.mxu0 %v231
      %v481 = vpop.f32.mrf.mxu0
      %v482 = vadd.f32 %v359, %v481
      %483 = vmatmul.f32.gmra.mxu0 %v234
      %v484 = vpop.f32.mrf.mxu0
      %v485 = vadd.f32 %v359, %v484
      %486 = vmatmul.f32.gmra.mxu0 %v237
      %v487 = vpop.f32.mrf.mxu0
      %v488 = vadd.f32 %v359, %v487
      %489 = vmatmul.f32.gmra.mxu0 %v240
      %v490 = vpop.f32.mrf.mxu0
      %v491 = vadd.f32 %v359, %v490
      %492 = vmatmul.f32.gmra.mxu0 %v243
      %v493 = vpop.f32.mrf.mxu0
      %v494 = vadd.f32 %v359, %v493
      %495 = vmatmul.f32.gmra.mxu0 %v246
      %v496 = vpop.f32.mrf.mxu0
      %v497 = vadd.f32 %v359, %v496
      %498 = vmatmul.f32.gmra.mxu0 %v249
      %v499 = vpop.f32.mrf.mxu0
      %v500 = vadd.f32 %v359, %v499
      %501 = vmatmul.f32.gmra.mxu0 %v252
      %v502 = vpop.f32.mrf.mxu0
      %v503 = vadd.f32 %v359, %v502
      %504 = vmatmul.f32.gmra.mxu0 %v255
      %v505 = vpop.f32.mrf.mxu0
      %v506 = vadd.f32 %v359, %v505
      %507 = vmatmul.f32.gmra.mxu0 %v258
      %v508 = vpop.f32.mrf.mxu0
      %v509 = vadd.f32 %v359, %v508
      %510 = vmatmul.f32.gmra.mxu0 %v261
      %v511 = vpop.f32.mrf.mxu0
      %v512 = vadd.f32 %v359, %v511
      %513 = vmatmul.f32.gmra.mxu0 %v264
      %v514 = vpop.f32.mrf.mxu0
      %v515 = vadd.f32 %v359, %v514
      %516 = vmatmul.f32.gmra.mxu0 %v267
      %v517 = vpop.f32.mrf.mxu0
      %v518 = vadd.f32 %v359, %v517
      %519 = vmatmul.f32.gmra.mxu0 %v270
      %v520 = vpop.f32.mrf.mxu0
      %v521 = vadd.f32 %v359, %v520
      %522 = vmatmul.f32.gmra.mxu0 %v273
      %v523 = vpop.f32.mrf.mxu0
      %v524 = vadd.f32 %v359, %v523
      %525 = vmatmul.f32.gmra.mxu0 %v276
      %v526 = vpop.f32.mrf.mxu0
      %v527 = vadd.f32 %v359, %v526
      %528 = vmatmul.f32.gmra.mxu0 %v279
      %v529 = vpop.f32.mrf.mxu0
      %v530 = vadd.f32 %v359, %v529
      %531 = vmatmul.f32.gmra.mxu0 %v282
      %v532 = vpop.f32.mrf.mxu0
      %v533 = vadd.f32 %v359, %v532
      %534 = vmatmul.f32.gmra.mxu0 %v285
      %v535 = vpop.f32.mrf.mxu0
      %v536 = vadd.f32 %v359, %v535
      %537 = vmatmul.f32.gmra.mxu0 %v288
      %v538 = vpop.f32.mrf.mxu0
      %v539 = vadd.f32 %v359, %v538
      %540 = vmatmul.f32.gmra.mxu0 %v291
      %v541 = vpop.f32.mrf.mxu0
      %v542 = vadd.f32 %v359, %v541
      %543 = vmatmul.f32.gmra.mxu0 %v294
      %v544 = vpop.f32.mrf.mxu0
      %v545 = vadd.f32 %v359, %v544
      %546 = vmatmul.f32.gmra.mxu0 %v297
      %v547 = vpop.f32.mrf.mxu0
      %v548 = vadd.f32 %v359, %v547
      %549 = vmatmul.f32.gmra.mxu0 %v300
      %v550 = vpop.f32.mrf.mxu0
      %v551 = vadd.f32 %v359, %v550
      %552 = vmatmul.f32.gmra.mxu0 %v303
      %v553 = vpop.f32.mrf.mxu0
      %v554 = vadd.f32 %v359, %v553
      %555 = vmatmul.f32.gmra.mxu0 %v306
      %v556 = vpop.f32.mrf.mxu0
      %v557 = vadd.f32 %v359, %v556
      %558 = vmatmul.f32.gmra.mxu0 %v309
      %v559 = vpop.f32.mrf.mxu0
      %v560 = vadd.f32 %v359, %v559
      %561 = vmatmul.f32.gmra.mxu0 %v312
      %v562 = vpop.f32.mrf.mxu0
      %v563 = vadd.f32 %v359, %v562
      %564 = vmatmul.f32.gmra.mxu0 %v315
      %v565 = vpop.f32.mrf.mxu0
      %v566 = vadd.f32 %v359, %v565
      %567 = vmatmul.f32.gmra.mxu0 %v318
      %v568 = vpop.f32.mrf.mxu0
      %v569 = vadd.f32 %v359, %v568
      %570 = vdwg.mxu0
      %571 = vmatpush.msra.mxu0 %v352
      %572 = vmatpush.msra.mxu0 %v351
      %573 = vmatpush.msra.mxu0 %v350
      %574 = vmatpush.msra.mxu0 %v349
      %575 = vmatpush.msra.mxu0 %v348
      %576 = vmatpush.msra.mxu0 %v347
      %577 = vmatpush.msra.mxu0 %v346
      %578 = vmatpush.msra.mxu0 %v345
      %579 = vmatpush.msra.mxu0 %v344
      %580 = vmatpush.msra.mxu0 %v343
      %581 = vmatpush.msra.mxu0 %v342
      %582 = vmatpush.msra.mxu0 %v341
      %583 = vmatpush.msra.mxu0 %v340
      %584 = vmatpush.msra.mxu0 %v339
      %585 = vmatpush.msra.mxu0 %v338
      %586 = vmatpush.msra.mxu0 %v337
      %587 = vmatmul.f32.gmra.mxu0 %v226
      %v588 = vpop.f32.mrf.mxu0
      %v589 = vadd.f32 %v476, %v588
      %590 = vmatmul.f32.gmra.mxu0 %v229
      %v591 = vpop.f32.mrf.mxu0
      %v592 = vadd.f32 %v479, %v591
      %593 = vmatmul.f32.gmra.mxu0 %v232
      %v594 = vpop.f32.mrf.mxu0
      %v595 = vadd.f32 %v482, %v594
      %596 = vmatmul.f32.gmra.mxu0 %v235
      %v597 = vpop.f32.mrf.mxu0
      %v598 = vadd.f32 %v485, %v597
      %599 = vmatmul.f32.gmra.mxu0 %v238
      %v600 = vpop.f32.mrf.mxu0
      %v601 = vadd.f32 %v488, %v600
      %602 = vmatmul.f32.gmra.mxu0 %v241
      %v603 = vpop.f32.mrf.mxu0
      %v604 = vadd.f32 %v491, %v603
      %605 = vmatmul.f32.gmra.mxu0 %v244
      %v606 = vpop.f32.mrf.mxu0
      %v607 = vadd.f32 %v494, %v606
      %608 = vmatmul.f32.gmra.mxu0 %v247
      %v609 = vpop.f32.mrf.mxu0
      %v610 = vadd.f32 %v497, %v609
      %611 = vmatmul.f32.gmra.mxu0 %v250
      %v612 = vpop.f32.mrf.mxu0
      %v613 = vadd.f32 %v500, %v612
      %614 = vmatmul.f32.gmra.mxu0 %v253
      %v615 = vpop.f32.mrf.mxu0
      %v616 = vadd.f32 %v503, %v615
      %617 = vmatmul.f32.gmra.mxu0 %v256
      %v618 = vpop.f32.mrf.mxu0
      %v619 = vadd.f32 %v506, %v618
      %620 = vmatmul.f32.gmra.mxu0 %v259
      %v621 = vpop.f32.mrf.mxu0
      %v622 = vadd.f32 %v509, %v621
      %623 = vmatmul.f32.gmra.mxu0 %v262
      %v624 = vpop.f32.mrf.mxu0
      %v625 = vadd.f32 %v512, %v624
      %626 = vmatmul.f32.gmra.mxu0 %v265
      %v627 = vpop.f32.mrf.mxu0
      %v628 = vadd.f32 %v515, %v627
      %629 = vmatmul.f32.gmra.mxu0 %v268
      %v630 = vpop.f32.mrf.mxu0
      %v631 = vadd.f32 %v518, %v630
      %632 = vmatmul.f32.gmra.mxu0 %v271
      %v633 = vpop.f32.mrf.mxu0
      %v634 = vadd.f32 %v521, %v633
      %635 = vmatmul.f32.gmra.mxu0 %v274
      %v636 = vpop.f32.mrf.mxu0
      %v637 = vadd.f32 %v524, %v636
      %638 = vmatmul.f32.gmra.mxu0 %v277
      %v639 = vpop.f32.mrf.mxu0
      %v640 = vadd.f32 %v527, %v639
      %641 = vmatmul.f32.gmra.mxu0 %v280
      %v642 = vpop.f32.mrf.mxu0
      %v643 = vadd.f32 %v530, %v642
      %644 = vmatmul.f32.gmra.mxu0 %v283
      %v645 = vpop.f32.mrf.mxu0
      %v646 = vadd.f32 %v533, %v645
      %647 = vmatmul.f32.gmra.mxu0 %v286
      %v648 = vpop.f32.mrf.mxu0
      %v649 = vadd.f32 %v536, %v648
      %650 = vmatmul.f32.gmra.mxu0 %v289
      %v651 = vpop.f32.mrf.mxu0
      %v652 = vadd.f32 %v539, %v651
      %653 = vmatmul.f32.gmra.mxu0 %v292
      %v654 = vpop.f32.mrf.mxu0
      %v655 = vadd.f32 %v542, %v654
      %656 = vmatmul.f32.gmra.mxu0 %v295
      %v657 = vpop.f32.mrf.mxu0
      %v658 = vadd.f32 %v545, %v657
      %659 = vmatmul.f32.gmra.mxu0 %v298
      %v660 = vpop.f32.mrf.mxu0
      %v661 = vadd.f32 %v548, %v660
      %662 = vmatmul.f32.gmra.mxu0 %v301
      %v663 = vpop.f32.mrf.mxu0
      %v664 = vadd.f32 %v551, %v663
      %665 = vmatmul.f32.gmra.mxu0 %v304
      %v666 = vpop.f32.mrf.mxu0
      %v667 = vadd.f32 %v554, %v666
      %668 = vmatmul.f32.gmra.mxu0 %v307
      %v669 = vpop.f32.mrf.mxu0
      %v670 = vadd.f32 %v557, %v669
      %671 = vmatmul.f32.gmra.mxu0 %v310
      %v672 = vpop.f32.mrf.mxu0
      %v673 = vadd.f32 %v560, %v672
      %674 = vmatmul.f32.gmra.mxu0 %v313
      %v675 = vpop.f32.mrf.mxu0
      %v676 = vadd.f32 %v563, %v675
      %677 = vmatmul.f32.gmra.mxu0 %v316
      %v678 = vpop.f32.mrf.mxu0
      %v679 = vadd.f32 %v566, %v678
      %680 = vmatmul.f32.gmra.mxu0 %v319
      %v681 = vpop.f32.mrf.mxu0
      %v682 = vadd.f32 %v569, %v681
      %683 = vdwg.mxu0
      %684 = vmatpush.msra.mxu0 0.0
      %685 = vmatpush.msra.mxu0 0.0
      %686 = vmatpush.msra.mxu0 0.0
      %687 = vmatpush.msra.mxu0 0.0
      %688 = vmatpush.msra.mxu0 0.0
      %689 = vmatpush.msra.mxu0 0.0
      %690 = vmatpush.msra.mxu0 0.0
      %691 = vmatpush.msra.mxu0 0.0
      %692 = vmatpush.msra.mxu0 0.0
      %693 = vmatpush.msra.mxu0 0.0
      %694 = vmatpush.msra.mxu0 0.0
      %695 = vmatpush.msra.mxu0 0.0
      %696 = vmatpush.msra.mxu0 %v356
      %697 = vmatpush.msra.mxu0 %v355
      %698 = vmatpush.msra.mxu0 %v354
      %699 = vmatpush.msra.mxu0 %v353
      %700 = vmatmul.f32.gmra.mxu0 %v363
      %v701 = vpop.f32.mrf.mxu0
      %v702 = vadd.f32 %v589, %v701
      %703 = vmatmul.f32.gmra.mxu0 %v366
      %v704 = vpop.f32.mrf.mxu0
      %v705 = vadd.f32 %v592, %v704
      %706 = vmatmul.f32.gmra.mxu0 %v369
      %v707 = vpop.f32.mrf.mxu0
      %v708 = vadd.f32 %v595, %v707
      %709 = vmatmul.f32.gmra.mxu0 %v372
      %v710 = vpop.f32.mrf.mxu0
      %v711 = vadd.f32 %v598, %v710
      %712 = vmatmul.f32.gmra.mxu0 %v375
      %v713 = vpop.f32.mrf.mxu0
      %v714 = vadd.f32 %v601, %v713
      %715 = vmatmul.f32.gmra.mxu0 %v378
      %v716 = vpop.f32.mrf.mxu0
      %v717 = vadd.f32 %v604, %v716
      %718 = vmatmul.f32.gmra.mxu0 %v381
      %v719 = vpop.f32.mrf.mxu0
      %v720 = vadd.f32 %v607, %v719
      %721 = vmatmul.f32.gmra.mxu0 %v384
      %v722 = vpop.f32.mrf.mxu0
      %v723 = vadd.f32 %v610, %v722
      %724 = vmatmul.f32.gmra.mxu0 %v387
      %v725 = vpop.f32.mrf.mxu0
      %v726 = vadd.f32 %v613, %v725
      %727 = vmatmul.f32.gmra.mxu0 %v390
      %v728 = vpop.f32.mrf.mxu0
      %v729 = vadd.f32 %v616, %v728
      %730 = vmatmul.f32.gmra.mxu0 %v393
      %v731 = vpop.f32.mrf.mxu0
      %v732 = vadd.f32 %v619, %v731
      %733 = vmatmul.f32.gmra.mxu0 %v396
      %v734 = vpop.f32.mrf.mxu0
      %v735 = vadd.f32 %v622, %v734
      %736 = vmatmul.f32.gmra.mxu0 %v399
      %v737 = vpop.f32.mrf.mxu0
      %v738 = vadd.f32 %v625, %v737
      %739 = vmatmul.f32.gmra.mxu0 %v402
      %v740 = vpop.f32.mrf.mxu0
      %v741 = vadd.f32 %v628, %v740
      %742 = vmatmul.f32.gmra.mxu0 %v405
      %v743 = vpop.f32.mrf.mxu0
      %v744 = vadd.f32 %v631, %v743
      %745 = vmatmul.f32.gmra.mxu0 %v408
      %v746 = vpop.f32.mrf.mxu0
      %v747 = vadd.f32 %v634, %v746
      %748 = vmatmul.f32.gmra.mxu0 %v411
      %v749 = vpop.f32.mrf.mxu0
      %v750 = vadd.f32 %v637, %v749
      %751 = vmatmul.f32.gmra.mxu0 %v414
      %v752 = vpop.f32.mrf.mxu0
      %v753 = vadd.f32 %v640, %v752
      %754 = vmatmul.f32.gmra.mxu0 %v417
      %v755 = vpop.f32.mrf.mxu0
      %v756 = vadd.f32 %v643, %v755
      %757 = vmatmul.f32.gmra.mxu0 %v420
      %v758 = vpop.f32.mrf.mxu0
      %v759 = vadd.f32 %v646, %v758
      %760 = vmatmul.f32.gmra.mxu0 %v423
      %v761 = vpop.f32.mrf.mxu0
      %v762 = vadd.f32 %v649, %v761
      %763 = vmatmul.f32.gmra.mxu0 %v426
      %v764 = vpop.f32.mrf.mxu0
      %v765 = vadd.f32 %v652, %v764
      %766 = vmatmul.f32.gmra.mxu0 %v429
      %v767 = vpop.f32.mrf.mxu0
      %v768 = vadd.f32 %v655, %v767
      %769 = vmatmul.f32.gmra.mxu0 %v432
      %v770 = vpop.f32.mrf.mxu0
      %v771 = vadd.f32 %v658, %v770
      %772 = vmatmul.f32.gmra.mxu0 %v435
      %v773 = vpop.f32.mrf.mxu0
      %v774 = vadd.f32 %v661, %v773
      %775 = vmatmul.f32.gmra.mxu0 %v438
      %v776 = vpop.f32.mrf.mxu0
      %v777 = vadd.f32 %v664, %v776
      %778 = vmatmul.f32.gmra.mxu0 %v441
      %v779 = vpop.f32.mrf.mxu0
      %v780 = vadd.f32 %v667, %v779
      %781 = vmatmul.f32.gmra.mxu0 %v444
      %v782 = vpop.f32.mrf.mxu0
      %v783 = vadd.f32 %v670, %v782
      %784 = vmatmul.f32.gmra.mxu0 %v447
      %v785 = vpop.f32.mrf.mxu0
      %v786 = vadd.f32 %v673, %v785
      %787 = vmatmul.f32.gmra.mxu0 %v450
      %v788 = vpop.f32.mrf.mxu0
      %v789 = vadd.f32 %v676, %v788
      %790 = vmatmul.f32.gmra.mxu0 %v453
      %v791 = vpop.f32.mrf.mxu0
      %v792 = vadd.f32 %v679, %v791
      %793 = vmatmul.f32.gmra.mxu0 %v456
      %v794 = vpop.f32.mrf.mxu0
      %v795 = vadd.f32 %v682, %v794
      %796 = vdwg.mxu0
      %v797 = vmax.f32 %v702, 0.0
      %v798 = vmax.f32 %v705, 0.0
      %v799 = vmax.f32 %v708, 0.0
      %v800 = vmax.f32 %v711, 0.0
      %v801 = vmax.f32 %v714, 0.0
      %v802 = vmax.f32 %v717, 0.0
      %v803 = vmax.f32 %v720, 0.0
      %v804 = vmax.f32 %v723, 0.0
      %v805 = vmax.f32 %v726, 0.0
      %v806 = vmax.f32 %v729, 0.0
      %v807 = vmax.f32 %v732, 0.0
      %v808 = vmax.f32 %v735, 0.0
      %v809 = vmax.f32 %v738, 0.0
      %v810 = vmax.f32 %v741, 0.0
      %v811 = vmax.f32 %v744, 0.0
      %v812 = vmax.f32 %v747, 0.0
      %v813 = vmax.f32 %v750, 0.0
      %v814 = vmax.f32 %v753, 0.0
      %v815 = vmax.f32 %v756, 0.0
      %v816 = vmax.f32 %v759, 0.0
      %v817 = vmax.f32 %v762, 0.0
      %v818 = vmax.f32 %v765, 0.0
      %v819 = vmax.f32 %v768, 0.0
      %v820 = vmax.f32 %v771, 0.0
      %v821 = vmax.f32 %v774, 0.0
      %v822 = vmax.f32 %v777, 0.0
      %v823 = vmax.f32 %v780, 0.0
      %v824 = vmax.f32 %v783, 0.0
      %v825 = vmax.f32 %v786, 0.0
      %v826 = vmax.f32 %v789, 0.0
      %v827 = vmax.f32 %v792, 0.0
      %v828 = vmax.f32 %v795, 0.0
      %v829 = vld [vmem:[%s3] sm:$0x1]
      %v831 = vperm.slane %v829, 0
      %v833 = vmul.f32 %v797, %v831
      %v834 = vmul.f32 %v798, %v831
      %v835 = vmul.f32 %v799, %v831
      %v836 = vmul.f32 %v800, %v831
      %v837 = vmul.f32 %v801, %v831
      %v838 = vmul.f32 %v802, %v831
      %v839 = vmul.f32 %v803, %v831
      %v840 = vmul.f32 %v804, %v831
      %v841 = vmul.f32 %v805, %v831
      %v842 = vmul.f32 %v806, %v831
      %v843 = vmul.f32 %v807, %v831
      %v844 = vmul.f32 %v808, %v831
      %v845 = vmul.f32 %v809, %v831
      %v846 = vmul.f32 %v810, %v831
      %v847 = vmul.f32 %v811, %v831
      %v848 = vmul.f32 %v812, %v831
      %v849 = vmul.f32 %v813, %v831
      %v850 = vmul.f32 %v814, %v831
      %v851 = vmul.f32 %v815, %v831
      %v852 = vmul.f32 %v816, %v831
      %v853 = vmul.f32 %v817, %v831
      %v854 = vmul.f32 %v818, %v831
      %v855 = vmul.f32 %v819, %v831
      %v856 = vmul.f32 %v820, %v831
      %v857 = vmul.f32 %v821, %v831
      %v858 = vmul.f32 %v822, %v831
      %v859 = vmul.f32 %v823, %v831
      %v860 = vmul.f32 %v824, %v831
      %v861 = vmul.f32 %v825, %v831
      %v862 = vmul.f32 %v826, %v831
      %v863 = vmul.f32 %v827, %v831
      %v864 = vmul.f32 %v828, %v831
      %v865 = vld [vmem:[%s4] sm:$0x1]
      %v867 = vperm.slane %v865, 0
      %v869 = vadd.f32 %v833, %v867
      %v870 = vadd.f32 %v834, %v867
      %v871 = vadd.f32 %v835, %v867
      %v872 = vadd.f32 %v836, %v867
      %v873 = vadd.f32 %v837, %v867
      %v874 = vadd.f32 %v838, %v867
      %v875 = vadd.f32 %v839, %v867
      %v876 = vadd.f32 %v840, %v867
      %v877 = vadd.f32 %v841, %v867
      %v878 = vadd.f32 %v842, %v867
      %v879 = vadd.f32 %v843, %v867
      %v880 = vadd.f32 %v844, %v867
      %v881 = vadd.f32 %v845, %v867
      %v882 = vadd.f32 %v846, %v867
      %v883 = vadd.f32 %v847, %v867
      %v884 = vadd.f32 %v848, %v867
      %v885 = vadd.f32 %v849, %v867
      %v886 = vadd.f32 %v850, %v867
      %v887 = vadd.f32 %v851, %v867
      %v888 = vadd.f32 %v852, %v867
      %v889 = vadd.f32 %v853, %v867
      %v890 = vadd.f32 %v854, %v867
      %v891 = vadd.f32 %v855, %v867
      %v892 = vadd.f32 %v856, %v867
      %v893 = vadd.f32 %v857, %v867
      %v894 = vadd.f32 %v858, %v867
      %v895 = vadd.f32 %v859, %v867
      %v896 = vadd.f32 %v860, %v867
      %v897 = vadd.f32 %v861, %v867
      %v898 = vadd.f32 %v862, %v867
      %v899 = vadd.f32 %v863, %v867
      %v900 = vadd.f32 %v864, %v867
      %vm901 = vcmask 523264
      %902 = vst.msk [vmem:[#allocation2] sm:$0xff] %vm901, %v869
      %903 = vst.msk [vmem:[#allocation2 + $0x8] sm:$0xff] %vm901, %v870
      %904 = vst.msk [vmem:[#allocation2 + $0x10] sm:$0xff] %vm901, %v871
      %905 = vst.msk [vmem:[#allocation2 + $0x18] sm:$0xff] %vm901, %v872
      %906 = vst.msk [vmem:[#allocation2 + $0x20] sm:$0xff] %vm901, %v873
      %907 = vst.msk [vmem:[#allocation2 + $0x28] sm:$0xff] %vm901, %v874
      %908 = vst.msk [vmem:[#allocation2 + $0x30] sm:$0xff] %vm901, %v875
      %909 = vst.msk [vmem:[#allocation2 + $0x38] sm:$0xff] %vm901, %v876
      %910 = vst.msk [vmem:[#allocation2 + $0x40] sm:$0xff] %vm901, %v877
      %911 = vst.msk [vmem:[#allocation2 + $0x48] sm:$0xff] %vm901, %v878
      %912 = vst.msk [vmem:[#allocation2 + $0x50] sm:$0xff] %vm901, %v879
      %913 = vst.msk [vmem:[#allocation2 + $0x58] sm:$0xff] %vm901, %v880
      %914 = vst.msk [vmem:[#allocation2 + $0x60] sm:$0xff] %vm901, %v881
      %915 = vst.msk [vmem:[#allocation2 + $0x68] sm:$0xff] %vm901, %v882
      %916 = vst.msk [vmem:[#allocation2 + $0x70] sm:$0xff] %vm901, %v883
      %917 = vst.msk [vmem:[#allocation2 + $0x78] sm:$0xff] %vm901, %v884
      %918 = vst.msk [vmem:[#allocation2 + $0x80] sm:$0xff] %vm901, %v885
      %919 = vst.msk [vmem:[#allocation2 + $0x88] sm:$0xff] %vm901, %v886
      %920 = vst.msk [vmem:[#allocation2 + $0x90] sm:$0xff] %vm901, %v887
      %921 = vst.msk [vmem:[#allocation2 + $0x98] sm:$0xff] %vm901, %v888
      %922 = vst.msk [vmem:[#allocation2 + $0xa0] sm:$0xff] %vm901, %v889
      %923 = vst.msk [vmem:[#allocation2 + $0xa8] sm:$0xff] %vm901, %v890
      %924 = vst.msk [vmem:[#allocation2 + $0xb0] sm:$0xff] %vm901, %v891
      %925 = vst.msk [vmem:[#allocation2 + $0xb8] sm:$0xff] %vm901, %v892
      %926 = vst.msk [vmem:[#allocation2 + $0xc0] sm:$0xff] %vm901, %v893
      %927 = vst.msk [vmem:[#allocation2 + $0xc8] sm:$0xff] %vm901, %v894
      %928 = vst.msk [vmem:[#allocation2 + $0xd0] sm:$0xff] %vm901, %v895
      %929 = vst.msk [vmem:[#allocation2 + $0xd8] sm:$0xff] %vm901, %v896
      %930 = vst.msk [vmem:[#allocation2 + $0xe0] sm:$0xff] %vm901, %v897
      %931 = vst.msk [vmem:[#allocation2 + $0xe8] sm:$0xff] %vm901, %v898
      %932 = vst.msk [vmem:[#allocation2 + $0xf0] sm:$0xff] %vm901, %v899
      %933 = vst.msk [vmem:[#allocation2 + $0xf8] sm:$0xff] %vm901, %v900
      %v934 = vld [vmem:[#allocation2] ss:$2 sm:$0xff]
      %s935 = scalar_lea.vmem [#allocation2], 16
      %v936 = vld [vmem:[%s935] ss:$2 sm:$0xff]
      %s937 = scalar_lea.vmem [#allocation2], 32
      %v938 = vld [vmem:[%s937] ss:$2 sm:$0xff]
      %s939 = scalar_lea.vmem [#allocation2], 48
      %v940 = vld [vmem:[%s939] ss:$2 sm:$0xff]
      %s941 = scalar_lea.vmem [#allocation2], 64
      %v942 = vld [vmem:[%s941] ss:$2 sm:$0xff]
      %s943 = scalar_lea.vmem [#allocation2], 80
      %v944 = vld [vmem:[%s943] ss:$2 sm:$0xff]
      %s945 = scalar_lea.vmem [#allocation2], 96
      %v946 = vld [vmem:[%s945] ss:$2 sm:$0xff]
      %s947 = scalar_lea.vmem [#allocation2], 112
      %v948 = vld [vmem:[%s947] ss:$2 sm:$0xff]
      %s949 = scalar_lea.vmem [#allocation2], 128
      %v950 = vld [vmem:[%s949] ss:$2 sm:$0xff]
      %s951 = scalar_lea.vmem [#allocation2], 144
      %v952 = vld [vmem:[%s951] ss:$2 sm:$0xff]
      %s953 = scalar_lea.vmem [#allocation2], 160
      %v954 = vld [vmem:[%s953] ss:$2 sm:$0xff]
      %s955 = scalar_lea.vmem [#allocation2], 176
      %v956 = vld [vmem:[%s955] ss:$2 sm:$0xff]
      %s957 = scalar_lea.vmem [#allocation2], 192
      %v958 = vld [vmem:[%s957] ss:$2 sm:$0xff]
      %s959 = scalar_lea.vmem [#allocation2], 208
      %v960 = vld [vmem:[%s959] ss:$2 sm:$0xff]
      %s961 = scalar_lea.vmem [#allocation2], 224
      %v962 = vld [vmem:[%s961] ss:$2 sm:$0xff]
      %s963 = scalar_lea.vmem [#allocation2], 240
      %v964 = vld [vmem:[%s963] ss:$2 sm:$0xff]
      %s965 = scalar_lea.vmem [#allocation2], 1
      %v966 = vld [vmem:[%s965] ss:$2 sm:$0xff]
      %s967 = scalar_lea.vmem [#allocation2], 17
      %v968 = vld [vmem:[%s967] ss:$2 sm:$0xff]
      %s969 = scalar_lea.vmem [#allocation2], 33
      %v970 = vld [vmem:[%s969] ss:$2 sm:$0xff]
      %s971 = scalar_lea.vmem [#allocation2], 49
      %v972 = vld [vmem:[%s971] ss:$2 sm:$0xff]
      %s973 = scalar_lea.vmem [#allocation2], 65
      %v974 = vld [vmem:[%s973] ss:$2 sm:$0xff]
      %s975 = scalar_lea.vmem [#allocation2], 81
      %v976 = vld [vmem:[%s975] ss:$2 sm:$0xff]
      %s977 = scalar_lea.vmem [#allocation2], 97
      %v978 = vld [vmem:[%s977] ss:$2 sm:$0xff]
      %s979 = scalar_lea.vmem [#allocation2], 113
      %v980 = vld [vmem:[%s979] ss:$2 sm:$0xff]
      %s981 = scalar_lea.vmem [#allocation2], 129
      %v982 = vld [vmem:[%s981] ss:$2 sm:$0xff]
      %s983 = scalar_lea.vmem [#allocation2], 145
      %v984 = vld [vmem:[%s983] ss:$2 sm:$0xff]
      %s985 = scalar_lea.vmem [#allocation2], 161
      %v986 = vld [vmem:[%s985] ss:$2 sm:$0xff]
      %s987 = scalar_lea.vmem [#allocation2], 177
      %v988 = vld [vmem:[%s987] ss:$2 sm:$0xff]
      %s989 = scalar_lea.vmem [#allocation2], 193
      %v990 = vld [vmem:[%s989] ss:$2 sm:$0xff]
      %s991 = scalar_lea.vmem [#allocation2], 209
      %v992 = vld [vmem:[%s991] ss:$2 sm:$0xff]
      %s993 = scalar_lea.vmem [#allocation2], 225
      %v994 = vld [vmem:[%s993] ss:$2 sm:$0xff]
      %s995 = scalar_lea.vmem [#allocation2], 241
      %v996 = vld [vmem:[%s995] ss:$2 sm:$0xff]
      %v997 = vmax.f32 %v934, %v966
      %v998 = vmax.f32 %v936, %v968
      %v999 = vmax.f32 %v938, %v970
      %v1000 = vmax.f32 %v940, %v972
      %v1001 = vmax.f32 %v942, %v974
      %v1002 = vmax.f32 %v944, %v976
      %v1003 = vmax.f32 %v946, %v978
      %v1004 = vmax.f32 %v948, %v980
      %v1005 = vmax.f32 %v950, %v982
      %v1006 = vmax.f32 %v952, %v984
      %v1007 = vmax.f32 %v954, %v986
      %v1008 = vmax.f32 %v956, %v988
      %v1009 = vmax.f32 %v958, %v990
      %v1010 = vmax.f32 %v960, %v992
      %v1011 = vmax.f32 %v962, %v994
      %v1012 = vmax.f32 %v964, %v996
      %v1013 = vsel %vm901, %v997, -inf
      %v1014 = vsel %vm901, %v998, -inf
      %v1015 = vmax.f32 %v1013, %v1014
      %v1016 = vsel %vm901, %v999, -inf
      %v1017 = vsel %vm901, %v1000, -inf
      %v1018 = vmax.f32 %v1016, %v1017
      %v1019 = vsel %vm901, %v1001, -inf
      %v1020 = vsel %vm901, %v1002, -inf
      %v1021 = vmax.f32 %v1019, %v1020
      %v1022 = vsel %vm901, %v1003, -inf
      %v1023 = vsel %vm901, %v1004, -inf
      %v1024 = vmax.f32 %v1022, %v1023
      %v1025 = vsel %vm901, %v1005, -inf
      %v1026 = vsel %vm901, %v1006, -inf
      %v1027 = vmax.f32 %v1025, %v1026
      %v1028 = vsel %vm901, %v1007, -inf
      %v1029 = vsel %vm901, %v1008, -inf
      %v1030 = vmax.f32 %v1028, %v1029
      %v1031 = vsel %vm901, %v1009, -inf
      %v1032 = vsel %vm901, %v1010, -inf
      %v1033 = vmax.f32 %v1031, %v1032
      %v1034 = vsel %vm901, %v1011, -inf
      %v1035 = vsel %vm901, %v1012, -inf
      %v1036 = vmax.f32 %v1034, %v1035
      %1037 = vst.msk [vmem:[%s224] sm:$0xff] %vm901, %v1015
      %1038 = vst.msk [vmem:[%s224 + $0x8] sm:$0xff] %vm901, %v1018
      %1039 = vst.msk [vmem:[%s224 + $0x10] sm:$0xff] %vm901, %v1021
      %1040 = vst.msk [vmem:[%s224 + $0x18] sm:$0xff] %vm901, %v1024
      %1041 = vst.msk [vmem:[%s224 + $0x20] sm:$0xff] %vm901, %v1027
      %1042 = vst.msk [vmem:[%s224 + $0x28] sm:$0xff] %vm901, %v1030
      %1043 = vst.msk [vmem:[%s224 + $0x30] sm:$0xff] %vm901, %v1033
      %1044 = vst.msk [vmem:[%s224 + $0x38] sm:$0xff] %vm901, %v1036
      %p1045 = scmp.lt.s32.totalorder %s16, 1
      %s1046 = scalar_select %p1045, %s16, 1
      %s1047 = smul.addr %s1046, 8
      %s1048 = smul.addr %s1047, 8
      %s1049 = scalar_lea.vmem %s5, %s1048
      // Predicated region
      $region41: #{cnn_forward.4} parent=39 // pred_check
        %p1050 = pneg %p144
      $region42: #{cnn_forward.4} parent=39 // pred_check_branch
        %1052 = sbr.rel (%p1050) target = $region44
      $region43: #{cnn_forward.4} parent=39 // pred_region
        _
      $region44: #{cnn_forward.4} parent=39 // pred_fallthru
        _
    $region40: #{cnn_forward.4} parent=5 // pred_fallthru
      _
    %p1053 = scmp.le.s32.totalorder 2, %s11
    // Predicated region
    $region45: #{cnn_forward.4} parent=5 // pred_check
      %p1054 = pneg %p1053
    $region46: #{cnn_forward.4} parent=5 // pred_check_branch
      %1056 = sbr.rel (%p1054) target = $region48
    $region47: #{cnn_forward.4} parent=5 // pred_region
      %s1057 = ssub.s32 %s11, 2
      // Predicated region
      $region49: #{cnn_forward.4} parent=47 // pred_check
        %p1058 = pneg %p150
      $region50: #{cnn_forward.4} parent=47 // pred_check_branch
        %1060 = sbr.rel (%p1058) target = $region52
      $region51: #{cnn_forward.4} parent=47 // pred_region
        %p1061 = scmp.lt.s32.totalorder %s17, 1
        %s1062 = scalar_select %p1061, %s17, 1
        %s1063 = smul.addr %s1062, 8
        %s1064 = smul.addr %s1063, 8
        %s1065 = scalar_lea.vmem %s5, %s1064
      $region52: #{cnn_forward.4} parent=47 // pred_fallthru
        _
    $region48: #{cnn_forward.4} parent=5 // pred_fallthru
      _
  $region6: #{cnn_forward.4} parent=0 // loop_footer
    %s15 = sadd.s32 1, %s11
  $region7: #{cnn_forward.4} parent=0 // loop_footer_branch
    %10 = sbr.rel target = $region3
  $region8: #{cnn_forward.4} parent=0 // loop_exit
    _

// kernel: cnn_forward.5
$region0: #{cnn_forward.5}
  #allocation0 [shape = 'u32[]', space=smem, size = 0x4, offset = 0x4, fixed_abs, tag = 'smem constant byte address 0x4 - core index']
  #allocation1 [shape = 'u32[72,128]{1,0:T(1,128)}', space=vmem, size = 0x9000, scoped, tag = 'internal scratch']
  %s0 = inlined_call_operand.vmem [shape: f32[2,4096], index: 0, kind: input, shape index: {}]
  %s1 = inlined_call_operand.vmem [shape: f32[4096,256], index: 1, kind: input, shape index: {}]
  %s2 = inlined_call_operand.vmem [shape: f32[1,256], index: 2, kind: input, shape index: {}]
  %s3 = inlined_call_operand.vmem [shape: f32[1,256], index: 3, kind: input, shape index: {}]
  %s4 = inlined_call_operand.vmem [shape: f32[1,256], index: 4, kind: input, shape index: {}]
  %s5 = inlined_call_operand.vmem [shape: f32[256,256], index: 5, kind: input, shape index: {}]
  %s6 = inlined_call_operand.vmem [shape: f32[1,256], index: 6, kind: input, shape index: {}]
  %s7 = inlined_call_operand.hbm [shape: f32[2,256], index: 7, kind: output, shape index: {}]
  %s8 = sld [smem:[#allocation0]]
  $region38: #{cnn_forward.5} parent=0
    _
  %s10 = ssub.s32 1, %s8
  %s11 = scalar_select 0, %s10, %s8
  $region1: #{cnn_forward.5} parent=0
    #allocation2 [shape = 'u8[2048]{0}', space=vmem, size = 0x800, scoped, tag = 'output window, operand 0, single buffered']
    #allocation3 [shape = 's32[1]{0}', space=sflag, size = 0x4, scoped, tag = 'scoped memory for cnn_forward.5']
    %12 = vsyncpa [#allocation3], 0
    // Predicated region
    $region2: #{cnn_forward.5} parent=1 // pred_check
      _
    $region3: #{cnn_forward.5} parent=1 // pred_check_branch
      %14 = sbr.rel (0) target = $region5
    $region4: #{cnn_forward.5} parent=1 // pred_region
      _
    $region5: #{cnn_forward.5} parent=1 // pred_fallthru
      _
    // Predicated region
    $region6: #{cnn_forward.5} parent=1 // pred_check
      _
    $region7: #{cnn_forward.5} parent=1 // pred_check_branch
      %16 = sbr.rel (0) target = $region9
    $region8: #{cnn_forward.5} parent=1 // pred_region
      _
    $region9: #{cnn_forward.5} parent=1 // pred_fallthru
      _
    // Predicated region
    $region10: #{cnn_forward.5} parent=1 // pred_check
      _
    $region11: #{cnn_forward.5} parent=1 // pred_check_branch
      %18 = sbr.rel (0) target = $region13
    $region12: #{cnn_forward.5} parent=1 // pred_region
      _
    $region13: #{cnn_forward.5} parent=1 // pred_fallthru
      _
    // Predicated region
    $region14: #{cnn_forward.5} parent=1 // pred_check
      _
    $region15: #{cnn_forward.5} parent=1 // pred_check_branch
      %20 = sbr.rel (0) target = $region17
    $region16: #{cnn_forward.5} parent=1 // pred_region
      _
    $region17: #{cnn_forward.5} parent=1 // pred_fallthru
      _
    // Predicated region
    $region18: #{cnn_forward.5} parent=1 // pred_check
      _
    $region19: #{cnn_forward.5} parent=1 // pred_check_branch
      %22 = sbr.rel (0) target = $region21
    $region20: #{cnn_forward.5} parent=1 // pred_region
      _
    $region21: #{cnn_forward.5} parent=1 // pred_fallthru
      _
    // Predicated region
    $region22: #{cnn_forward.5} parent=1 // pred_check
      _
    $region23: #{cnn_forward.5} parent=1 // pred_check_branch
      %24 = sbr.rel (0) target = $region25
    $region24: #{cnn_forward.5} parent=1 // pred_region
      _
    $region25: #{cnn_forward.5} parent=1 // pred_fallthru
      _
    // Predicated region
    $region26: #{cnn_forward.5} parent=1 // pred_check
      _
    $region27: #{cnn_forward.5} parent=1 // pred_check_branch
      %26 = sbr.rel (0) target = $region29
    $region28: #{cnn_forward.5} parent=1 // pred_region
      _
    $region29: #{cnn_forward.5} parent=1 // pred_fallthru
      _
    %v27 = vld [vmem:[%s0] sm:$0xff]
    %v28 = vld [vmem:[%s0 + $0x8] sm:$0xff]
    %v29 = vld [vmem:[%s0 + $0x10] sm:$0xff]
    %v30 = vld [vmem:[%s0 + $0x18] sm:$0xff]
    %v31 = vld [vmem:[%s0 + $0x20] sm:$0xff]
    %v32 = vld [vmem:[%s0 + $0x28] sm:$0xff]
    %v33 = vld [vmem:[%s0 + $0x30] sm:$0xff]
    %v34 = vld [vmem:[%s0 + $0x38] sm:$0xff]
    %v35 = vld [vmem:[%s1] sm:$0xff]
    %v36 = vld [vmem:[%s1 + $0x8] sm:$0xff]
    %v37 = vld [vmem:[%s1 + $0x10] sm:$0xff]
    %v38 = vld [vmem:[%s1 + $0x18] sm:$0xff]
    %v39 = vld [vmem:[%s1 + $0x20] sm:$0xff]
    %v40 = vld [vmem:[%s1 + $0x28] sm:$0xff]
    %v41 = vld [vmem:[%s1 + $0x30] sm:$0xff]
    %v42 = vld [vmem:[%s1 + $0x38] sm:$0xff]
    %v43 = vld [vmem:[%s1 + $0x40] sm:$0xff]
    %v44 = vld [vmem:[%s1 + $0x48] sm:$0xff]
    %v45 = vld [vmem:[%s1 + $0x50] sm:$0xff]
    %v46 = vld [vmem:[%s1 + $0x58] sm:$0xff]
    %v47 = vld [vmem:[%s1 + $0x60] sm:$0xff]
    %v48 = vld [vmem:[%s1 + $0x68] sm:$0xff]
    %v49 = vld [vmem:[%s1 + $0x70] sm:$0xff]
    %v50 = vld [vmem:[%s1 + $0x78] sm:$0xff]
    %v51 = vld [vmem:[%s1 + $0x80] sm:$0xff]
    %v52 = vld [vmem:[%s1 + $0x88] sm:$0xff]
    %v53 = vld [vmem:[%s1 + $0x90] sm:$0xff]
    %v54 = vld [vmem:[%s1 + $0x98] sm:$0xff]
    %v55 = vld [vmem:[%s1 + $0xa0] sm:$0xff]
    %v56 = vld [vmem:[%s1 + $0xa8] sm:$0xff]
    %v57 = vld [vmem:[%s1 + $0xb0] sm:$0xff]
    %v58 = vld [vmem:[%s1 + $0xb8] sm:$0xff]
    %v59 = vld [vmem:[%s1 + $0xc0] sm:$0xff]
    %v60 = vld [vmem:[%s1 + $0xc8] sm:$0xff]
    %v61 = vld [vmem:[%s1 + $0xd0] sm:$0xff]
    %v62 = vld [vmem:[%s1 + $0xd8] sm:$0xff]
    %v63 = vld [vmem:[%s1 + $0xe0] sm:$0xff]
    %v64 = vld [vmem:[%s1 + $0xe8] sm:$0xff]
    %v65 = vld [vmem:[%s1 + $0xf0] sm:$0xff]
    %v66 = vld [vmem:[%s1 + $0xf8] sm:$0xff]
    %v67 = vld [vmem:[%s1 + $0x100] sm:$0xff]
    %v68 = vld [vmem:[%s1 + $0x108] sm:$0xff]
    %v69 = vld [vmem:[%s1 + $0x110] sm:$0xff]
    %v70 = vld [vmem:[%s1 + $0x118] sm:$0xff]
    %v71 = vld [vmem:[%s1 + $0x120] sm:$0xff]
    %v72 = vld [vmem:[%s1 + $0x128] sm:$0xff]
    %v73 = vld [vmem:[%s1 + $0x130] sm:$0xff]
    %v74 = vld [vmem:[%s1 + $0x138] sm:$0xff]
    %v75 = vld [vmem:[%s1 + $0x140] sm:$0xff]
    %v76 = vld [vmem:[%s1 + $0x148] sm:$0xff]
    %v77 = vld [vmem:[%s1 + $0x150] sm:$0xff]
    %v78 = vld [vmem:[%s1 + $0x158] sm:$0xff]
    %v79 = vld [vmem:[%s1 + $0x160] sm:$0xff]
    %v80 = vld [vmem:[%s1 + $0x168] sm:$0xff]
    %v81 = vld [vmem:[%s1 + $0x170] sm:$0xff]
    %v82 = vld [vmem:[%s1 + $0x178] sm:$0xff]
    %v83 = vld [vmem:[%s1 + $0x180] sm:$0xff]
    %v84 = vld [vmem:[%s1 + $0x188] sm:$0xff]
    %v85 = vld [vmem:[%s1 + $0x190] sm:$0xff]
    %v86 = vld [vmem:[%s1 + $0x198] sm:$0xff]
    %v87 = vld [vmem:[%s1 + $0x1a0] sm:$0xff]
    %v88 = vld [vmem:[%s1 + $0x1a8] sm:$0xff]
    %v89 = vld [vmem:[%s1 + $0x1b0] sm:$0xff]
    %v90 = vld [vmem:[%s1 + $0x1b8] sm:$0xff]
    %v91 = vld [vmem:[%s1 + $0x1c0] sm:$0xff]
    %v92 = vld [vmem:[%s1 + $0x1c8] sm:$0xff]
    %v93 = vld [vmem:[%s1 + $0x1d0] sm:$0xff]
    %v94 = vld [vmem:[%s1 + $0x1d8] sm:$0xff]
    %v95 = vld [vmem:[%s1 + $0x1e0] sm:$0xff]
    %v96 = vld [vmem:[%s1 + $0x1e8] sm:$0xff]
    %v97 = vld [vmem:[%s1 + $0x1f0] sm:$0xff]
    %v98 = vld [vmem:[%s1 + $0x1f8] sm:$0xff]
    %v99 = vld [vmem:[%s1 + $0x200] sm:$0xff]
    %v100 = vld [vmem:[%s1 + $0x208] sm:$0xff]
    %v101 = vld [vmem:[%s1 + $0x210] sm:$0xff]
    %v102 = vld [vmem:[%s1 + $0x218] sm:$0xff]
    %v103 = vld [vmem:[%s1 + $0x220] sm:$0xff]
    %v104 = vld [vmem:[%s1 + $0x228] sm:$0xff]
    %v105 = vld [vmem:[%s1 + $0x230] sm:$0xff]
    %v106 = vld [vmem:[%s1 + $0x238] sm:$0xff]
    %v107 = vld [vmem:[%s1 + $0x240] sm:$0xff]
    %v108 = vld [vmem:[%s1 + $0x248] sm:$0xff]
    %v109 = vld [vmem:[%s1 + $0x250] sm:$0xff]
    %v110 = vld [vmem:[%s1 + $0x258] sm:$0xff]
    %v111 = vld [vmem:[%s1 + $0x260] sm:$0xff]
    %v112 = vld [vmem:[%s1 + $0x268] sm:$0xff]
    %v113 = vld [vmem:[%s1 + $0x270] sm:$0xff]
    %v114 = vld [vmem:[%s1 + $0x278] sm:$0xff]
    %v115 = vld [vmem:[%s1 + $0x280] sm:$0xff]
    %v116 = vld [vmem:[%s1 + $0x288] sm:$0xff]
    %v117 = vld [vmem:[%s1 + $0x290] sm:$0xff]
    %v118 = vld [vmem:[%s1 + $0x298] sm:$0xff]
    %v119 = vld [vmem:[%s1 + $0x2a0] sm:$0xff]
    %v120 = vld [vmem:[%s1 + $0x2a8] sm:$0xff]
    %v121 = vld [vmem:[%s1 + $0x2b0] sm:$0xff]
    %v122 = vld [vmem:[%s1 + $0x2b8] sm:$0xff]
    %v123 = vld [vmem:[%s1 + $0x2c0] sm:$0xff]
    %v124 = vld [vmem:[%s1 + $0x2c8] sm:$0xff]
    %v125 = vld [vmem:[%s1 + $0x2d0] sm:$0xff]
    %v126 = vld [vmem:[%s1 + $0x2d8] sm:$0xff]
    %v127 = vld [vmem:[%s1 + $0x2e0] sm:$0xff]
    %v128 = vld [vmem:[%s1 + $0x2e8] sm:$0xff]
    %v129 = vld [vmem:[%s1 + $0x2f0] sm:$0xff]
    %v130 = vld [vmem:[%s1 + $0x2f8] sm:$0xff]
    %v131 = vld [vmem:[%s1 + $0x300] sm:$0xff]
    %v132 = vld [vmem:[%s1 + $0x308] sm:$0xff]
    %v133 = vld [vmem:[%s1 + $0x310] sm:$0xff]
    %v134 = vld [vmem:[%s1 + $0x318] sm:$0xff]
    %v135 = vld [vmem:[%s1 + $0x320] sm:$0xff]
    %v136 = vld [vmem:[%s1 + $0x328] sm:$0xff]
    %v137 = vld [vmem:[%s1 + $0x330] sm:$0xff]
    %v138 = vld [vmem:[%s1 + $0x338] sm:$0xff]
    %v139 = vld [vmem:[%s1 + $0x340] sm:$0xff]
    %v140 = vld [vmem:[%s1 + $0x348] sm:$0xff]
    %v141 = vld [vmem:[%s1 + $0x350] sm:$0xff]
    %v142 = vld [vmem:[%s1 + $0x358] sm:$0xff]
    %v143 = vld [vmem:[%s1 + $0x360] sm:$0xff]
    %v144 = vld [vmem:[%s1 + $0x368] sm:$0xff]
    %v145 = vld [vmem:[%s1 + $0x370] sm:$0xff]
    %v146 = vld [vmem:[%s1 + $0x378] sm:$0xff]
    %v147 = vld [vmem:[%s1 + $0x380] sm:$0xff]
    %v148 = vld [vmem:[%s1 + $0x388] sm:$0xff]
    %v149 = vld [vmem:[%s1 + $0x390] sm:$0xff]
    %v150 = vld [vmem:[%s1 + $0x398] sm:$0xff]
    %v151 = vld [vmem:[%s1 + $0x3a0] sm:$0xff]
    %v152 = vld [vmem:[%s1 + $0x3a8] sm:$0xff]
    %v153 = vld [vmem:[%s1 + $0x3b0] sm:$0xff]
    %v154 = vld [vmem:[%s1 + $0x3b8] sm:$0xff]
    %v155 = vld [vmem:[%s1 + $0x3c0] sm:$0xff]
    %v156 = vld [vmem:[%s1 + $0x3c8] sm:$0xff]
    %v157 = vld [vmem:[%s1 + $0x3d0] sm:$0xff]
    %v158 = vld [vmem:[%s1 + $0x3d8] sm:$0xff]
    %v159 = vld [vmem:[%s1 + $0x3e0] sm:$0xff]
    %v160 = vld [vmem:[%s1 + $0x3e8] sm:$0xff]
    %v161 = vld [vmem:[%s1 + $0x3f0] sm:$0xff]
    %v162 = vld [vmem:[%s1 + $0x3f8] sm:$0xff]
    %v163 = vld [vmem:[%s1 + $0x400] sm:$0xff]
    %v164 = vld [vmem:[%s1 + $0x408] sm:$0xff]
    %v165 = vld [vmem:[%s1 + $0x410] sm:$0xff]
    %v166 = vld [vmem:[%s1 + $0x418] sm:$0xff]
    %v167 = vld [vmem:[%s1 + $0x420] sm:$0xff]
    %v168 = vld [vmem:[%s1 + $0x428] sm:$0xff]
    %v169 = vld [vmem:[%s1 + $0x430] sm:$0xff]
    %v170 = vld [vmem:[%s1 + $0x438] sm:$0xff]
    %v171 = vld [vmem:[%s1 + $0x440] sm:$0xff]
    %v172 = vld [vmem:[%s1 + $0x448] sm:$0xff]
    %v173 = vld [vmem:[%s1 + $0x450] sm:$0xff]
    %v174 = vld [vmem:[%s1 + $0x458] sm:$0xff]
    %v175 = vld [vmem:[%s1 + $0x460] sm:$0xff]
    %v176 = vld [vmem:[%s1 + $0x468] sm:$0xff]
    %v177 = vld [vmem:[%s1 + $0x470] sm:$0xff]
    %v178 = vld [vmem:[%s1 + $0x478] sm:$0xff]
    %v179 = vld [vmem:[%s1 + $0x480] sm:$0xff]
    %v180 = vld [vmem:[%s1 + $0x488] sm:$0xff]
    %v181 = vld [vmem:[%s1 + $0x490] sm:$0xff]
    %v182 = vld [vmem:[%s1 + $0x498] sm:$0xff]
    %v183 = vld [vmem:[%s1 + $0x4a0] sm:$0xff]
    %v184 = vld [vmem:[%s1 + $0x4a8] sm:$0xff]
    %v185 = vld [vmem:[%s1 + $0x4b0] sm:$0xff]
    %v186 = vld [vmem:[%s1 + $0x4b8] sm:$0xff]
    %v187 = vld [vmem:[%s1 + $0x4c0] sm:$0xff]
    %v188 = vld [vmem:[%s1 + $0x4c8] sm:$0xff]
    %v189 = vld [vmem:[%s1 + $0x4d0] sm:$0xff]
    %v190 = vld [vmem:[%s1 + $0x4d8] sm:$0xff]
    %v191 = vld [vmem:[%s1 + $0x4e0] sm:$0xff]
    %v192 = vld [vmem:[%s1 + $0x4e8] sm:$0xff]
    %v193 = vld [vmem:[%s1 + $0x4f0] sm:$0xff]
    %v194 = vld [vmem:[%s1 + $0x4f8] sm:$0xff]
    %v195 = vld [vmem:[%s1 + $0x500] sm:$0xff]
    %v196 = vld [vmem:[%s1 + $0x508] sm:$0xff]
    %v197 = vld [vmem:[%s1 + $0x510] sm:$0xff]
    %v198 = vld [vmem:[%s1 + $0x518] sm:$0xff]
    %v199 = vld [vmem:[%s1 + $0x520] sm:$0xff]
    %v200 = vld [vmem:[%s1 + $0x528] sm:$0xff]
    %v201 = vld [vmem:[%s1 + $0x530] sm:$0xff]
    %v202 = vld [vmem:[%s1 + $0x538] sm:$0xff]
    %v203 = vld [vmem:[%s1 + $0x540] sm:$0xff]
    %v204 = vld [vmem:[%s1 + $0x548] sm:$0xff]
    %v205 = vld [vmem:[%s1 + $0x550] sm:$0xff]
    %v206 = vld [vmem:[%s1 + $0x558] sm:$0xff]
    %v207 = vld [vmem:[%s1 + $0x560] sm:$0xff]
    %v208 = vld [vmem:[%s1 + $0x568] sm:$0xff]
    %v209 = vld [vmem:[%s1 + $0x570] sm:$0xff]
    %v210 = vld [vmem:[%s1 + $0x578] sm:$0xff]
    %v211 = vld [vmem:[%s1 + $0x580] sm:$0xff]
    %v212 = vld [vmem:[%s1 + $0x588] sm:$0xff]
    %v213 = vld [vmem:[%s1 + $0x590] sm:$0xff]
    %v214 = vld [vmem:[%s1 + $0x598] sm:$0xff]
    %v215 = vld [vmem:[%s1 + $0x5a0] sm:$0xff]
    %v216 = vld [vmem:[%s1 + $0x5a8] sm:$0xff]
    %v217 = vld [vmem:[%s1 + $0x5b0] sm:$0xff]
    %v218 = vld [vmem:[%s1 + $0x5b8] sm:$0xff]
    %v219 = vld [vmem:[%s1 + $0x5c0] sm:$0xff]
    %v220 = vld [vmem:[%s1 + $0x5c8] sm:$0xff]
    %v221 = vld [vmem:[%s1 + $0x5d0] sm:$0xff]
    %v222 = vld [vmem:[%s1 + $0x5d8] sm:$0xff]
    %v223 = vld [vmem:[%s1 + $0x5e0] sm:$0xff]
    %v224 = vld [vmem:[%s1 + $0x5e8] sm:$0xff]
    %v225 = vld [vmem:[%s1 + $0x5f0] sm:$0xff]
    %v226 = vld [vmem:[%s1 + $0x5f8] sm:$0xff]
    %v227 = vld [vmem:[%s1 + $0x600] sm:$0xff]
    %v228 = vld [vmem:[%s1 + $0x608] sm:$0xff]
    %v229 = vld [vmem:[%s1 + $0x610] sm:$0xff]
    %v230 = vld [vmem:[%s1 + $0x618] sm:$0xff]
    %v231 = vld [vmem:[%s1 + $0x620] sm:$0xff]
    %v232 = vld [vmem:[%s1 + $0x628] sm:$0xff]
    %v233 = vld [vmem:[%s1 + $0x630] sm:$0xff]
    %v234 = vld [vmem:[%s1 + $0x638] sm:$0xff]
    %v235 = vld [vmem:[%s1 + $0x640] sm:$0xff]
    %v236 = vld [vmem:[%s1 + $0x648] sm:$0xff]
    %v237 = vld [vmem:[%s1 + $0x650] sm:$0xff]
    %v238 = vld [vmem:[%s1 + $0x658] sm:$0xff]
    %v239 = vld [vmem:[%s1 + $0x660] sm:$0xff]
    %v240 = vld [vmem:[%s1 + $0x668] sm:$0xff]
    %v241 = vld [vmem:[%s1 + $0x670] sm:$0xff]
    %v242 = vld [vmem:[%s1 + $0x678] sm:$0xff]
    %v243 = vld [vmem:[%s1 + $0x680] sm:$0xff]
    %v244 = vld [vmem:[%s1 + $0x688] sm:$0xff]
    %v245 = vld [vmem:[%s1 + $0x690] sm:$0xff]
    %v246 = vld [vmem:[%s1 + $0x698] sm:$0xff]
    %v247 = vld [vmem:[%s1 + $0x6a0] sm:$0xff]
    %v248 = vld [vmem:[%s1 + $0x6a8] sm:$0xff]
    %v249 = vld [vmem:[%s1 + $0x6b0] sm:$0xff]
    %v250 = vld [vmem:[%s1 + $0x6b8] sm:$0xff]
    %v251 = vld [vmem:[%s1 + $0x6c0] sm:$0xff]
    %v252 = vld [vmem:[%s1 + $0x6c8] sm:$0xff]
    %v253 = vld [vmem:[%s1 + $0x6d0] sm:$0xff]
    %v254 = vld [vmem:[%s1 + $0x6d8] sm:$0xff]
    %v255 = vld [vmem:[%s1 + $0x6e0] sm:$0xff]
    %v256 = vld [vmem:[%s1 + $0x6e8] sm:$0xff]
    %v257 = vld [vmem:[%s1 + $0x6f0] sm:$0xff]
    %v258 = vld [vmem:[%s1 + $0x6f8] sm:$0xff]
    %v259 = vld [vmem:[%s1 + $0x700] sm:$0xff]
    %v260 = vld [vmem:[%s1 + $0x708] sm:$0xff]
    %v261 = vld [vmem:[%s1 + $0x710] sm:$0xff]
    %v262 = vld [vmem:[%s1 + $0x718] sm:$0xff]
    %v263 = vld [vmem:[%s1 + $0x720] sm:$0xff]
    %v264 = vld [vmem:[%s1 + $0x728] sm:$0xff]
    %v265 = vld [vmem:[%s1 + $0x730] sm:$0xff]
    %v266 = vld [vmem:[%s1 + $0x738] sm:$0xff]
    %v267 = vld [vmem:[%s1 + $0x740] sm:$0xff]
    %v268 = vld [vmem:[%s1 + $0x748] sm:$0xff]
    %v269 = vld [vmem:[%s1 + $0x750] sm:$0xff]
    %v270 = vld [vmem:[%s1 + $0x758] sm:$0xff]
    %v271 = vld [vmem:[%s1 + $0x760] sm:$0xff]
    %v272 = vld [vmem:[%s1 + $0x768] sm:$0xff]
    %v273 = vld [vmem:[%s1 + $0x770] sm:$0xff]
    %v274 = vld [vmem:[%s1 + $0x778] sm:$0xff]
    %v275 = vld [vmem:[%s1 + $0x780] sm:$0xff]
    %v276 = vld [vmem:[%s1 + $0x788] sm:$0xff]
    %v277 = vld [vmem:[%s1 + $0x790] sm:$0xff]
    %v278 = vld [vmem:[%s1 + $0x798] sm:$0xff]
    %v279 = vld [vmem:[%s1 + $0x7a0] sm:$0xff]
    %v280 = vld [vmem:[%s1 + $0x7a8] sm:$0xff]
    %v281 = vld [vmem:[%s1 + $0x7b0] sm:$0xff]
    %v282 = vld [vmem:[%s1 + $0x7b8] sm:$0xff]
    %v283 = vld [vmem:[%s1 + $0x7c0] sm:$0xff]
    %v284 = vld [vmem:[%s1 + $0x7c8] sm:$0xff]
    %v285 = vld [vmem:[%s1 + $0x7d0] sm:$0xff]
    %v286 = vld [vmem:[%s1 + $0x7d8] sm:$0xff]
    %v287 = vld [vmem:[%s1 + $0x7e0] sm:$0xff]
    %v288 = vld [vmem:[%s1 + $0x7e8] sm:$0xff]
    %v289 = vld [vmem:[%s1 + $0x7f0] sm:$0xff]
    %v290 = vld [vmem:[%s1 + $0x7f8] sm:$0xff]
    %v291 = vld [vmem:[%s1 + $0x800] sm:$0xff]
    %v292 = vld [vmem:[%s1 + $0x808] sm:$0xff]
    %v293 = vld [vmem:[%s1 + $0x810] sm:$0xff]
    %v294 = vld [vmem:[%s1 + $0x818] sm:$0xff]
    %v295 = vld [vmem:[%s1 + $0x820] sm:$0xff]
    %v296 = vld [vmem:[%s1 + $0x828] sm:$0xff]
    %v297 = vld [vmem:[%s1 + $0x830] sm:$0xff]
    %v298 = vld [vmem:[%s1 + $0x838] sm:$0xff]
    %v299 = vld [vmem:[%s1 + $0x840] sm:$0xff]
    %v300 = vld [vmem:[%s1 + $0x848] sm:$0xff]
    %v301 = vld [vmem:[%s1 + $0x850] sm:$0xff]
    %v302 = vld [vmem:[%s1 + $0x858] sm:$0xff]
    %v303 = vld [vmem:[%s1 + $0x860] sm:$0xff]
    %v304 = vld [vmem:[%s1 + $0x868] sm:$0xff]
    %v305 = vld [vmem:[%s1 + $0x870] sm:$0xff]
    %v306 = vld [vmem:[%s1 + $0x878] sm:$0xff]
    %v307 = vld [vmem:[%s1 + $0x880] sm:$0xff]
    %v308 = vld [vmem:[%s1 + $0x888] sm:$0xff]
    %v309 = vld [vmem:[%s1 + $0x890] sm:$0xff]
    %v310 = vld [vmem:[%s1 + $0x898] sm:$0xff]
    %v311 = vld [vmem:[%s1 + $0x8a0] sm:$0xff]
    %v312 = vld [vmem:[%s1 + $0x8a8] sm:$0xff]
    %v313 = vld [vmem:[%s1 + $0x8b0] sm:$0xff]
    %v314 = vld [vmem:[%s1 + $0x8b8] sm:$0xff]
    %v315 = vld [vmem:[%s1 + $0x8c0] sm:$0xff]
    %v316 = vld [vmem:[%s1 + $0x8c8] sm:$0xff]
    %v317 = vld [vmem:[%s1 + $0x8d0] sm:$0xff]
    %v318 = vld [vmem:[%s1 + $0x8d8] sm:$0xff]
    %v319 = vld [vmem:[%s1 + $0x8e0] sm:$0xff]
    %v320 = vld [vmem:[%s1 + $0x8e8] sm:$0xff]
    %v321 = vld [vmem:[%s1 + $0x8f0] sm:$0xff]
    %v322 = vld [vmem:[%s1 + $0x8f8] sm:$0xff]
    %v323 = vld [vmem:[%s1 + $0x900] sm:$0xff]
    %v324 = vld [vmem:[%s1 + $0x908] sm:$0xff]
    %v325 = vld [vmem:[%s1 + $0x910] sm:$0xff]
    %v326 = vld [vmem:[%s1 + $0x918] sm:$0xff]
    %v327 = vld [vmem:[%s1 + $0x920] sm:$0xff]
    %v328 = vld [vmem:[%s1 + $0x928] sm:$0xff]
    %v329 = vld [vmem:[%s1 + $0x930] sm:$0xff]
    %v330 = vld [vmem:[%s1 + $0x938] sm:$0xff]
    %v331 = vld [vmem:[%s1 + $0x940] sm:$0xff]
    %v332 = vld [vmem:[%s1 + $0x948] sm:$0xff]
    %v333 = vld [vmem:[%s1 + $0x950] sm:$0xff]
    %v334 = vld [vmem:[%s1 + $0x958] sm:$0xff]
    %v335 = vld [vmem:[%s1 + $0x960] sm:$0xff]
    %v336 = vld [vmem:[%s1 + $0x968] sm:$0xff]
    %v337 = vld [vmem:[%s1 + $0x970] sm:$0xff]
    %v338 = vld [vmem:[%s1 + $0x978] sm:$0xff]
    %v339 = vld [vmem:[%s1 + $0x980] sm:$0xff]
    %v340 = vld [vmem:[%s1 + $0x988] sm:$0xff]
    %v341 = vld [vmem:[%s1 + $0x990] sm:$0xff]
    %v342 = vld [vmem:[%s1 + $0x998] sm:$0xff]
    %v343 = vld [vmem:[%s1 + $0x9a0] sm:$0xff]
    %v344 = vld [vmem:[%s1 + $0x9a8] sm:$0xff]
    %v345 = vld [vmem:[%s1 + $0x9b0] sm:$0xff]
    %v346 = vld [vmem:[%s1 + $0x9b8] sm:$0xff]
    %v347 = vld [vmem:[%s1 + $0x9c0] sm:$0xff]
    %v348 = vld [vmem:[%s1 + $0x9c8] sm:$0xff]
    %v349 = vld [vmem:[%s1 + $0x9d0] sm:$0xff]
    %v350 = vld [vmem:[%s1 + $0x9d8] sm:$0xff]
    %v351 = vld [vmem:[%s1 + $0x9e0] sm:$0xff]
    %v352 = vld [vmem:[%s1 + $0x9e8] sm:$0xff]
    %v353 = vld [vmem:[%s1 + $0x9f0] sm:$0xff]
    %v354 = vld [vmem:[%s1 + $0x9f8] sm:$0xff]
    %v355 = vld [vmem:[%s1 + $0xa00] sm:$0xff]
    %v356 = vld [vmem:[%s1 + $0xa08] sm:$0xff]
    %v357 = vld [vmem:[%s1 + $0xa10] sm:$0xff]
    %v358 = vld [vmem:[%s1 + $0xa18] sm:$0xff]
    %v359 = vld [vmem:[%s1 + $0xa20] sm:$0xff]
    %v360 = vld [vmem:[%s1 + $0xa28] sm:$0xff]
    %v361 = vld [vmem:[%s1 + $0xa30] sm:$0xff]
    %v362 = vld [vmem:[%s1 + $0xa38] sm:$0xff]
    %v363 = vld [vmem:[%s1 + $0xa40] sm:$0xff]
    %v364 = vld [vmem:[%s1 + $0xa48] sm:$0xff]
    %v365 = vld [vmem:[%s1 + $0xa50] sm:$0xff]
    %v366 = vld [vmem:[%s1 + $0xa58] sm:$0xff]
    %v367 = vld [vmem:[%s1 + $0xa60] sm:$0xff]
    %v368 = vld [vmem:[%s1 + $0xa68] sm:$0xff]
    %v369 = vld [vmem:[%s1 + $0xa70] sm:$0xff]
    %v370 = vld [vmem:[%s1 + $0xa78] sm:$0xff]
    %v371 = vld [vmem:[%s1 + $0xa80] sm:$0xff]
    %v372 = vld [vmem:[%s1 + $0xa88] sm:$0xff]
    %v373 = vld [vmem:[%s1 + $0xa90] sm:$0xff]
    %v374 = vld [vmem:[%s1 + $0xa98] sm:$0xff]
    %v375 = vld [vmem:[%s1 + $0xaa0] sm:$0xff]
    %v376 = vld [vmem:[%s1 + $0xaa8] sm:$0xff]
    %v377 = vld [vmem:[%s1 + $0xab0] sm:$0xff]
    %v378 = vld [vmem:[%s1 + $0xab8] sm:$0xff]
    %v379 = vld [vmem:[%s1 + $0xac0] sm:$0xff]
    %v380 = vld [vmem:[%s1 + $0xac8] sm:$0xff]
    %v381 = vld [vmem:[%s1 + $0xad0] sm:$0xff]
    %v382 = vld [vmem:[%s1 + $0xad8] sm:$0xff]
    %v383 = vld [vmem:[%s1 + $0xae0] sm:$0xff]
    %v384 = vld [vmem:[%s1 + $0xae8] sm:$0xff]
    %v385 = vld [vmem:[%s1 + $0xaf0] sm:$0xff]
    %v386 = vld [vmem:[%s1 + $0xaf8] sm:$0xff]
    %v387 = vld [vmem:[%s1 + $0xb00] sm:$0xff]
    %v388 = vld [vmem:[%s1 + $0xb08] sm:$0xff]
    %v389 = vld [vmem:[%s1 + $0xb10] sm:$0xff]
    %v390 = vld [vmem:[%s1 + $0xb18] sm:$0xff]
    %v391 = vld [vmem:[%s1 + $0xb20] sm:$0xff]
    %v392 = vld [vmem:[%s1 + $0xb28] sm:$0xff]
    %v393 = vld [vmem:[%s1 + $0xb30] sm:$0xff]
    %v394 = vld [vmem:[%s1 + $0xb38] sm:$0xff]
    %v395 = vld [vmem:[%s1 + $0xb40] sm:$0xff]
    %v396 = vld [vmem:[%s1 + $0xb48] sm:$0xff]
    %v397 = vld [vmem:[%s1 + $0xb50] sm:$0xff]
    %v398 = vld [vmem:[%s1 + $0xb58] sm:$0xff]
    %v399 = vld [vmem:[%s1 + $0xb60] sm:$0xff]
    %v400 = vld [vmem:[%s1 + $0xb68] sm:$0xff]
    %v401 = vld [vmem:[%s1 + $0xb70] sm:$0xff]
    %v402 = vld [vmem:[%s1 + $0xb78] sm:$0xff]
    %v403 = vld [vmem:[%s1 + $0xb80] sm:$0xff]
    %v404 = vld [vmem:[%s1 + $0xb88] sm:$0xff]
    %v405 = vld [vmem:[%s1 + $0xb90] sm:$0xff]
    %v406 = vld [vmem:[%s1 + $0xb98] sm:$0xff]
    %v407 = vld [vmem:[%s1 + $0xba0] sm:$0xff]
    %v408 = vld [vmem:[%s1 + $0xba8] sm:$0xff]
    %v409 = vld [vmem:[%s1 + $0xbb0] sm:$0xff]
    %v410 = vld [vmem:[%s1 + $0xbb8] sm:$0xff]
    %v411 = vld [vmem:[%s1 + $0xbc0] sm:$0xff]
    %v412 = vld [vmem:[%s1 + $0xbc8] sm:$0xff]
    %v413 = vld [vmem:[%s1 + $0xbd0] sm:$0xff]
    %v414 = vld [vmem:[%s1 + $0xbd8] sm:$0xff]
    %v415 = vld [vmem:[%s1 + $0xbe0] sm:$0xff]
    %v416 = vld [vmem:[%s1 + $0xbe8] sm:$0xff]
    %v417 = vld [vmem:[%s1 + $0xbf0] sm:$0xff]
    %v418 = vld [vmem:[%s1 + $0xbf8] sm:$0xff]
    %v419 = vld [vmem:[%s1 + $0xc00] sm:$0xff]
    %v420 = vld [vmem:[%s1 + $0xc08] sm:$0xff]
    %v421 = vld [vmem:[%s1 + $0xc10] sm:$0xff]
    %v422 = vld [vmem:[%s1 + $0xc18] sm:$0xff]
    %v423 = vld [vmem:[%s1 + $0xc20] sm:$0xff]
    %v424 = vld [vmem:[%s1 + $0xc28] sm:$0xff]
    %v425 = vld [vmem:[%s1 + $0xc30] sm:$0xff]
    %v426 = vld [vmem:[%s1 + $0xc38] sm:$0xff]
    %v427 = vld [vmem:[%s1 + $0xc40] sm:$0xff]
    %v428 = vld [vmem:[%s1 + $0xc48] sm:$0xff]
    %v429 = vld [vmem:[%s1 + $0xc50] sm:$0xff]
    %v430 = vld [vmem:[%s1 + $0xc58] sm:$0xff]
    %v431 = vld [vmem:[%s1 + $0xc60] sm:$0xff]
    %v432 = vld [vmem:[%s1 + $0xc68] sm:$0xff]
    %v433 = vld [vmem:[%s1 + $0xc70] sm:$0xff]
    %v434 = vld [vmem:[%s1 + $0xc78] sm:$0xff]
    %v435 = vld [vmem:[%s1 + $0xc80] sm:$0xff]
    %v436 = vld [vmem:[%s1 + $0xc88] sm:$0xff]
    %v437 = vld [vmem:[%s1 + $0xc90] sm:$0xff]
    %v438 = vld [vmem:[%s1 + $0xc98] sm:$0xff]
    %v439 = vld [vmem:[%s1 + $0xca0] sm:$0xff]
    %v440 = vld [vmem:[%s1 + $0xca8] sm:$0xff]
    %v441 = vld [vmem:[%s1 + $0xcb0] sm:$0xff]
    %v442 = vld [vmem:[%s1 + $0xcb8] sm:$0xff]
    %v443 = vld [vmem:[%s1 + $0xcc0] sm:$0xff]
    %v444 = vld [vmem:[%s1 + $0xcc8] sm:$0xff]
    %v445 = vld [vmem:[%s1 + $0xcd0] sm:$0xff]
    %v446 = vld [vmem:[%s1 + $0xcd8] sm:$0xff]
    %v447 = vld [vmem:[%s1 + $0xce0] sm:$0xff]
    %v448 = vld [vmem:[%s1 + $0xce8] sm:$0xff]
    %v449 = vld [vmem:[%s1 + $0xcf0] sm:$0xff]
    %v450 = vld [vmem:[%s1 + $0xcf8] sm:$0xff]
    %v451 = vld [vmem:[%s1 + $0xd00] sm:$0xff]
    %v452 = vld [vmem:[%s1 + $0xd08] sm:$0xff]
    %v453 = vld [vmem:[%s1 + $0xd10] sm:$0xff]
    %v454 = vld [vmem:[%s1 + $0xd18] sm:$0xff]
    %v455 = vld [vmem:[%s1 + $0xd20] sm:$0xff]
    %v456 = vld [vmem:[%s1 + $0xd28] sm:$0xff]
    %v457 = vld [vmem:[%s1 + $0xd30] sm:$0xff]
    %v458 = vld [vmem:[%s1 + $0xd38] sm:$0xff]
    %v459 = vld [vmem:[%s1 + $0xd40] sm:$0xff]
    %v460 = vld [vmem:[%s1 + $0xd48] sm:$0xff]
    %v461 = vld [vmem:[%s1 + $0xd50] sm:$0xff]
    %v462 = vld [vmem:[%s1 + $0xd58] sm:$0xff]
    %v463 = vld [vmem:[%s1 + $0xd60] sm:$0xff]
    %v464 = vld [vmem:[%s1 + $0xd68] sm:$0xff]
    %v465 = vld [vmem:[%s1 + $0xd70] sm:$0xff]
    %v466 = vld [vmem:[%s1 + $0xd78] sm:$0xff]
    %v467 = vld [vmem:[%s1 + $0xd80] sm:$0xff]
    %v468 = vld [vmem:[%s1 + $0xd88] sm:$0xff]
    %v469 = vld [vmem:[%s1 + $0xd90] sm:$0xff]
    %v470 = vld [vmem:[%s1 + $0xd98] sm:$0xff]
    %v471 = vld [vmem:[%s1 + $0xda0] sm:$0xff]
    %v472 = vld [vmem:[%s1 + $0xda8] sm:$0xff]
    %v473 = vld [vmem:[%s1 + $0xdb0] sm:$0xff]
    %v474 = vld [vmem:[%s1 + $0xdb8] sm:$0xff]
    %v475 = vld [vmem:[%s1 + $0xdc0] sm:$0xff]
    %v476 = vld [vmem:[%s1 + $0xdc8] sm:$0xff]
    %v477 = vld [vmem:[%s1 + $0xdd0] sm:$0xff]
    %v478 = vld [vmem:[%s1 + $0xdd8] sm:$0xff]
    %v479 = vld [vmem:[%s1 + $0xde0] sm:$0xff]
    %v480 = vld [vmem:[%s1 + $0xde8] sm:$0xff]
    %v481 = vld [vmem:[%s1 + $0xdf0] sm:$0xff]
    %v482 = vld [vmem:[%s1 + $0xdf8] sm:$0xff]
    %v483 = vld [vmem:[%s1 + $0xe00] sm:$0xff]
    %v484 = vld [vmem:[%s1 + $0xe08] sm:$0xff]
    %v485 = vld [vmem:[%s1 + $0xe10] sm:$0xff]
    %v486 = vld [vmem:[%s1 + $0xe18] sm:$0xff]
    %v487 = vld [vmem:[%s1 + $0xe20] sm:$0xff]
    %v488 = vld [vmem:[%s1 + $0xe28] sm:$0xff]
    %v489 = vld [vmem:[%s1 + $0xe30] sm:$0xff]
    %v490 = vld [vmem:[%s1 + $0xe38] sm:$0xff]
    %v491 = vld [vmem:[%s1 + $0xe40] sm:$0xff]
    %v492 = vld [vmem:[%s1 + $0xe48] sm:$0xff]
    %v493 = vld [vmem:[%s1 + $0xe50] sm:$0xff]
    %v494 = vld [vmem:[%s1 + $0xe58] sm:$0xff]
    %v495 = vld [vmem:[%s1 + $0xe60] sm:$0xff]
    %v496 = vld [vmem:[%s1 + $0xe68] sm:$0xff]
    %v497 = vld [vmem:[%s1 + $0xe70] sm:$0xff]
    %v498 = vld [vmem:[%s1 + $0xe78] sm:$0xff]
    %v499 = vld [vmem:[%s1 + $0xe80] sm:$0xff]
    %v500 = vld [vmem:[%s1 + $0xe88] sm:$0xff]
    %v501 = vld [vmem:[%s1 + $0xe90] sm:$0xff]
    %v502 = vld [vmem:[%s1 + $0xe98] sm:$0xff]
    %v503 = vld [vmem:[%s1 + $0xea0] sm:$0xff]
    %v504 = vld [vmem:[%s1 + $0xea8] sm:$0xff]
    %v505 = vld [vmem:[%s1 + $0xeb0] sm:$0xff]
    %v506 = vld [vmem:[%s1 + $0xeb8] sm:$0xff]
    %v507 = vld [vmem:[%s1 + $0xec0] sm:$0xff]
    %v508 = vld [vmem:[%s1 + $0xec8] sm:$0xff]
    %v509 = vld [vmem:[%s1 + $0xed0] sm:$0xff]
    %v510 = vld [vmem:[%s1 + $0xed8] sm:$0xff]
    %v511 = vld [vmem:[%s1 + $0xee0] sm:$0xff]
    %v512 = vld [vmem:[%s1 + $0xee8] sm:$0xff]
    %v513 = vld [vmem:[%s1 + $0xef0] sm:$0xff]
    %v514 = vld [vmem:[%s1 + $0xef8] sm:$0xff]
    %v515 = vld [vmem:[%s1 + $0xf00] sm:$0xff]
    %v516 = vld [vmem:[%s1 + $0xf08] sm:$0xff]
    %v517 = vld [vmem:[%s1 + $0xf10] sm:$0xff]
    %v518 = vld [vmem:[%s1 + $0xf18] sm:$0xff]
    %v519 = vld [vmem:[%s1 + $0xf20] sm:$0xff]
    %v520 = vld [vmem:[%s1 + $0xf28] sm:$0xff]
    %v521 = vld [vmem:[%s1 + $0xf30] sm:$0xff]
    %v522 = vld [vmem:[%s1 + $0xf38] sm:$0xff]
    %v523 = vld [vmem:[%s1 + $0xf40] sm:$0xff]
    %v524 = vld [vmem:[%s1 + $0xf48] sm:$0xff]
    %v525 = vld [vmem:[%s1 + $0xf50] sm:$0xff]
    %v526 = vld [vmem:[%s1 + $0xf58] sm:$0xff]
    %v527 = vld [vmem:[%s1 + $0xf60] sm:$0xff]
    %v528 = vld [vmem:[%s1 + $0xf68] sm:$0xff]
    %v529 = vld [vmem:[%s1 + $0xf70] sm:$0xff]
    %v530 = vld [vmem:[%s1 + $0xf78] sm:$0xff]
    %v531 = vld [vmem:[%s1 + $0xf80] sm:$0xff]
    %v532 = vld [vmem:[%s1 + $0xf88] sm:$0xff]
    %v533 = vld [vmem:[%s1 + $0xf90] sm:$0xff]
    %v534 = vld [vmem:[%s1 + $0xf98] sm:$0xff]
    %v535 = vld [vmem:[%s1 + $0xfa0] sm:$0xff]
    %v536 = vld [vmem:[%s1 + $0xfa8] sm:$0xff]
    %v537 = vld [vmem:[%s1 + $0xfb0] sm:$0xff]
    %v538 = vld [vmem:[%s1 + $0xfb8] sm:$0xff]
    %v539 = vld [vmem:[%s1 + $0xfc0] sm:$0xff]
    %v540 = vld [vmem:[%s1 + $0xfc8] sm:$0xff]
    %v541 = vld [vmem:[%s1 + $0xfd0] sm:$0xff]
    %v542 = vld [vmem:[%s1 + $0xfd8] sm:$0xff]
    %v543 = vld [vmem:[%s1 + $0xfe0] sm:$0xff]
    %v544 = vld [vmem:[%s1 + $0xfe8] sm:$0xff]
    %v545 = vld [vmem:[%s1 + $0xff0] sm:$0xff]
    %v546 = vld [vmem:[%s1 + $0xff8] sm:$0xff]
    %v547 = vld [vmem:[%s1 + $0x1000] sm:$0xff]
    %v548 = vld [vmem:[%s1 + $0x1008] sm:$0xff]
    %v549 = vld [vmem:[%s1 + $0x1010] sm:$0xff]
    %v550 = vld [vmem:[%s1 + $0x1018] sm:$0xff]
    %v551 = vld [vmem:[%s1 + $0x1020] sm:$0xff]
    %v552 = vld [vmem:[%s1 + $0x1028] sm:$0xff]
    %v553 = vld [vmem:[%s1 + $0x1030] sm:$0xff]
    %v554 = vld [vmem:[%s1 + $0x1038] sm:$0xff]
    %v555 = vld [vmem:[%s1 + $0x1040] sm:$0xff]
    %v556 = vld [vmem:[%s1 + $0x1048] sm:$0xff]
    %v557 = vld [vmem:[%s1 + $0x1050] sm:$0xff]
    %v558 = vld [vmem:[%s1 + $0x1058] sm:$0xff]
    %v559 = vld [vmem:[%s1 + $0x1060] sm:$0xff]
    %v560 = vld [vmem:[%s1 + $0x1068] sm:$0xff]
    %v561 = vld [vmem:[%s1 + $0x1070] sm:$0xff]
    %v562 = vld [vmem:[%s1 + $0x1078] sm:$0xff]
    %v563 = vld [vmem:[%s1 + $0x1080] sm:$0xff]
    %v564 = vld [vmem:[%s1 + $0x1088] sm:$0xff]
    %v565 = vld [vmem:[%s1 + $0x1090] sm:$0xff]
    %v566 = vld [vmem:[%s1 + $0x1098] sm:$0xff]
    %v567 = vld [vmem:[%s1 + $0x10a0] sm:$0xff]
    %v568 = vld [vmem:[%s1 + $0x10a8] sm:$0xff]
    %v569 = vld [vmem:[%s1 + $0x10b0] sm:$0xff]
    %v570 = vld [vmem:[%s1 + $0x10b8] sm:$0xff]
    %v571 = vld [vmem:[%s1 + $0x10c0] sm:$0xff]
    %v572 = vld [vmem:[%s1 + $0x10c8] sm:$0xff]
    %v573 = vld [vmem:[%s1 + $0x10d0] sm:$0xff]
    %v574 = vld [vmem:[%s1 + $0x10d8] sm:$0xff]
    %v575 = vld [vmem:[%s1 + $0x10e0] sm:$0xff]
    %v576 = vld [vmem:[%s1 + $0x10e8] sm:$0xff]
    %v577 = vld [vmem:[%s1 + $0x10f0] sm:$0xff]
    %v578 = vld [vmem:[%s1 + $0x10f8] sm:$0xff]
    %v579 = vld [vmem:[%s1 + $0x1100] sm:$0xff]
    %v580 = vld [vmem:[%s1 + $0x1108] sm:$0xff]
    %v581 = vld [vmem:[%s1 + $0x1110] sm:$0xff]
    %v582 = vld [vmem:[%s1 + $0x1118] sm:$0xff]
    %v583 = vld [vmem:[%s1 + $0x1120] sm:$0xff]
    %v584 = vld [vmem:[%s1 + $0x1128] sm:$0xff]
    %v585 = vld [vmem:[%s1 + $0x1130] sm:$0xff]
    %v586 = vld [vmem:[%s1 + $0x1138] sm:$0xff]
    %v587 = vld [vmem:[%s1 + $0x1140] sm:$0xff]
    %v588 = vld [vmem:[%s1 + $0x1148] sm:$0xff]
    %v589 = vld [vmem:[%s1 + $0x1150] sm:$0xff]
    %v590 = vld [vmem:[%s1 + $0x1158] sm:$0xff]
    %v591 = vld [vmem:[%s1 + $0x1160] sm:$0xff]
    %v592 = vld [vmem:[%s1 + $0x1168] sm:$0xff]
    %v593 = vld [vmem:[%s1 + $0x1170] sm:$0xff]
    %v594 = vld [vmem:[%s1 + $0x1178] sm:$0xff]
    %v595 = vld [vmem:[%s1 + $0x1180] sm:$0xff]
    %v596 = vld [vmem:[%s1 + $0x1188] sm:$0xff]
    %v597 = vld [vmem:[%s1 + $0x1190] sm:$0xff]
    %v598 = vld [vmem:[%s1 + $0x1198] sm:$0xff]
    %v599 = vld [vmem:[%s1 + $0x11a0] sm:$0xff]
    %v600 = vld [vmem:[%s1 + $0x11a8] sm:$0xff]
    %v601 = vld [vmem:[%s1 + $0x11b0] sm:$0xff]
    %v602 = vld [vmem:[%s1 + $0x11b8] sm:$0xff]
    %v603 = vld [vmem:[%s1 + $0x11c0] sm:$0xff]
    %v604 = vld [vmem:[%s1 + $0x11c8] sm:$0xff]
    %v605 = vld [vmem:[%s1 + $0x11d0] sm:$0xff]
    %v606 = vld [vmem:[%s1 + $0x11d8] sm:$0xff]
    %v607 = vld [vmem:[%s1 + $0x11e0] sm:$0xff]
    %v608 = vld [vmem:[%s1 + $0x11e8] sm:$0xff]
    %v609 = vld [vmem:[%s1 + $0x11f0] sm:$0xff]
    %v610 = vld [vmem:[%s1 + $0x11f8] sm:$0xff]
    %v611 = vld [vmem:[%s1 + $0x1200] sm:$0xff]
    %v612 = vld [vmem:[%s1 + $0x1208] sm:$0xff]
    %v613 = vld [vmem:[%s1 + $0x1210] sm:$0xff]
    %v614 = vld [vmem:[%s1 + $0x1218] sm:$0xff]
    %v615 = vld [vmem:[%s1 + $0x1220] sm:$0xff]
    %v616 = vld [vmem:[%s1 + $0x1228] sm:$0xff]
    %v617 = vld [vmem:[%s1 + $0x1230] sm:$0xff]
    %v618 = vld [vmem:[%s1 + $0x1238] sm:$0xff]
    %v619 = vld [vmem:[%s1 + $0x1240] sm:$0xff]
    %v620 = vld [vmem:[%s1 + $0x1248] sm:$0xff]
    %v621 = vld [vmem:[%s1 + $0x1250] sm:$0xff]
    %v622 = vld [vmem:[%s1 + $0x1258] sm:$0xff]
    %v623 = vld [vmem:[%s1 + $0x1260] sm:$0xff]
    %v624 = vld [vmem:[%s1 + $0x1268] sm:$0xff]
    %v625 = vld [vmem:[%s1 + $0x1270] sm:$0xff]
    %v626 = vld [vmem:[%s1 + $0x1278] sm:$0xff]
    %v627 = vld [vmem:[%s1 + $0x1280] sm:$0xff]
    %v628 = vld [vmem:[%s1 + $0x1288] sm:$0xff]
    %v629 = vld [vmem:[%s1 + $0x1290] sm:$0xff]
    %v630 = vld [vmem:[%s1 + $0x1298] sm:$0xff]
    %v631 = vld [vmem:[%s1 + $0x12a0] sm:$0xff]
    %v632 = vld [vmem:[%s1 + $0x12a8] sm:$0xff]
    %v633 = vld [vmem:[%s1 + $0x12b0] sm:$0xff]
    %v634 = vld [vmem:[%s1 + $0x12b8] sm:$0xff]
    %v635 = vld [vmem:[%s1 + $0x12c0] sm:$0xff]
    %v636 = vld [vmem:[%s1 + $0x12c8] sm:$0xff]
    %v637 = vld [vmem:[%s1 + $0x12d0] sm:$0xff]
    %v638 = vld [vmem:[%s1 + $0x12d8] sm:$0xff]
    %v639 = vld [vmem:[%s1 + $0x12e0] sm:$0xff]
    %v640 = vld [vmem:[%s1 + $0x12e8] sm:$0xff]
    %v641 = vld [vmem:[%s1 + $0x12f0] sm:$0xff]
    %v642 = vld [vmem:[%s1 + $0x12f8] sm:$0xff]
    %v643 = vld [vmem:[%s1 + $0x1300] sm:$0xff]
    %v644 = vld [vmem:[%s1 + $0x1308] sm:$0xff]
    %v645 = vld [vmem:[%s1 + $0x1310] sm:$0xff]
    %v646 = vld [vmem:[%s1 + $0x1318] sm:$0xff]
    %v647 = vld [vmem:[%s1 + $0x1320] sm:$0xff]
    %v648 = vld [vmem:[%s1 + $0x1328] sm:$0xff]
    %v649 = vld [vmem:[%s1 + $0x1330] sm:$0xff]
    %v650 = vld [vmem:[%s1 + $0x1338] sm:$0xff]
    %v651 = vld [vmem:[%s1 + $0x1340] sm:$0xff]
    %v652 = vld [vmem:[%s1 + $0x1348] sm:$0xff]
    %v653 = vld [vmem:[%s1 + $0x1350] sm:$0xff]
    %v654 = vld [vmem:[%s1 + $0x1358] sm:$0xff]
    %v655 = vld [vmem:[%s1 + $0x1360] sm:$0xff]
    %v656 = vld [vmem:[%s1 + $0x1368] sm:$0xff]
    %v657 = vld [vmem:[%s1 + $0x1370] sm:$0xff]
    %v658 = vld [vmem:[%s1 + $0x1378] sm:$0xff]
    %v659 = vld [vmem:[%s1 + $0x1380] sm:$0xff]
    %v660 = vld [vmem:[%s1 + $0x1388] sm:$0xff]
    %v661 = vld [vmem:[%s1 + $0x1390] sm:$0xff]
    %v662 = vld [vmem:[%s1 + $0x1398] sm:$0xff]
    %v663 = vld [vmem:[%s1 + $0x13a0] sm:$0xff]
    %v664 = vld [vmem:[%s1 + $0x13a8] sm:$0xff]
    %v665 = vld [vmem:[%s1 + $0x13b0] sm:$0xff]
    %v666 = vld [vmem:[%s1 + $0x13b8] sm:$0xff]
    %v667 = vld [vmem:[%s1 + $0x13c0] sm:$0xff]
    %v668 = vld [vmem:[%s1 + $0x13c8] sm:$0xff]
    %v669 = vld [vmem:[%s1 + $0x13d0] sm:$0xff]
    %v670 = vld [vmem:[%s1 + $0x13d8] sm:$0xff]
    %v671 = vld [vmem:[%s1 + $0x13e0] sm:$0xff]
    %v672 = vld [vmem:[%s1 + $0x13e8] sm:$0xff]
    %v673 = vld [vmem:[%s1 + $0x13f0] sm:$0xff]
    %v674 = vld [vmem:[%s1 + $0x13f8] sm:$0xff]
    %v675 = vld [vmem:[%s1 + $0x1400] sm:$0xff]
    %v676 = vld [vmem:[%s1 + $0x1408] sm:$0xff]
    %v677 = vld [vmem:[%s1 + $0x1410] sm:$0xff]
    %v678 = vld [vmem:[%s1 + $0x1418] sm:$0xff]
    %v679 = vld [vmem:[%s1 + $0x1420] sm:$0xff]
    %v680 = vld [vmem:[%s1 + $0x1428] sm:$0xff]
    %v681 = vld [vmem:[%s1 + $0x1430] sm:$0xff]
    %v682 = vld [vmem:[%s1 + $0x1438] sm:$0xff]
    %v683 = vld [vmem:[%s1 + $0x1440] sm:$0xff]
    %v684 = vld [vmem:[%s1 + $0x1448] sm:$0xff]
    %v685 = vld [vmem:[%s1 + $0x1450] sm:$0xff]
    %v686 = vld [vmem:[%s1 + $0x1458] sm:$0xff]
    %v687 = vld [vmem:[%s1 + $0x1460] sm:$0xff]
    %v688 = vld [vmem:[%s1 + $0x1468] sm:$0xff]
    %v689 = vld [vmem:[%s1 + $0x1470] sm:$0xff]
    %v690 = vld [vmem:[%s1 + $0x1478] sm:$0xff]
    %v691 = vld [vmem:[%s1 + $0x1480] sm:$0xff]
    %v692 = vld [vmem:[%s1 + $0x1488] sm:$0xff]
    %v693 = vld [vmem:[%s1 + $0x1490] sm:$0xff]
    %v694 = vld [vmem:[%s1 + $0x1498] sm:$0xff]
    %v695 = vld [vmem:[%s1 + $0x14a0] sm:$0xff]
    %v696 = vld [vmem:[%s1 + $0x14a8] sm:$0xff]
    %v697 = vld [vmem:[%s1 + $0x14b0] sm:$0xff]
    %v698 = vld [vmem:[%s1 + $0x14b8] sm:$0xff]
    %v699 = vld [vmem:[%s1 + $0x14c0] sm:$0xff]
    %v700 = vld [vmem:[%s1 + $0x14c8] sm:$0xff]
    %v701 = vld [vmem:[%s1 + $0x14d0] sm:$0xff]
    %v702 = vld [vmem:[%s1 + $0x14d8] sm:$0xff]
    %v703 = vld [vmem:[%s1 + $0x14e0] sm:$0xff]
    %v704 = vld [vmem:[%s1 + $0x14e8] sm:$0xff]
    %v705 = vld [vmem:[%s1 + $0x14f0] sm:$0xff]
    %v706 = vld [vmem:[%s1 + $0x14f8] sm:$0xff]
    %v707 = vld [vmem:[%s1 + $0x1500] sm:$0xff]
    %v708 = vld [vmem:[%s1 + $0x1508] sm:$0xff]
    %v709 = vld [vmem:[%s1 + $0x1510] sm:$0xff]
    %v710 = vld [vmem:[%s1 + $0x1518] sm:$0xff]
    %v711 = vld [vmem:[%s1 + $0x1520] sm:$0xff]
    %v712 = vld [vmem:[%s1 + $0x1528] sm:$0xff]
    %v713 = vld [vmem:[%s1 + $0x1530] sm:$0xff]
    %v714 = vld [vmem:[%s1 + $0x1538] sm:$0xff]
    %v715 = vld [vmem:[%s1 + $0x1540] sm:$0xff]
    %v716 = vld [vmem:[%s1 + $0x1548] sm:$0xff]
    %v717 = vld [vmem:[%s1 + $0x1550] sm:$0xff]
    %v718 = vld [vmem:[%s1 + $0x1558] sm:$0xff]
    %v719 = vld [vmem:[%s1 + $0x1560] sm:$0xff]
    %v720 = vld [vmem:[%s1 + $0x1568] sm:$0xff]
    %v721 = vld [vmem:[%s1 + $0x1570] sm:$0xff]
    %v722 = vld [vmem:[%s1 + $0x1578] sm:$0xff]
    %v723 = vld [vmem:[%s1 + $0x1580] sm:$0xff]
    %v724 = vld [vmem:[%s1 + $0x1588] sm:$0xff]
    %v725 = vld [vmem:[%s1 + $0x1590] sm:$0xff]
    %v726 = vld [vmem:[%s1 + $0x1598] sm:$0xff]
    %v727 = vld [vmem:[%s1 + $0x15a0] sm:$0xff]
    %v728 = vld [vmem:[%s1 + $0x15a8] sm:$0xff]
    %v729 = vld [vmem:[%s1 + $0x15b0] sm:$0xff]
    %v730 = vld [vmem:[%s1 + $0x15b8] sm:$0xff]
    %v731 = vld [vmem:[%s1 + $0x15c0] sm:$0xff]
    %v732 = vld [vmem:[%s1 + $0x15c8] sm:$0xff]
    %v733 = vld [vmem:[%s1 + $0x15d0] sm:$0xff]
    %v734 = vld [vmem:[%s1 + $0x15d8] sm:$0xff]
    %v735 = vld [vmem:[%s1 + $0x15e0] sm:$0xff]
    %v736 = vld [vmem:[%s1 + $0x15e8] sm:$0xff]
    %v737 = vld [vmem:[%s1 + $0x15f0] sm:$0xff]
    %v738 = vld [vmem:[%s1 + $0x15f8] sm:$0xff]
    %v739 = vld [vmem:[%s1 + $0x1600] sm:$0xff]
    %v740 = vld [vmem:[%s1 + $0x1608] sm:$0xff]
    %v741 = vld [vmem:[%s1 + $0x1610] sm:$0xff]
    %v742 = vld [vmem:[%s1 + $0x1618] sm:$0xff]
    %v743 = vld [vmem:[%s1 + $0x1620] sm:$0xff]
    %v744 = vld [vmem:[%s1 + $0x1628] sm:$0xff]
    %v745 = vld [vmem:[%s1 + $0x1630] sm:$0xff]
    %v746 = vld [vmem:[%s1 + $0x1638] sm:$0xff]
    %v747 = vld [vmem:[%s1 + $0x1640] sm:$0xff]
    %v748 = vld [vmem:[%s1 + $0x1648] sm:$0xff]
    %v749 = vld [vmem:[%s1 + $0x1650] sm:$0xff]
    %v750 = vld [vmem:[%s1 + $0x1658] sm:$0xff]
    %v751 = vld [vmem:[%s1 + $0x1660] sm:$0xff]
    %v752 = vld [vmem:[%s1 + $0x1668] sm:$0xff]
    %v753 = vld [vmem:[%s1 + $0x1670] sm:$0xff]
    %v754 = vld [vmem:[%s1 + $0x1678] sm:$0xff]
    %v755 = vld [vmem:[%s1 + $0x1680] sm:$0xff]
    %v756 = vld [vmem:[%s1 + $0x1688] sm:$0xff]
    %v757 = vld [vmem:[%s1 + $0x1690] sm:$0xff]
    %v758 = vld [vmem:[%s1 + $0x1698] sm:$0xff]
    %v759 = vld [vmem:[%s1 + $0x16a0] sm:$0xff]
    %v760 = vld [vmem:[%s1 + $0x16a8] sm:$0xff]
    %v761 = vld [vmem:[%s1 + $0x16b0] sm:$0xff]
    %v762 = vld [vmem:[%s1 + $0x16b8] sm:$0xff]
    %v763 = vld [vmem:[%s1 + $0x16c0] sm:$0xff]
    %v764 = vld [vmem:[%s1 + $0x16c8] sm:$0xff]
    %v765 = vld [vmem:[%s1 + $0x16d0] sm:$0xff]
    %v766 = vld [vmem:[%s1 + $0x16d8] sm:$0xff]
    %v767 = vld [vmem:[%s1 + $0x16e0] sm:$0xff]
    %v768 = vld [vmem:[%s1 + $0x16e8] sm:$0xff]
    %v769 = vld [vmem:[%s1 + $0x16f0] sm:$0xff]
    %v770 = vld [vmem:[%s1 + $0x16f8] sm:$0xff]
    %v771 = vld [vmem:[%s1 + $0x1700] sm:$0xff]
    %v772 = vld [vmem:[%s1 + $0x1708] sm:$0xff]
    %v773 = vld [vmem:[%s1 + $0x1710] sm:$0xff]
    %v774 = vld [vmem:[%s1 + $0x1718] sm:$0xff]
    %v775 = vld [vmem:[%s1 + $0x1720] sm:$0xff]
    %v776 = vld [vmem:[%s1 + $0x1728] sm:$0xff]
    %v777 = vld [vmem:[%s1 + $0x1730] sm:$0xff]
    %v778 = vld [vmem:[%s1 + $0x1738] sm:$0xff]
    %v779 = vld [vmem:[%s1 + $0x1740] sm:$0xff]
    %v780 = vld [vmem:[%s1 + $0x1748] sm:$0xff]
    %v781 = vld [vmem:[%s1 + $0x1750] sm:$0xff]
    %v782 = vld [vmem:[%s1 + $0x1758] sm:$0xff]
    %v783 = vld [vmem:[%s1 + $0x1760] sm:$0xff]
    %v784 = vld [vmem:[%s1 + $0x1768] sm:$0xff]
    %v785 = vld [vmem:[%s1 + $0x1770] sm:$0xff]
    %v786 = vld [vmem:[%s1 + $0x1778] sm:$0xff]
    %v787 = vld [vmem:[%s1 + $0x1780] sm:$0xff]
    %v788 = vld [vmem:[%s1 + $0x1788] sm:$0xff]
    %v789 = vld [vmem:[%s1 + $0x1790] sm:$0xff]
    %v790 = vld [vmem:[%s1 + $0x1798] sm:$0xff]
    %v791 = vld [vmem:[%s1 + $0x17a0] sm:$0xff]
    %v792 = vld [vmem:[%s1 + $0x17a8] sm:$0xff]
    %v793 = vld [vmem:[%s1 + $0x17b0] sm:$0xff]
    %v794 = vld [vmem:[%s1 + $0x17b8] sm:$0xff]
    %v795 = vld [vmem:[%s1 + $0x17c0] sm:$0xff]
    %v796 = vld [vmem:[%s1 + $0x17c8] sm:$0xff]
    %v797 = vld [vmem:[%s1 + $0x17d0] sm:$0xff]
    %v798 = vld [vmem:[%s1 + $0x17d8] sm:$0xff]
    %v799 = vld [vmem:[%s1 + $0x17e0] sm:$0xff]
    %v800 = vld [vmem:[%s1 + $0x17e8] sm:$0xff]
    %v801 = vld [vmem:[%s1 + $0x17f0] sm:$0xff]
    %v802 = vld [vmem:[%s1 + $0x17f8] sm:$0xff]
    %v803 = vld [vmem:[%s1 + $0x1800] sm:$0xff]
    %v804 = vld [vmem:[%s1 + $0x1808] sm:$0xff]
    %v805 = vld [vmem:[%s1 + $0x1810] sm:$0xff]
    %v806 = vld [vmem:[%s1 + $0x1818] sm:$0xff]
    %v807 = vld [vmem:[%s1 + $0x1820] sm:$0xff]
    %v808 = vld [vmem:[%s1 + $0x1828] sm:$0xff]
    %v809 = vld [vmem:[%s1 + $0x1830] sm:$0xff]
    %v810 = vld [vmem:[%s1 + $0x1838] sm:$0xff]
    %v811 = vld [vmem:[%s1 + $0x1840] sm:$0xff]
    %v812 = vld [vmem:[%s1 + $0x1848] sm:$0xff]
    %v813 = vld [vmem:[%s1 + $0x1850] sm:$0xff]
    %v814 = vld [vmem:[%s1 + $0x1858] sm:$0xff]
    %v815 = vld [vmem:[%s1 + $0x1860] sm:$0xff]
    %v816 = vld [vmem:[%s1 + $0x1868] sm:$0xff]
    %v817 = vld [vmem:[%s1 + $0x1870] sm:$0xff]
    %v818 = vld [vmem:[%s1 + $0x1878] sm:$0xff]
    %v819 = vld [vmem:[%s1 + $0x1880] sm:$0xff]
    %v820 = vld [vmem:[%s1 + $0x1888] sm:$0xff]
    %v821 = vld [vmem:[%s1 + $0x1890] sm:$0xff]
    %v822 = vld [vmem:[%s1 + $0x1898] sm:$0xff]
    %v823 = vld [vmem:[%s1 + $0x18a0] sm:$0xff]
    %v824 = vld [vmem:[%s1 + $0x18a8] sm:$0xff]
    %v825 = vld [vmem:[%s1 + $0x18b0] sm:$0xff]
    %v826 = vld [vmem:[%s1 + $0x18b8] sm:$0xff]
    %v827 = vld [vmem:[%s1 + $0x18c0] sm:$0xff]
    %v828 = vld [vmem:[%s1 + $0x18c8] sm:$0xff]
    %v829 = vld [vmem:[%s1 + $0x18d0] sm:$0xff]
    %v830 = vld [vmem:[%s1 + $0x18d8] sm:$0xff]
    %v831 = vld [vmem:[%s1 + $0x18e0] sm:$0xff]
    %v832 = vld [vmem:[%s1 + $0x18e8] sm:$0xff]
    %v833 = vld [vmem:[%s1 + $0x18f0] sm:$0xff]
    %v834 = vld [vmem:[%s1 + $0x18f8] sm:$0xff]
    %v835 = vld [vmem:[%s1 + $0x1900] sm:$0xff]
    %v836 = vld [vmem:[%s1 + $0x1908] sm:$0xff]
    %v837 = vld [vmem:[%s1 + $0x1910] sm:$0xff]
    %v838 = vld [vmem:[%s1 + $0x1918] sm:$0xff]
    %v839 = vld [vmem:[%s1 + $0x1920] sm:$0xff]
    %v840 = vld [vmem:[%s1 + $0x1928] sm:$0xff]
    %v841 = vld [vmem:[%s1 + $0x1930] sm:$0xff]
    %v842 = vld [vmem:[%s1 + $0x1938] sm:$0xff]
    %v843 = vld [vmem:[%s1 + $0x1940] sm:$0xff]
    %v844 = vld [vmem:[%s1 + $0x1948] sm:$0xff]
    %v845 = vld [vmem:[%s1 + $0x1950] sm:$0xff]
    %v846 = vld [vmem:[%s1 + $0x1958] sm:$0xff]
    %v847 = vld [vmem:[%s1 + $0x1960] sm:$0xff]
    %v848 = vld [vmem:[%s1 + $0x1968] sm:$0xff]
    %v849 = vld [vmem:[%s1 + $0x1970] sm:$0xff]
    %v850 = vld [vmem:[%s1 + $0x1978] sm:$0xff]
    %v851 = vld [vmem:[%s1 + $0x1980] sm:$0xff]
    %v852 = vld [vmem:[%s1 + $0x1988] sm:$0xff]
    %v853 = vld [vmem:[%s1 + $0x1990] sm:$0xff]
    %v854 = vld [vmem:[%s1 + $0x1998] sm:$0xff]
    %v855 = vld [vmem:[%s1 + $0x19a0] sm:$0xff]
    %v856 = vld [vmem:[%s1 + $0x19a8] sm:$0xff]
    %v857 = vld [vmem:[%s1 + $0x19b0] sm:$0xff]
    %v858 = vld [vmem:[%s1 + $0x19b8] sm:$0xff]
    %v859 = vld [vmem:[%s1 + $0x19c0] sm:$0xff]
    %v860 = vld [vmem:[%s1 + $0x19c8] sm:$0xff]
    %v861 = vld [vmem:[%s1 + $0x19d0] sm:$0xff]
    %v862 = vld [vmem:[%s1 + $0x19d8] sm:$0xff]
    %v863 = vld [vmem:[%s1 + $0x19e0] sm:$0xff]
    %v864 = vld [vmem:[%s1 + $0x19e8] sm:$0xff]
    %v865 = vld [vmem:[%s1 + $0x19f0] sm:$0xff]
    %v866 = vld [vmem:[%s1 + $0x19f8] sm:$0xff]
    %v867 = vld [vmem:[%s1 + $0x1a00] sm:$0xff]
    %v868 = vld [vmem:[%s1 + $0x1a08] sm:$0xff]
    %v869 = vld [vmem:[%s1 + $0x1a10] sm:$0xff]
    %v870 = vld [vmem:[%s1 + $0x1a18] sm:$0xff]
    %v871 = vld [vmem:[%s1 + $0x1a20] sm:$0xff]
    %v872 = vld [vmem:[%s1 + $0x1a28] sm:$0xff]
    %v873 = vld [vmem:[%s1 + $0x1a30] sm:$0xff]
    %v874 = vld [vmem:[%s1 + $0x1a38] sm:$0xff]
    %v875 = vld [vmem:[%s1 + $0x1a40] sm:$0xff]
    %v876 = vld [vmem:[%s1 + $0x1a48] sm:$0xff]
    %v877 = vld [vmem:[%s1 + $0x1a50] sm:$0xff]
    %v878 = vld [vmem:[%s1 + $0x1a58] sm:$0xff]
    %v879 = vld [vmem:[%s1 + $0x1a60] sm:$0xff]
    %v880 = vld [vmem:[%s1 + $0x1a68] sm:$0xff]
    %v881 = vld [vmem:[%s1 + $0x1a70] sm:$0xff]
    %v882 = vld [vmem:[%s1 + $0x1a78] sm:$0xff]
    %v883 = vld [vmem:[%s1 + $0x1a80] sm:$0xff]
    %v884 = vld [vmem:[%s1 + $0x1a88] sm:$0xff]
    %v885 = vld [vmem:[%s1 + $0x1a90] sm:$0xff]
    %v886 = vld [vmem:[%s1 + $0x1a98] sm:$0xff]
    %v887 = vld [vmem:[%s1 + $0x1aa0] sm:$0xff]
    %v888 = vld [vmem:[%s1 + $0x1aa8] sm:$0xff]
    %v889 = vld [vmem:[%s1 + $0x1ab0] sm:$0xff]
    %v890 = vld [vmem:[%s1 + $0x1ab8] sm:$0xff]
    %v891 = vld [vmem:[%s1 + $0x1ac0] sm:$0xff]
    %v892 = vld [vmem:[%s1 + $0x1ac8] sm:$0xff]
    %v893 = vld [vmem:[%s1 + $0x1ad0] sm:$0xff]
    %v894 = vld [vmem:[%s1 + $0x1ad8] sm:$0xff]
    %v895 = vld [vmem:[%s1 + $0x1ae0] sm:$0xff]
    %v896 = vld [vmem:[%s1 + $0x1ae8] sm:$0xff]
    %v897 = vld [vmem:[%s1 + $0x1af0] sm:$0xff]
    %v898 = vld [vmem:[%s1 + $0x1af8] sm:$0xff]
    %v899 = vld [vmem:[%s1 + $0x1b00] sm:$0xff]
    %v900 = vld [vmem:[%s1 + $0x1b08] sm:$0xff]
    %v901 = vld [vmem:[%s1 + $0x1b10] sm:$0xff]
    %v902 = vld [vmem:[%s1 + $0x1b18] sm:$0xff]
    %v903 = vld [vmem:[%s1 + $0x1b20] sm:$0xff]
    %v904 = vld [vmem:[%s1 + $0x1b28] sm:$0xff]
    %v905 = vld [vmem:[%s1 + $0x1b30] sm:$0xff]
    %v906 = vld [vmem:[%s1 + $0x1b38] sm:$0xff]
    %v907 = vld [vmem:[%s1 + $0x1b40] sm:$0xff]
    %v908 = vld [vmem:[%s1 + $0x1b48] sm:$0xff]
    %v909 = vld [vmem:[%s1 + $0x1b50] sm:$0xff]
    %v910 = vld [vmem:[%s1 + $0x1b58] sm:$0xff]
    %v911 = vld [vmem:[%s1 + $0x1b60] sm:$0xff]
    %v912 = vld [vmem:[%s1 + $0x1b68] sm:$0xff]
    %v913 = vld [vmem:[%s1 + $0x1b70] sm:$0xff]
    %v914 = vld [vmem:[%s1 + $0x1b78] sm:$0xff]
    %v915 = vld [vmem:[%s1 + $0x1b80] sm:$0xff]
    %v916 = vld [vmem:[%s1 + $0x1b88] sm:$0xff]
    %v917 = vld [vmem:[%s1 + $0x1b90] sm:$0xff]
    %v918 = vld [vmem:[%s1 + $0x1b98] sm:$0xff]
    %v919 = vld [vmem:[%s1 + $0x1ba0] sm:$0xff]
    %v920 = vld [vmem:[%s1 + $0x1ba8] sm:$0xff]
    %v921 = vld [vmem:[%s1 + $0x1bb0] sm:$0xff]
    %v922 = vld [vmem:[%s1 + $0x1bb8] sm:$0xff]
    %v923 = vld [vmem:[%s1 + $0x1bc0] sm:$0xff]
    %v924 = vld [vmem:[%s1 + $0x1bc8] sm:$0xff]
    %v925 = vld [vmem:[%s1 + $0x1bd0] sm:$0xff]
    %v926 = vld [vmem:[%s1 + $0x1bd8] sm:$0xff]
    %v927 = vld [vmem:[%s1 + $0x1be0] sm:$0xff]
    %v928 = vld [vmem:[%s1 + $0x1be8] sm:$0xff]
    %v929 = vld [vmem:[%s1 + $0x1bf0] sm:$0xff]
    %v930 = vld [vmem:[%s1 + $0x1bf8] sm:$0xff]
    %v931 = vld [vmem:[%s1 + $0x1c00] sm:$0xff]
    %v932 = vld [vmem:[%s1 + $0x1c08] sm:$0xff]
    %v933 = vld [vmem:[%s1 + $0x1c10] sm:$0xff]
    %v934 = vld [vmem:[%s1 + $0x1c18] sm:$0xff]
    %v935 = vld [vmem:[%s1 + $0x1c20] sm:$0xff]
    %v936 = vld [vmem:[%s1 + $0x1c28] sm:$0xff]
    %v937 = vld [vmem:[%s1 + $0x1c30] sm:$0xff]
    %v938 = vld [vmem:[%s1 + $0x1c38] sm:$0xff]
    %v939 = vld [vmem:[%s1 + $0x1c40] sm:$0xff]
    %v940 = vld [vmem:[%s1 + $0x1c48] sm:$0xff]
    %v941 = vld [vmem:[%s1 + $0x1c50] sm:$0xff]
    %v942 = vld [vmem:[%s1 + $0x1c58] sm:$0xff]
    %v943 = vld [vmem:[%s1 + $0x1c60] sm:$0xff]
    %v944 = vld [vmem:[%s1 + $0x1c68] sm:$0xff]
    %v945 = vld [vmem:[%s1 + $0x1c70] sm:$0xff]
    %v946 = vld [vmem:[%s1 + $0x1c78] sm:$0xff]
    %v947 = vld [vmem:[%s1 + $0x1c80] sm:$0xff]
    %v948 = vld [vmem:[%s1 + $0x1c88] sm:$0xff]
    %v949 = vld [vmem:[%s1 + $0x1c90] sm:$0xff]
    %v950 = vld [vmem:[%s1 + $0x1c98] sm:$0xff]
    %v951 = vld [vmem:[%s1 + $0x1ca0] sm:$0xff]
    %v952 = vld [vmem:[%s1 + $0x1ca8] sm:$0xff]
    %v953 = vld [vmem:[%s1 + $0x1cb0] sm:$0xff]
    %v954 = vld [vmem:[%s1 + $0x1cb8] sm:$0xff]
    %v955 = vld [vmem:[%s1 + $0x1cc0] sm:$0xff]
    %v956 = vld [vmem:[%s1 + $0x1cc8] sm:$0xff]
    %v957 = vld [vmem:[%s1 + $0x1cd0] sm:$0xff]
    %v958 = vld [vmem:[%s1 + $0x1cd8] sm:$0xff]
    %v959 = vld [vmem:[%s1 + $0x1ce0] sm:$0xff]
    %v960 = vld [vmem:[%s1 + $0x1ce8] sm:$0xff]
    %v961 = vld [vmem:[%s1 + $0x1cf0] sm:$0xff]
    %v962 = vld [vmem:[%s1 + $0x1cf8] sm:$0xff]
    %v963 = vld [vmem:[%s1 + $0x1d00] sm:$0xff]
    %v964 = vld [vmem:[%s1 + $0x1d08] sm:$0xff]
    %v965 = vld [vmem:[%s1 + $0x1d10] sm:$0xff]
    %v966 = vld [vmem:[%s1 + $0x1d18] sm:$0xff]
    %v967 = vld [vmem:[%s1 + $0x1d20] sm:$0xff]
    %v968 = vld [vmem:[%s1 + $0x1d28] sm:$0xff]
    %v969 = vld [vmem:[%s1 + $0x1d30] sm:$0xff]
    %v970 = vld [vmem:[%s1 + $0x1d38] sm:$0xff]
    %v971 = vld [vmem:[%s1 + $0x1d40] sm:$0xff]
    %v972 = vld [vmem:[%s1 + $0x1d48] sm:$0xff]
    %v973 = vld [vmem:[%s1 + $0x1d50] sm:$0xff]
    %v974 = vld [vmem:[%s1 + $0x1d58] sm:$0xff]
    %v975 = vld [vmem:[%s1 + $0x1d60] sm:$0xff]
    %v976 = vld [vmem:[%s1 + $0x1d68] sm:$0xff]
    %v977 = vld [vmem:[%s1 + $0x1d70] sm:$0xff]
    %v978 = vld [vmem:[%s1 + $0x1d78] sm:$0xff]
    %v979 = vld [vmem:[%s1 + $0x1d80] sm:$0xff]
    %v980 = vld [vmem:[%s1 + $0x1d88] sm:$0xff]
    %v981 = vld [vmem:[%s1 + $0x1d90] sm:$0xff]
    %v982 = vld [vmem:[%s1 + $0x1d98] sm:$0xff]
    %v983 = vld [vmem:[%s1 + $0x1da0] sm:$0xff]
    %v984 = vld [vmem:[%s1 + $0x1da8] sm:$0xff]
    %v985 = vld [vmem:[%s1 + $0x1db0] sm:$0xff]
    %v986 = vld [vmem:[%s1 + $0x1db8] sm:$0xff]
    %v987 = vld [vmem:[%s1 + $0x1dc0] sm:$0xff]
    %v988 = vld [vmem:[%s1 + $0x1dc8] sm:$0xff]
    %v989 = vld [vmem:[%s1 + $0x1dd0] sm:$0xff]
    %v990 = vld [vmem:[%s1 + $0x1dd8] sm:$0xff]
    %v991 = vld [vmem:[%s1 + $0x1de0] sm:$0xff]
    %v992 = vld [vmem:[%s1 + $0x1de8] sm:$0xff]
    %v993 = vld [vmem:[%s1 + $0x1df0] sm:$0xff]
    %v994 = vld [vmem:[%s1 + $0x1df8] sm:$0xff]
    %v995 = vld [vmem:[%s1 + $0x1e00] sm:$0xff]
    %v996 = vld [vmem:[%s1 + $0x1e08] sm:$0xff]
    %v997 = vld [vmem:[%s1 + $0x1e10] sm:$0xff]
    %v998 = vld [vmem:[%s1 + $0x1e18] sm:$0xff]
    %v999 = vld [vmem:[%s1 + $0x1e20] sm:$0xff]
    %v1000 = vld [vmem:[%s1 + $0x1e28] sm:$0xff]
    %v1001 = vld [vmem:[%s1 + $0x1e30] sm:$0xff]
    %v1002 = vld [vmem:[%s1 + $0x1e38] sm:$0xff]
    %v1003 = vld [vmem:[%s1 + $0x1e40] sm:$0xff]
    %v1004 = vld [vmem:[%s1 + $0x1e48] sm:$0xff]
    %v1005 = vld [vmem:[%s1 + $0x1e50] sm:$0xff]
    %v1006 = vld [vmem:[%s1 + $0x1e58] sm:$0xff]
    %v1007 = vld [vmem:[%s1 + $0x1e60] sm:$0xff]
    %v1008 = vld [vmem:[%s1 + $0x1e68] sm:$0xff]
    %v1009 = vld [vmem:[%s1 + $0x1e70] sm:$0xff]
    %v1010 = vld [vmem:[%s1 + $0x1e78] sm:$0xff]
    %v1011 = vld [vmem:[%s1 + $0x1e80] sm:$0xff]
    %v1012 = vld [vmem:[%s1 + $0x1e88] sm:$0xff]
    %v1013 = vld [vmem:[%s1 + $0x1e90] sm:$0xff]
    %v1014 = vld [vmem:[%s1 + $0x1e98] sm:$0xff]
    %v1015 = vld [vmem:[%s1 + $0x1ea0] sm:$0xff]
    %v1016 = vld [vmem:[%s1 + $0x1ea8] sm:$0xff]
    %v1017 = vld [vmem:[%s1 + $0x1eb0] sm:$0xff]
    %v1018 = vld [vmem:[%s1 + $0x1eb8] sm:$0xff]
    %v1019 = vld [vmem:[%s1 + $0x1ec0] sm:$0xff]
    %v1020 = vld [vmem:[%s1 + $0x1ec8] sm:$0xff]
    %v1021 = vld [vmem:[%s1 + $0x1ed0] sm:$0xff]
    %v1022 = vld [vmem:[%s1 + $0x1ed8] sm:$0xff]
    %v1023 = vld [vmem:[%s1 + $0x1ee0] sm:$0xff]
    %v1024 = vld [vmem:[%s1 + $0x1ee8] sm:$0xff]
    %v1025 = vld [vmem:[%s1 + $0x1ef0] sm:$0xff]
    %v1026 = vld [vmem:[%s1 + $0x1ef8] sm:$0xff]
    %v1027 = vld [vmem:[%s1 + $0x1f00] sm:$0xff]
    %v1028 = vld [vmem:[%s1 + $0x1f08] sm:$0xff]
    %v1029 = vld [vmem:[%s1 + $0x1f10] sm:$0xff]
    %v1030 = vld [vmem:[%s1 + $0x1f18] sm:$0xff]
    %v1031 = vld [vmem:[%s1 + $0x1f20] sm:$0xff]
    %v1032 = vld [vmem:[%s1 + $0x1f28] sm:$0xff]
    %v1033 = vld [vmem:[%s1 + $0x1f30] sm:$0xff]
    %v1034 = vld [vmem:[%s1 + $0x1f38] sm:$0xff]
    %v1035 = vld [vmem:[%s1 + $0x1f40] sm:$0xff]
    %v1036 = vld [vmem:[%s1 + $0x1f48] sm:$0xff]
    %v1037 = vld [vmem:[%s1 + $0x1f50] sm:$0xff]
    %v1038 = vld [vmem:[%s1 + $0x1f58] sm:$0xff]
    %v1039 = vld [vmem:[%s1 + $0x1f60] sm:$0xff]
    %v1040 = vld [vmem:[%s1 + $0x1f68] sm:$0xff]
    %v1041 = vld [vmem:[%s1 + $0x1f70] sm:$0xff]
    %v1042 = vld [vmem:[%s1 + $0x1f78] sm:$0xff]
    %v1043 = vld [vmem:[%s1 + $0x1f80] sm:$0xff]
    %v1044 = vld [vmem:[%s1 + $0x1f88] sm:$0xff]
    %v1045 = vld [vmem:[%s1 + $0x1f90] sm:$0xff]
    %v1046 = vld [vmem:[%s1 + $0x1f98] sm:$0xff]
    %v1047 = vld [vmem:[%s1 + $0x1fa0] sm:$0xff]
    %v1048 = vld [vmem:[%s1 + $0x1fa8] sm:$0xff]
    %v1049 = vld [vmem:[%s1 + $0x1fb0] sm:$0xff]
    %v1050 = vld [vmem:[%s1 + $0x1fb8] sm:$0xff]
    %v1051 = vld [vmem:[%s1 + $0x1fc0] sm:$0xff]
    %v1052 = vld [vmem:[%s1 + $0x1fc8] sm:$0xff]
    %v1053 = vld [vmem:[%s1 + $0x1fd0] sm:$0xff]
    %v1054 = vld [vmem:[%s1 + $0x1fd8] sm:$0xff]
    %v1055 = vld [vmem:[%s1 + $0x1fe0] sm:$0xff]
    %v1056 = vld [vmem:[%s1 + $0x1fe8] sm:$0xff]
    %v1057 = vld [vmem:[%s1 + $0x1ff0] sm:$0xff]
    %v1058 = vld [vmem:[%s1 + $0x1ff8] sm:$0xff]
    %v1059 = vld [vmem:[%s2] sm:$0x3]
    %v1061 = vperm.slane %v1059, 0
    %v1062 = vperm.slane %v1059, 1
    %1073 = vst [vmem:[#allocation1] ss:$4 sm:$0xff] %v27
    %s1074 = scalar_lea.vmem [#allocation1], 32
    %1075 = vst [vmem:[%s1074] ss:$4 sm:$0xff] %v28
    %v1076 = vld.sshfl [vmem:[#allocation1] sm:$0xff pattern:$0x73625140]
    %v1077 = vld.sshfl [vmem:[#allocation1 + $0x8] sm:$0xff pattern:$0x73625140]
    %v1078 = vld.sshfl [vmem:[#allocation1 + $0x10] sm:$0xff pattern:$0x73625140]
    %v1079 = vld.sshfl [vmem:[#allocation1 + $0x18] sm:$0xff pattern:$0x73625140]
    %v1080 = vld.sshfl [vmem:[#allocation1 + $0x20] sm:$0xff pattern:$0x73625140]
    %v1081 = vld.sshfl [vmem:[#allocation1 + $0x28] sm:$0xff pattern:$0x73625140]
    %v1082 = vld.sshfl [vmem:[#allocation1 + $0x30] sm:$0xff pattern:$0x73625140]
    %v1083 = vld.sshfl [vmem:[#allocation1 + $0x38] sm:$0xff pattern:$0x73625140]
    %1084 = vst [vmem:[#allocation1] ss:$4 sm:$0xff] %v29
    %1085 = vst [vmem:[%s1074] ss:$4 sm:$0xff] %v30
    %v1086 = vld.sshfl [vmem:[#allocation1] sm:$0xff pattern:$0x73625140]
    %v1087 = vld.sshfl [vmem:[#allocation1 + $0x8] sm:$0xff pattern:$0x73625140]
    %v1088 = vld.sshfl [vmem:[#allocation1 + $0x10] sm:$0xff pattern:$0x73625140]
    %v1089 = vld.sshfl [vmem:[#allocation1 + $0x18] sm:$0xff pattern:$0x73625140]
    %v1090 = vld.sshfl [vmem:[#allocation1 + $0x20] sm:$0xff pattern:$0x73625140]
    %v1091 = vld.sshfl [vmem:[#allocation1 + $0x28] sm:$0xff pattern:$0x73625140]
    %v1092 = vld.sshfl [vmem:[#allocation1 + $0x30] sm:$0xff pattern:$0x73625140]
    %v1093 = vld.sshfl [vmem:[#allocation1 + $0x38] sm:$0xff pattern:$0x73625140]
    %1094 = vst [vmem:[#allocation1] ss:$4 sm:$0xff] %v31
    %1095 = vst [vmem:[%s1074] ss:$4 sm:$0xff] %v32
    %v1096 = vld.sshfl [vmem:[#allocation1] sm:$0xff pattern:$0x73625140]
    %v1097 = vld.sshfl [vmem:[#allocation1 + $0x8] sm:$0xff pattern:$0x73625140]
    %v1098 = vld.sshfl [vmem:[#allocation1 + $0x10] sm:$0xff pattern:$0x73625140]
    %v1099 = vld.sshfl [vmem:[#allocation1 + $0x18] sm:$0xff pattern:$0x73625140]
    %v1100 = vld.sshfl [vmem:[#allocation1 + $0x20] sm:$0xff pattern:$0x73625140]
    %v1101 = vld.sshfl [vmem:[#allocation1 + $0x28] sm:$0xff pattern:$0x73625140]
    %v1102 = vld.sshfl [vmem:[#allocation1 + $0x30] sm:$0xff pattern:$0x73625140]
    %v1103 = vld.sshfl [vmem:[#allocation1 + $0x38] sm:$0xff pattern:$0x73625140]
    %1104 = vst [vmem:[#allocation1] ss:$4 sm:$0xff] %v33
    %1105 = vst [vmem:[%s1074] ss:$4 sm:$0xff] %v34
    %v1106 = vld.sshfl [vmem:[#allocation1] sm:$0xff pattern:$0x73625140]
    %v1107 = vld.sshfl [vmem:[#allocation1 + $0x8] sm:$0xff pattern:$0x73625140]
    %v1108 = vld.sshfl [vmem:[#allocation1 + $0x10] sm:$0xff pattern:$0x73625140]
    %v1109 = vld.sshfl [vmem:[#allocation1 + $0x18] sm:$0xff pattern:$0x73625140]
    %v1110 = vld.sshfl [vmem:[#allocation1 + $0x20] sm:$0xff pattern:$0x73625140]
    %v1111 = vld.sshfl [vmem:[#allocation1 + $0x28] sm:$0xff pattern:$0x73625140]
    %v1112 = vld.sshfl [vmem:[#allocation1 + $0x30] sm:$0xff pattern:$0x73625140]
    %v1113 = vld.sshfl [vmem:[#allocation1 + $0x38] sm:$0xff pattern:$0x73625140]
    %1146 = vmatpush.msra.mxu0 %v65
    %1147 = vmatpush.msra.mxu0 %v63
    %1148 = vmatpush.msra.mxu0 %v61
    %1149 = vmatpush.msra.mxu0 %v59
    %1150 = vmatpush.msra.mxu0 %v57
    %1151 = vmatpush.msra.mxu0 %v55
    %1152 = vmatpush.msra.mxu0 %v53
    %1153 = vmatpush.msra.mxu0 %v51
    %1154 = vmatpush.msra.mxu0 %v49
    %1155 = vmatpush.msra.mxu0 %v47
    %1156 = vmatpush.msra.mxu0 %v45
    %1157 = vmatpush.msra.mxu0 %v43
    %1158 = vmatpush.msra.mxu0 %v41
    %1159 = vmatpush.msra.mxu0 %v39
    %1160 = vmatpush.msra.mxu0 %v37
    %1161 = vmatpush.msra.mxu0 %v35
    %1162 = vmatmul.f32.gmra.mxu0 %v1076
    %v1163 = vpop.f32.mrf.mxu0
    %v1164 = vadd.f32 %v1061, %v1163
    %1165 = vdwg.mxu0
    %1166 = vmatpush.msra.mxu0 %v97
    %1167 = vmatpush.msra.mxu0 %v95
    %1168 = vmatpush.msra.mxu0 %v93
    %1169 = vmatpush.msra.mxu0 %v91
    %1170 = vmatpush.msra.mxu0 %v89
    %1171 = vmatpush.msra.mxu0 %v87
    %1172 = vmatpush.msra.mxu0 %v85
    %1173 = vmatpush.msra.mxu0 %v83
    %1174 = vmatpush.msra.mxu0 %v81
    %1175 = vmatpush.msra.mxu0 %v79
    %1176 = vmatpush.msra.mxu0 %v77
    %1177 = vmatpush.msra.mxu0 %v75
    %1178 = vmatpush.msra.mxu0 %v73
    %1179 = vmatpush.msra.mxu0 %v71
    %1180 = vmatpush.msra.mxu0 %v69
    %1181 = vmatpush.msra.mxu0 %v67
    %1182 = vmatmul.f32.gmra.mxu0 %v1077
    %v1183 = vpop.f32.mrf.mxu0
    %v1184 = vadd.f32 %v1164, %v1183
    %1185 = vdwg.mxu0
    %1186 = vmatpush.msra.mxu0 %v129
    %1187 = vmatpush.msra.mxu0 %v127
    %1188 = vmatpush.msra.mxu0 %v125
    %1189 = vmatpush.msra.mxu0 %v123
    %1190 = vmatpush.msra.mxu0 %v121
    %1191 = vmatpush.msra.mxu0 %v119
    %1192 = vmatpush.msra.mxu0 %v117
    %1193 = vmatpush.msra.mxu0 %v115
    %1194 = vmatpush.msra.mxu0 %v113
    %1195 = vmatpush.msra.mxu0 %v111
    %1196 = vmatpush.msra.mxu0 %v109
    %1197 = vmatpush.msra.mxu0 %v107
    %1198 = vmatpush.msra.mxu0 %v105
    %1199 = vmatpush.msra.mxu0 %v103
    %1200 = vmatpush.msra.mxu0 %v101
    %1201 = vmatpush.msra.mxu0 %v99
    %1202 = vmatmul.f32.gmra.mxu0 %v1078
    %v1203 = vpop.f32.mrf.mxu0
    %v1204 = vadd.f32 %v1184, %v1203
    %1205 = vdwg.mxu0
    %1206 = vmatpush.msra.mxu0 %v161
    %1207 = vmatpush.msra.mxu0 %v159
    %1208 = vmatpush.msra.mxu0 %v157
    %1209 = vmatpush.msra.mxu0 %v155
    %1210 = vmatpush.msra.mxu0 %v153
    %1211 = vmatpush.msra.mxu0 %v151
    %1212 = vmatpush.msra.mxu0 %v149
    %1213 = vmatpush.msra.mxu0 %v147
    %1214 = vmatpush.msra.mxu0 %v145
    %1215 = vmatpush.msra.mxu0 %v143
    %1216 = vmatpush.msra.mxu0 %v141
    %1217 = vmatpush.msra.mxu0 %v139
    %1218 = vmatpush.msra.mxu0 %v137
    %1219 = vmatpush.msra.mxu0 %v135
    %1220 = vmatpush.msra.mxu0 %v133
    %1221 = vmatpush.msra.mxu0 %v131
    %1222 = vmatmul.f32.gmra.mxu0 %v1079
    %v1223 = vpop.f32.mrf.mxu0
    %v1224 = vadd.f32 %v1204, %v1223
    %1225 = vdwg.mxu0
    %1226 = vmatpush.msra.mxu0 %v193
    %1227 = vmatpush.msra.mxu0 %v191
    %1228 = vmatpush.msra.mxu0 %v189
    %1229 = vmatpush.msra.mxu0 %v187
    %1230 = vmatpush.msra.mxu0 %v185
    %1231 = vmatpush.msra.mxu0 %v183
    %1232 = vmatpush.msra.mxu0 %v181
    %1233 = vmatpush.msra.mxu0 %v179
    %1234 = vmatpush.msra.mxu0 %v177
    %1235 = vmatpush.msra.mxu0 %v175
    %1236 = vmatpush.msra.mxu0 %v173
    %1237 = vmatpush.msra.mxu0 %v171
    %1238 = vmatpush.msra.mxu0 %v169
    %1239 = vmatpush.msra.mxu0 %v167
    %1240 = vmatpush.msra.mxu0 %v165
    %1241 = vmatpush.msra.mxu0 %v163
    %1242 = vmatmul.f32.gmra.mxu0 %v1080
    %v1243 = vpop.f32.mrf.mxu0
    %v1244 = vadd.f32 %v1224, %v1243
    %1245 = vdwg.mxu0
    %1246 = vmatpush.msra.mxu0 %v225
    %1247 = vmatpush.msra.mxu0 %v223
    %1248 = vmatpush.msra.mxu0 %v221
    %1249 = vmatpush.msra.mxu0 %v219
    %1250 = vmatpush.msra.mxu0 %v217
    %1251 = vmatpush.msra.mxu0 %v215
    %1252 = vmatpush.msra.mxu0 %v213
    %1253 = vmatpush.msra.mxu0 %v211
    %1254 = vmatpush.msra.mxu0 %v209
    %1255 = vmatpush.msra.mxu0 %v207
    %1256 = vmatpush.msra.mxu0 %v205
    %1257 = vmatpush.msra.mxu0 %v203
    %1258 = vmatpush.msra.mxu0 %v201
    %1259 = vmatpush.msra.mxu0 %v199
    %1260 = vmatpush.msra.mxu0 %v197
    %1261 = vmatpush.msra.mxu0 %v195
    %1262 = vmatmul.f32.gmra.mxu0 %v1081
    %v1263 = vpop.f32.mrf.mxu0
    %v1264 = vadd.f32 %v1244, %v1263
    %1265 = vdwg.mxu0
    %1266 = vmatpush.msra.mxu0 %v257
    %1267 = vmatpush.msra.mxu0 %v255
    %1268 = vmatpush.msra.mxu0 %v253
    %1269 = vmatpush.msra.mxu0 %v251
    %1270 = vmatpush.msra.mxu0 %v249
    %1271 = vmatpush.msra.mxu0 %v247
    %1272 = vmatpush.msra.mxu0 %v245
    %1273 = vmatpush.msra.mxu0 %v243
    %1274 = vmatpush.msra.mxu0 %v241
    %1275 = vmatpush.msra.mxu0 %v239
    %1276 = vmatpush.msra.mxu0 %v237
    %1277 = vmatpush.msra.mxu0 %v235
    %1278 = vmatpush.msra.mxu0 %v233
    %1279 = vmatpush.msra.mxu0 %v231
    %1280 = vmatpush.msra.mxu0 %v229
    %1281 = vmatpush.msra.mxu0 %v227
    %1282 = vmatmul.f32.gmra.mxu0 %v1082
    %v1283 = vpop.f32.mrf.mxu0
    %v1284 = vadd.f32 %v1264, %v1283
    %1285 = vdwg.mxu0
    %1286 = vmatpush.msra.mxu0 %v289
    %1287 = vmatpush.msra.mxu0 %v287
    %1288 = vmatpush.msra.mxu0 %v285
    %1289 = vmatpush.msra.mxu0 %v283
    %1290 = vmatpush.msra.mxu0 %v281
    %1291 = vmatpush.msra.mxu0 %v279
    %1292 = vmatpush.msra.mxu0 %v277
    %1293 = vmatpush.msra.mxu0 %v275
    %1294 = vmatpush.msra.mxu0 %v273
    %1295 = vmatpush.msra.mxu0 %v271
    %1296 = vmatpush.msra.mxu0 %v269
    %1297 = vmatpush.msra.mxu0 %v267
    %1298 = vmatpush.msra.mxu0 %v265
    %1299 = vmatpush.msra.mxu0 %v263
    %1300 = vmatpush.msra.mxu0 %v261
    %1301 = vmatpush.msra.mxu0 %v259
    %1302 = vmatmul.f32.gmra.mxu0 %v1083
    %v1303 = vpop.f32.mrf.mxu0
    %v1304 = vadd.f32 %v1284, %v1303
    %1305 = vdwg.mxu0
    %1306 = vmatpush.msra.mxu0 %v321
    %1307 = vmatpush.msra.mxu0 %v319
    %1308 = vmatpush.msra.mxu0 %v317
    %1309 = vmatpush.msra.mxu0 %v315
    %1310 = vmatpush.msra.mxu0 %v313
    %1311 = vmatpush.msra.mxu0 %v311
    %1312 = vmatpush.msra.mxu0 %v309
    %1313 = vmatpush.msra.mxu0 %v307
    %1314 = vmatpush.msra.mxu0 %v305
    %1315 = vmatpush.msra.mxu0 %v303
    %1316 = vmatpush.msra.mxu0 %v301
    %1317 = vmatpush.msra.mxu0 %v299
    %1318 = vmatpush.msra.mxu0 %v297
    %1319 = vmatpush.msra.mxu0 %v295
    %1320 = vmatpush.msra.mxu0 %v293
    %1321 = vmatpush.msra.mxu0 %v291
    %1322 = vmatmul.f32.gmra.mxu0 %v1086
    %v1323 = vpop.f32.mrf.mxu0
    %v1324 = vadd.f32 %v1304, %v1323
    %1325 = vdwg.mxu0
    %1326 = vmatpush.msra.mxu0 %v353
    %1327 = vmatpush.msra.mxu0 %v351
    %1328 = vmatpush.msra.mxu0 %v349
    %1329 = vmatpush.msra.mxu0 %v347
    %1330 = vmatpush.msra.mxu0 %v345
    %1331 = vmatpush.msra.mxu0 %v343
    %1332 = vmatpush.msra.mxu0 %v341
    %1333 = vmatpush.msra.mxu0 %v339
    %1334 = vmatpush.msra.mxu0 %v337
    %1335 = vmatpush.msra.mxu0 %v335
    %1336 = vmatpush.msra.mxu0 %v333
    %1337 = vmatpush.msra.mxu0 %v331
    %1338 = vmatpush.msra.mxu0 %v329
    %1339 = vmatpush.msra.mxu0 %v327
    %1340 = vmatpush.msra.mxu0 %v325
    %1341 = vmatpush.msra.mxu0 %v323
    %1342 = vmatmul.f32.gmra.mxu0 %v1087
    %v1343 = vpop.f32.mrf.mxu0
    %v1344 = vadd.f32 %v1324, %v1343
    %1345 = vdwg.mxu0
    %1346 = vmatpush.msra.mxu0 %v385
    %1347 = vmatpush.msra.mxu0 %v383
    %1348 = vmatpush.msra.mxu0 %v381
    %1349 = vmatpush.msra.mxu0 %v379
    %1350 = vmatpush.msra.mxu0 %v377
    %1351 = vmatpush.msra.mxu0 %v375
    %1352 = vmatpush.msra.mxu0 %v373
    %1353 = vmatpush.msra.mxu0 %v371
    %1354 = vmatpush.msra.mxu0 %v369
    %1355 = vmatpush.msra.mxu0 %v367
    %1356 = vmatpush.msra.mxu0 %v365
    %1357 = vmatpush.msra.mxu0 %v363
    %1358 = vmatpush.msra.mxu0 %v361
    %1359 = vmatpush.msra.mxu0 %v359
    %1360 = vmatpush.msra.mxu0 %v357
    %1361 = vmatpush.msra.mxu0 %v355
    %1362 = vmatmul.f32.gmra.mxu0 %v1088
    %v1363 = vpop.f32.mrf.mxu0
    %v1364 = vadd.f32 %v1344, %v1363
    %1365 = vdwg.mxu0
    %1366 = vmatpush.msra.mxu0 %v417
    %1367 = vmatpush.msra.mxu0 %v415
    %1368 = vmatpush.msra.mxu0 %v413
    %1369 = vmatpush.msra.mxu0 %v411
    %1370 = vmatpush.msra.mxu0 %v409
    %1371 = vmatpush.msra.mxu0 %v407
    %1372 = vmatpush.msra.mxu0 %v405
    %1373 = vmatpush.msra.mxu0 %v403
    %1374 = vmatpush.msra.mxu0 %v401
    %1375 = vmatpush.msra.mxu0 %v399
    %1376 = vmatpush.msra.mxu0 %v397
    %1377 = vmatpush.msra.mxu0 %v395
    %1378 = vmatpush.msra.mxu0 %v393
    %1379 = vmatpush.msra.mxu0 %v391
    %1380 = vmatpush.msra.mxu0 %v389
    %1381 = vmatpush.msra.mxu0 %v387
    %1382 = vmatmul.f32.gmra.mxu0 %v1089
    %v1383 = vpop.f32.mrf.mxu0
    %v1384 = vadd.f32 %v1364, %v1383
    %1385 = vdwg.mxu0
    %1386 = vmatpush.msra.mxu0 %v449
    %1387 = vmatpush.msra.mxu0 %v447
    %1388 = vmatpush.msra.mxu0 %v445
    %1389 = vmatpush.msra.mxu0 %v443
    %1390 = vmatpush.msra.mxu0 %v441
    %1391 = vmatpush.msra.mxu0 %v439
    %1392 = vmatpush.msra.mxu0 %v437
    %1393 = vmatpush.msra.mxu0 %v435
    %1394 = vmatpush.msra.mxu0 %v433
    %1395 = vmatpush.msra.mxu0 %v431
    %1396 = vmatpush.msra.mxu0 %v429
    %1397 = vmatpush.msra.mxu0 %v427
    %1398 = vmatpush.msra.mxu0 %v425
    %1399 = vmatpush.msra.mxu0 %v423
    %1400 = vmatpush.msra.mxu0 %v421
    %1401 = vmatpush.msra.mxu0 %v419
    %1402 = vmatmul.f32.gmra.mxu0 %v1090
    %v1403 = vpop.f32.mrf.mxu0
    %v1404 = vadd.f32 %v1384, %v1403
    %1405 = vdwg.mxu0
    %1406 = vmatpush.msra.mxu0 %v481
    %1407 = vmatpush.msra.mxu0 %v479
    %1408 = vmatpush.msra.mxu0 %v477
    %1409 = vmatpush.msra.mxu0 %v475
    %1410 = vmatpush.msra.mxu0 %v473
    %1411 = vmatpush.msra.mxu0 %v471
    %1412 = vmatpush.msra.mxu0 %v469
    %1413 = vmatpush.msra.mxu0 %v467
    %1414 = vmatpush.msra.mxu0 %v465
    %1415 = vmatpush.msra.mxu0 %v463
    %1416 = vmatpush.msra.mxu0 %v461
    %1417 = vmatpush.msra.mxu0 %v459
    %1418 = vmatpush.msra.mxu0 %v457
    %1419 = vmatpush.msra.mxu0 %v455
    %1420 = vmatpush.msra.mxu0 %v453
    %1421 = vmatpush.msra.mxu0 %v451
    %1422 = vmatmul.f32.gmra.mxu0 %v1091
    %v1423 = vpop.f32.mrf.mxu0
    %v1424 = vadd.f32 %v1404, %v1423
    %1425 = vdwg.mxu0
    %1426 = vmatpush.msra.mxu0 %v513
    %1427 = vmatpush.msra.mxu0 %v511
    %1428 = vmatpush.msra.mxu0 %v509
    %1429 = vmatpush.msra.mxu0 %v507
    %1430 = vmatpush.msra.mxu0 %v505
    %1431 = vmatpush.msra.mxu0 %v503
    %1432 = vmatpush.msra.mxu0 %v501
    %1433 = vmatpush.msra.mxu0 %v499
    %1434 = vmatpush.msra.mxu0 %v497
    %1435 = vmatpush.msra.mxu0 %v495
    %1436 = vmatpush.msra.mxu0 %v493
    %1437 = vmatpush.msra.mxu0 %v491
    %1438 = vmatpush.msra.mxu0 %v489
    %1439 = vmatpush.msra.mxu0 %v487
    %1440 = vmatpush.msra.mxu0 %v485
    %1441 = vmatpush.msra.mxu0 %v483
    %1442 = vmatmul.f32.gmra.mxu0 %v1092
    %v1443 = vpop.f32.mrf.mxu0
    %v1444 = vadd.f32 %v1424, %v1443
    %1445 = vdwg.mxu0
    %1446 = vmatpush.msra.mxu0 %v545
    %1447 = vmatpush.msra.mxu0 %v543
    %1448 = vmatpush.msra.mxu0 %v541
    %1449 = vmatpush.msra.mxu0 %v539
    %1450 = vmatpush.msra.mxu0 %v537
    %1451 = vmatpush.msra.mxu0 %v535
    %1452 = vmatpush.msra.mxu0 %v533
    %1453 = vmatpush.msra.mxu0 %v531
    %1454 = vmatpush.msra.mxu0 %v529
    %1455 = vmatpush.msra.mxu0 %v527
    %1456 = vmatpush.msra.mxu0 %v525
    %1457 = vmatpush.msra.mxu0 %v523
    %1458 = vmatpush.msra.mxu0 %v521
    %1459 = vmatpush.msra.mxu0 %v519
    %1460 = vmatpush.msra.mxu0 %v517
    %1461 = vmatpush.msra.mxu0 %v515
    %1462 = vmatmul.f32.gmra.mxu0 %v1093
    %v1463 = vpop.f32.mrf.mxu0
    %v1464 = vadd.f32 %v1444, %v1463
    %1465 = vdwg.mxu0
    %1466 = vmatpush.msra.mxu0 %v577
    %1467 = vmatpush.msra.mxu0 %v575
    %1468 = vmatpush.msra.mxu0 %v573
    %1469 = vmatpush.msra.mxu0 %v571
    %1470 = vmatpush.msra.mxu0 %v569
    %1471 = vmatpush.msra.mxu0 %v567
    %1472 = vmatpush.msra.mxu0 %v565
    %1473 = vmatpush.msra.mxu0 %v563
    %1474 = vmatpush.msra.mxu0 %v561
    %1475 = vmatpush.msra.mxu0 %v559
    %1476 = vmatpush.msra.mxu0 %v557
    %1477 = vmatpush.msra.mxu0 %v555
    %1478 = vmatpush.msra.mxu0 %v553
    %1479 = vmatpush.msra.mxu0 %v551
    %1480 = vmatpush.msra.mxu0 %v549
    %1481 = vmatpush.msra.mxu0 %v547
    %1482 = vmatmul.f32.gmra.mxu0 %v1096
    %v1483 = vpop.f32.mrf.mxu0
    %v1484 = vadd.f32 %v1464, %v1483
    %1485 = vdwg.mxu0
    %1486 = vmatpush.msra.mxu0 %v609
    %1487 = vmatpush.msra.mxu0 %v607
    %1488 = vmatpush.msra.mxu0 %v605
    %1489 = vmatpush.msra.mxu0 %v603
    %1490 = vmatpush.msra.mxu0 %v601
    %1491 = vmatpush.msra.mxu0 %v599
    %1492 = vmatpush.msra.mxu0 %v597
    %1493 = vmatpush.msra.mxu0 %v595
    %1494 = vmatpush.msra.mxu0 %v593
    %1495 = vmatpush.msra.mxu0 %v591
    %1496 = vmatpush.msra.mxu0 %v589
    %1497 = vmatpush.msra.mxu0 %v587
    %1498 = vmatpush.msra.mxu0 %v585
    %1499 = vmatpush.msra.mxu0 %v583
    %1500 = vmatpush.msra.mxu0 %v581
    %1501 = vmatpush.msra.mxu0 %v579
    %1502 = vmatmul.f32.gmra.mxu0 %v1097
    %v1503 = vpop.f32.mrf.mxu0
    %v1504 = vadd.f32 %v1484, %v1503
    %1505 = vdwg.mxu0
    %1506 = vmatpush.msra.mxu0 %v641
    %1507 = vmatpush.msra.mxu0 %v639
    %1508 = vmatpush.msra.mxu0 %v637
    %1509 = vmatpush.msra.mxu0 %v635
    %1510 = vmatpush.msra.mxu0 %v633
    %1511 = vmatpush.msra.mxu0 %v631
    %1512 = vmatpush.msra.mxu0 %v629
    %1513 = vmatpush.msra.mxu0 %v627
    %1514 = vmatpush.msra.mxu0 %v625
    %1515 = vmatpush.msra.mxu0 %v623
    %1516 = vmatpush.msra.mxu0 %v621
    %1517 = vmatpush.msra.mxu0 %v619
    %1518 = vmatpush.msra.mxu0 %v617
    %1519 = vmatpush.msra.mxu0 %v615
    %1520 = vmatpush.msra.mxu0 %v613
    %1521 = vmatpush.msra.mxu0 %v611
    %1522 = vmatmul.f32.gmra.mxu0 %v1098
    %v1523 = vpop.f32.mrf.mxu0
    %v1524 = vadd.f32 %v1504, %v1523
    %1525 = vdwg.mxu0
    %1526 = vmatpush.msra.mxu0 %v673
    %1527 = vmatpush.msra.mxu0 %v671
    %1528 = vmatpush.msra.mxu0 %v669
    %1529 = vmatpush.msra.mxu0 %v667
    %1530 = vmatpush.msra.mxu0 %v665
    %1531 = vmatpush.msra.mxu0 %v663
    %1532 = vmatpush.msra.mxu0 %v661
    %1533 = vmatpush.msra.mxu0 %v659
    %1534 = vmatpush.msra.mxu0 %v657
    %1535 = vmatpush.msra.mxu0 %v655
    %1536 = vmatpush.msra.mxu0 %v653
    %1537 = vmatpush.msra.mxu0 %v651
    %1538 = vmatpush.msra.mxu0 %v649
    %1539 = vmatpush.msra.mxu0 %v647
    %1540 = vmatpush.msra.mxu0 %v645
    %1541 = vmatpush.msra.mxu0 %v643
    %1542 = vmatmul.f32.gmra.mxu0 %v1099
    %v1543 = vpop.f32.mrf.mxu0
    %v1544 = vadd.f32 %v1524, %v1543
    %1545 = vdwg.mxu0
    %1546 = vmatpush.msra.mxu0 %v705
    %1547 = vmatpush.msra.mxu0 %v703
    %1548 = vmatpush.msra.mxu0 %v701
    %1549 = vmatpush.msra.mxu0 %v699
    %1550 = vmatpush.msra.mxu0 %v697
    %1551 = vmatpush.msra.mxu0 %v695
    %1552 = vmatpush.msra.mxu0 %v693
    %1553 = vmatpush.msra.mxu0 %v691
    %1554 = vmatpush.msra.mxu0 %v689
    %1555 = vmatpush.msra.mxu0 %v687
    %1556 = vmatpush.msra.mxu0 %v685
    %1557 = vmatpush.msra.mxu0 %v683
    %1558 = vmatpush.msra.mxu0 %v681
    %1559 = vmatpush.msra.mxu0 %v679
    %1560 = vmatpush.msra.mxu0 %v677
    %1561 = vmatpush.msra.mxu0 %v675
    %1562 = vmatmul.f32.gmra.mxu0 %v1100
    %v1563 = vpop.f32.mrf.mxu0
    %v1564 = vadd.f32 %v1544, %v1563
    %1565 = vdwg.mxu0
    %1566 = vmatpush.msra.mxu0 %v737
    %1567 = vmatpush.msra.mxu0 %v735
    %1568 = vmatpush.msra.mxu0 %v733
    %1569 = vmatpush.msra.mxu0 %v731
    %1570 = vmatpush.msra.mxu0 %v729
    %1571 = vmatpush.msra.mxu0 %v727
    %1572 = vmatpush.msra.mxu0 %v725
    %1573 = vmatpush.msra.mxu0 %v723
    %1574 = vmatpush.msra.mxu0 %v721
    %1575 = vmatpush.msra.mxu0 %v719
    %1576 = vmatpush.msra.mxu0 %v717
    %1577 = vmatpush.msra.mxu0 %v715
    %1578 = vmatpush.msra.mxu0 %v713
    %1579 = vmatpush.msra.mxu0 %v711
    %1580 = vmatpush.msra.mxu0 %v709
    %1581 = vmatpush.msra.mxu0 %v707
    %1582 = vmatmul.f32.gmra.mxu0 %v1101
    %v1583 = vpop.f32.mrf.mxu0
    %v1584 = vadd.f32 %v1564, %v1583
    %1585 = vdwg.mxu0
    %1586 = vmatpush.msra.mxu0 %v769
    %1587 = vmatpush.msra.mxu0 %v767
    %1588 = vmatpush.msra.mxu0 %v765
    %1589 = vmatpush.msra.mxu0 %v763
    %1590 = vmatpush.msra.mxu0 %v761
    %1591 = vmatpush.msra.mxu0 %v759
    %1592 = vmatpush.msra.mxu0 %v757
    %1593 = vmatpush.msra.mxu0 %v755
    %1594 = vmatpush.msra.mxu0 %v753
    %1595 = vmatpush.msra.mxu0 %v751
    %1596 = vmatpush.msra.mxu0 %v749
    %1597 = vmatpush.msra.mxu0 %v747
    %1598 = vmatpush.msra.mxu0 %v745
    %1599 = vmatpush.msra.mxu0 %v743
    %1600 = vmatpush.msra.mxu0 %v741
    %1601 = vmatpush.msra.mxu0 %v739
    %1602 = vmatmul.f32.gmra.mxu0 %v1102
    %v1603 = vpop.f32.mrf.mxu0
    %v1604 = vadd.f32 %v1584, %v1603
    %1605 = vdwg.mxu0
    %1606 = vmatpush.msra.mxu0 %v801
    %1607 = vmatpush.msra.mxu0 %v799
    %1608 = vmatpush.msra.mxu0 %v797
    %1609 = vmatpush.msra.mxu0 %v795
    %1610 = vmatpush.msra.mxu0 %v793
    %1611 = vmatpush.msra.mxu0 %v791
    %1612 = vmatpush.msra.mxu0 %v789
    %1613 = vmatpush.msra.mxu0 %v787
    %1614 = vmatpush.msra.mxu0 %v785
    %1615 = vmatpush.msra.mxu0 %v783
    %1616 = vmatpush.msra.mxu0 %v781
    %1617 = vmatpush.msra.mxu0 %v779
    %1618 = vmatpush.msra.mxu0 %v777
    %1619 = vmatpush.msra.mxu0 %v775
    %1620 = vmatpush.msra.mxu0 %v773
    %1621 = vmatpush.msra.mxu0 %v771
    %1622 = vmatmul.f32.gmra.mxu0 %v1103
    %v1623 = vpop.f32.mrf.mxu0
    %v1624 = vadd.f32 %v1604, %v1623
    %1625 = vdwg.mxu0
    %1626 = vmatpush.msra.mxu0 %v833
    %1627 = vmatpush.msra.mxu0 %v831
    %1628 = vmatpush.msra.mxu0 %v829
    %1629 = vmatpush.msra.mxu0 %v827
    %1630 = vmatpush.msra.mxu0 %v825
    %1631 = vmatpush.msra.mxu0 %v823
    %1632 = vmatpush.msra.mxu0 %v821
    %1633 = vmatpush.msra.mxu0 %v819
    %1634 = vmatpush.msra.mxu0 %v817
    %1635 = vmatpush.msra.mxu0 %v815
    %1636 = vmatpush.msra.mxu0 %v813
    %1637 = vmatpush.msra.mxu0 %v811
    %1638 = vmatpush.msra.mxu0 %v809
    %1639 = vmatpush.msra.mxu0 %v807
    %1640 = vmatpush.msra.mxu0 %v805
    %1641 = vmatpush.msra.mxu0 %v803
    %1642 = vmatmul.f32.gmra.mxu0 %v1106
    %v1643 = vpop.f32.mrf.mxu0
    %v1644 = vadd.f32 %v1624, %v1643
    %1645 = vdwg.mxu0
    %1646 = vmatpush.msra.mxu0 %v865
    %1647 = vmatpush.msra.mxu0 %v863
    %1648 = vmatpush.msra.mxu0 %v861
    %1649 = vmatpush.msra.mxu0 %v859
    %1650 = vmatpush.msra.mxu0 %v857
    %1651 = vmatpush.msra.mxu0 %v855
    %1652 = vmatpush.msra.mxu0 %v853
    %1653 = vmatpush.msra.mxu0 %v851
    %1654 = vmatpush.msra.mxu0 %v849
    %1655 = vmatpush.msra.mxu0 %v847
    %1656 = vmatpush.msra.mxu0 %v845
    %1657 = vmatpush.msra.mxu0 %v843
    %1658 = vmatpush.msra.mxu0 %v841
    %1659 = vmatpush.msra.mxu0 %v839
    %1660 = vmatpush.msra.mxu0 %v837
    %1661 = vmatpush.msra.mxu0 %v835
    %1662 = vmatmul.f32.gmra.mxu0 %v1107
    %v1663 = vpop.f32.mrf.mxu0
    %v1664 = vadd.f32 %v1644, %v1663
    %1665 = vdwg.mxu0
    %1666 = vmatpush.msra.mxu0 %v897
    %1667 = vmatpush.msra.mxu0 %v895
    %1668 = vmatpush.msra.mxu0 %v893
    %1669 = vmatpush.msra.mxu0 %v891
    %1670 = vmatpush.msra.mxu0 %v889
    %1671 = vmatpush.msra.mxu0 %v887
    %1672 = vmatpush.msra.mxu0 %v885
    %1673 = vmatpush.msra.mxu0 %v883
    %1674 = vmatpush.msra.mxu0 %v881
    %1675 = vmatpush.msra.mxu0 %v879
    %1676 = vmatpush.msra.mxu0 %v877
    %1677 = vmatpush.msra.mxu0 %v875
    %1678 = vmatpush.msra.mxu0 %v873
    %1679 = vmatpush.msra.mxu0 %v871
    %1680 = vmatpush.msra.mxu0 %v869
    %1681 = vmatpush.msra.mxu0 %v867
    %1682 = vmatmul.f32.gmra.mxu0 %v1108
    %v1683 = vpop.f32.mrf.mxu0
    %v1684 = vadd.f32 %v1664, %v1683
    %1685 = vdwg.mxu0
    %1686 = vmatpush.msra.mxu0 %v929
    %1687 = vmatpush.msra.mxu0 %v927
    %1688 = vmatpush.msra.mxu0 %v925
    %1689 = vmatpush.msra.mxu0 %v923
    %1690 = vmatpush.msra.mxu0 %v921
    %1691 = vmatpush.msra.mxu0 %v919
    %1692 = vmatpush.msra.mxu0 %v917
    %1693 = vmatpush.msra.mxu0 %v915
    %1694 = vmatpush.msra.mxu0 %v913
    %1695 = vmatpush.msra.mxu0 %v911
    %1696 = vmatpush.msra.mxu0 %v909
    %1697 = vmatpush.msra.mxu0 %v907
    %1698 = vmatpush.msra.mxu0 %v905
    %1699 = vmatpush.msra.mxu0 %v903
    %1700 = vmatpush.msra.mxu0 %v901
    %1701 = vmatpush.msra.mxu0 %v899
    %1702 = vmatmul.f32.gmra.mxu0 %v1109
    %v1703 = vpop.f32.mrf.mxu0
    %v1704 = vadd.f32 %v1684, %v1703
    %1705 = vdwg.mxu0
    %1706 = vmatpush.msra.mxu0 %v961
    %1707 = vmatpush.msra.mxu0 %v959
    %1708 = vmatpush.msra.mxu0 %v957
    %1709 = vmatpush.msra.mxu0 %v955
    %1710 = vmatpush.msra.mxu0 %v953
    %1711 = vmatpush.msra.mxu0 %v951
    %1712 = vmatpush.msra.mxu0 %v949
    %1713 = vmatpush.msra.mxu0 %v947
    %1714 = vmatpush.msra.mxu0 %v945
    %1715 = vmatpush.msra.mxu0 %v943
    %1716 = vmatpush.msra.mxu0 %v941
    %1717 = vmatpush.msra.mxu0 %v939
    %1718 = vmatpush.msra.mxu0 %v937
    %1719 = vmatpush.msra.mxu0 %v935
    %1720 = vmatpush.msra.mxu0 %v933
    %1721 = vmatpush.msra.mxu0 %v931
    %1722 = vmatmul.f32.gmra.mxu0 %v1110
    %v1723 = vpop.f32.mrf.mxu0
    %v1724 = vadd.f32 %v1704, %v1723
    %1725 = vdwg.mxu0
    %1726 = vmatpush.msra.mxu0 %v993
    %1727 = vmatpush.msra.mxu0 %v991
    %1728 = vmatpush.msra.mxu0 %v989
    %1729 = vmatpush.msra.mxu0 %v987
    %1730 = vmatpush.msra.mxu0 %v985
    %1731 = vmatpush.msra.mxu0 %v983
    %1732 = vmatpush.msra.mxu0 %v981
    %1733 = vmatpush.msra.mxu0 %v979
    %1734 = vmatpush.msra.mxu0 %v977
    %1735 = vmatpush.msra.mxu0 %v975
    %1736 = vmatpush.msra.mxu0 %v973
    %1737 = vmatpush.msra.mxu0 %v971
    %1738 = vmatpush.msra.mxu0 %v969
    %1739 = vmatpush.msra.mxu0 %v967
    %1740 = vmatpush.msra.mxu0 %v965
    %1741 = vmatpush.msra.mxu0 %v963
    %1742 = vmatmul.f32.gmra.mxu0 %v1111
    %v1743 = vpop.f32.mrf.mxu0
    %v1744 = vadd.f32 %v1724, %v1743
    %1745 = vdwg.mxu0
    %1746 = vmatpush.msra.mxu0 %v1025
    %1747 = vmatpush.msra.mxu0 %v1023
    %1748 = vmatpush.msra.mxu0 %v1021
    %1749 = vmatpush.msra.mxu0 %v1019
    %1750 = vmatpush.msra.mxu0 %v1017
    %1751 = vmatpush.msra.mxu0 %v1015
    %1752 = vmatpush.msra.mxu0 %v1013
    %1753 = vmatpush.msra.mxu0 %v1011
    %1754 = vmatpush.msra.mxu0 %v1009
    %1755 = vmatpush.msra.mxu0 %v1007
    %1756 = vmatpush.msra.mxu0 %v1005
    %1757 = vmatpush.msra.mxu0 %v1003
    %1758 = vmatpush.msra.mxu0 %v1001
    %1759 = vmatpush.msra.mxu0 %v999
    %1760 = vmatpush.msra.mxu0 %v997
    %1761 = vmatpush.msra.mxu0 %v995
    %1762 = vmatmul.f32.gmra.mxu0 %v1112
    %v1763 = vpop.f32.mrf.mxu0
    %v1764 = vadd.f32 %v1744, %v1763
    %1765 = vdwg.mxu0
    %1766 = vmatpush.msra.mxu0 %v1057
    %1767 = vmatpush.msra.mxu0 %v1055
    %1768 = vmatpush.msra.mxu0 %v1053
    %1769 = vmatpush.msra.mxu0 %v1051
    %1770 = vmatpush.msra.mxu0 %v1049
    %1771 = vmatpush.msra.mxu0 %v1047
    %1772 = vmatpush.msra.mxu0 %v1045
    %1773 = vmatpush.msra.mxu0 %v1043
    %1774 = vmatpush.msra.mxu0 %v1041
    %1775 = vmatpush.msra.mxu0 %v1039
    %1776 = vmatpush.msra.mxu0 %v1037
    %1777 = vmatpush.msra.mxu0 %v1035
    %1778 = vmatpush.msra.mxu0 %v1033
    %1779 = vmatpush.msra.mxu0 %v1031
    %1780 = vmatpush.msra.mxu0 %v1029
    %1781 = vmatpush.msra.mxu0 %v1027
    %1782 = vmatmul.f32.gmra.mxu0 %v1113
    %v1783 = vpop.f32.mrf.mxu0
    %v1784 = vadd.f32 %v1764, %v1783
    %1785 = vdwg.mxu0
    %1786 = vmatpush.msra.mxu0 %v66
    %1787 = vmatpush.msra.mxu0 %v64
    %1788 = vmatpush.msra.mxu0 %v62
    %1789 = vmatpush.msra.mxu0 %v60
    %1790 = vmatpush.msra.mxu0 %v58
    %1791 = vmatpush.msra.mxu0 %v56
    %1792 = vmatpush.msra.mxu0 %v54
    %1793 = vmatpush.msra.mxu0 %v52
    %1794 = vmatpush.msra.mxu0 %v50
    %1795 = vmatpush.msra.mxu0 %v48
    %1796 = vmatpush.msra.mxu0 %v46
    %1797 = vmatpush.msra.mxu0 %v44
    %1798 = vmatpush.msra.mxu0 %v42
    %1799 = vmatpush.msra.mxu0 %v40
    %1800 = vmatpush.msra.mxu0 %v38
    %1801 = vmatpush.msra.mxu0 %v36
    %1802 = vmatmul.f32.gmra.mxu0 %v1076
    %v1803 = vpop.f32.mrf.mxu0
    %v1804 = vadd.f32 %v1062, %v1803
    %1805 = vdwg.mxu0
    %1806 = vmatpush.msra.mxu0 %v98
    %1807 = vmatpush.msra.mxu0 %v96
    %1808 = vmatpush.msra.mxu0 %v94
    %1809 = vmatpush.msra.mxu0 %v92
    %1810 = vmatpush.msra.mxu0 %v90
    %1811 = vmatpush.msra.mxu0 %v88
    %1812 = vmatpush.msra.mxu0 %v86
    %1813 = vmatpush.msra.mxu0 %v84
    %1814 = vmatpush.msra.mxu0 %v82
    %1815 = vmatpush.msra.mxu0 %v80
    %1816 = vmatpush.msra.mxu0 %v78
    %1817 = vmatpush.msra.mxu0 %v76
    %1818 = vmatpush.msra.mxu0 %v74
    %1819 = vmatpush.msra.mxu0 %v72
    %1820 = vmatpush.msra.mxu0 %v70
    %1821 = vmatpush.msra.mxu0 %v68
    %1822 = vmatmul.f32.gmra.mxu0 %v1077
    %v1823 = vpop.f32.mrf.mxu0
    %v1824 = vadd.f32 %v1804, %v1823
    %1825 = vdwg.mxu0
    %1826 = vmatpush.msra.mxu0 %v130
    %1827 = vmatpush.msra.mxu0 %v128
    %1828 = vmatpush.msra.mxu0 %v126
    %1829 = vmatpush.msra.mxu0 %v124
    %1830 = vmatpush.msra.mxu0 %v122
    %1831 = vmatpush.msra.mxu0 %v120
    %1832 = vmatpush.msra.mxu0 %v118
    %1833 = vmatpush.msra.mxu0 %v116
    %1834 = vmatpush.msra.mxu0 %v114
    %1835 = vmatpush.msra.mxu0 %v112
    %1836 = vmatpush.msra.mxu0 %v110
    %1837 = vmatpush.msra.mxu0 %v108
    %1838 = vmatpush.msra.mxu0 %v106
    %1839 = vmatpush.msra.mxu0 %v104
    %1840 = vmatpush.msra.mxu0 %v102
    %1841 = vmatpush.msra.mxu0 %v100
    %1842 = vmatmul.f32.gmra.mxu0 %v1078
    %v1843 = vpop.f32.mrf.mxu0
    %v1844 = vadd.f32 %v1824, %v1843
    %1845 = vdwg.mxu0
    %1846 = vmatpush.msra.mxu0 %v162
    %1847 = vmatpush.msra.mxu0 %v160
    %1848 = vmatpush.msra.mxu0 %v158
    %1849 = vmatpush.msra.mxu0 %v156
    %1850 = vmatpush.msra.mxu0 %v154
    %1851 = vmatpush.msra.mxu0 %v152
    %1852 = vmatpush.msra.mxu0 %v150
    %1853 = vmatpush.msra.mxu0 %v148
    %1854 = vmatpush.msra.mxu0 %v146
    %1855 = vmatpush.msra.mxu0 %v144
    %1856 = vmatpush.msra.mxu0 %v142
    %1857 = vmatpush.msra.mxu0 %v140
    %1858 = vmatpush.msra.mxu0 %v138
    %1859 = vmatpush.msra.mxu0 %v136
    %1860 = vmatpush.msra.mxu0 %v134
    %1861 = vmatpush.msra.mxu0 %v132
    %1862 = vmatmul.f32.gmra.mxu0 %v1079
    %v1863 = vpop.f32.mrf.mxu0
    %v1864 = vadd.f32 %v1844, %v1863
    %1865 = vdwg.mxu0
    %1866 = vmatpush.msra.mxu0 %v194
    %1867 = vmatpush.msra.mxu0 %v192
    %1868 = vmatpush.msra.mxu0 %v190
    %1869 = vmatpush.msra.mxu0 %v188
    %1870 = vmatpush.msra.mxu0 %v186
    %1871 = vmatpush.msra.mxu0 %v184
    %1872 = vmatpush.msra.mxu0 %v182
    %1873 = vmatpush.msra.mxu0 %v180
    %1874 = vmatpush.msra.mxu0 %v178
    %1875 = vmatpush.msra.mxu0 %v176
    %1876 = vmatpush.msra.mxu0 %v174
    %1877 = vmatpush.msra.mxu0 %v172
    %1878 = vmatpush.msra.mxu0 %v170
    %1879 = vmatpush.msra.mxu0 %v168
    %1880 = vmatpush.msra.mxu0 %v166
    %1881 = vmatpush.msra.mxu0 %v164
    %1882 = vmatmul.f32.gmra.mxu0 %v1080
    %v1883 = vpop.f32.mrf.mxu0
    %v1884 = vadd.f32 %v1864, %v1883
    %1885 = vdwg.mxu0
    %1886 = vmatpush.msra.mxu0 %v226
    %1887 = vmatpush.msra.mxu0 %v224
    %1888 = vmatpush.msra.mxu0 %v222
    %1889 = vmatpush.msra.mxu0 %v220
    %1890 = vmatpush.msra.mxu0 %v218
    %1891 = vmatpush.msra.mxu0 %v216
    %1892 = vmatpush.msra.mxu0 %v214
    %1893 = vmatpush.msra.mxu0 %v212
    %1894 = vmatpush.msra.mxu0 %v210
    %1895 = vmatpush.msra.mxu0 %v208
    %1896 = vmatpush.msra.mxu0 %v206
    %1897 = vmatpush.msra.mxu0 %v204
    %1898 = vmatpush.msra.mxu0 %v202
    %1899 = vmatpush.msra.mxu0 %v200
    %1900 = vmatpush.msra.mxu0 %v198
    %1901 = vmatpush.msra.mxu0 %v196
    %1902 = vmatmul.f32.gmra.mxu0 %v1081
    %v1903 = vpop.f32.mrf.mxu0
    %v1904 = vadd.f32 %v1884, %v1903
    %1905 = vdwg.mxu0
    %1906 = vmatpush.msra.mxu0 %v258
    %1907 = vmatpush.msra.mxu0 %v256
    %1908 = vmatpush.msra.mxu0 %v254
    %1909 = vmatpush.msra.mxu0 %v252
    %1910 = vmatpush.msra.mxu0 %v250
    %1911 = vmatpush.msra.mxu0 %v248
    %1912 = vmatpush.msra.mxu0 %v246
    %1913 = vmatpush.msra.mxu0 %v244
    %1914 = vmatpush.msra.mxu0 %v242
    %1915 = vmatpush.msra.mxu0 %v240
    %1916 = vmatpush.msra.mxu0 %v238
    %1917 = vmatpush.msra.mxu0 %v236
    %1918 = vmatpush.msra.mxu0 %v234
    %1919 = vmatpush.msra.mxu0 %v232
    %1920 = vmatpush.msra.mxu0 %v230
    %1921 = vmatpush.msra.mxu0 %v228
    %1922 = vmatmul.f32.gmra.mxu0 %v1082
    %v1923 = vpop.f32.mrf.mxu0
    %v1924 = vadd.f32 %v1904, %v1923
    %1925 = vdwg.mxu0
    %1926 = vmatpush.msra.mxu0 %v290
    %1927 = vmatpush.msra.mxu0 %v288
    %1928 = vmatpush.msra.mxu0 %v286
    %1929 = vmatpush.msra.mxu0 %v284
    %1930 = vmatpush.msra.mxu0 %v282
    %1931 = vmatpush.msra.mxu0 %v280
    %1932 = vmatpush.msra.mxu0 %v278
    %1933 = vmatpush.msra.mxu0 %v276
    %1934 = vmatpush.msra.mxu0 %v274
    %1935 = vmatpush.msra.mxu0 %v272
    %1936 = vmatpush.msra.mxu0 %v270
    %1937 = vmatpush.msra.mxu0 %v268
    %1938 = vmatpush.msra.mxu0 %v266
    %1939 = vmatpush.msra.mxu0 %v264
    %1940 = vmatpush.msra.mxu0 %v262
    %1941 = vmatpush.msra.mxu0 %v260
    %1942 = vmatmul.f32.gmra.mxu0 %v1083
    %v1943 = vpop.f32.mrf.mxu0
    %v1944 = vadd.f32 %v1924, %v1943
    %1945 = vdwg.mxu0
    %1946 = vmatpush.msra.mxu0 %v322
    %1947 = vmatpush.msra.mxu0 %v320
    %1948 = vmatpush.msra.mxu0 %v318
    %1949 = vmatpush.msra.mxu0 %v316
    %1950 = vmatpush.msra.mxu0 %v314
    %1951 = vmatpush.msra.mxu0 %v312
    %1952 = vmatpush.msra.mxu0 %v310
    %1953 = vmatpush.msra.mxu0 %v308
    %1954 = vmatpush.msra.mxu0 %v306
    %1955 = vmatpush.msra.mxu0 %v304
    %1956 = vmatpush.msra.mxu0 %v302
    %1957 = vmatpush.msra.mxu0 %v300
    %1958 = vmatpush.msra.mxu0 %v298
    %1959 = vmatpush.msra.mxu0 %v296
    %1960 = vmatpush.msra.mxu0 %v294
    %1961 = vmatpush.msra.mxu0 %v292
    %1962 = vmatmul.f32.gmra.mxu0 %v1086
    %v1963 = vpop.f32.mrf.mxu0
    %v1964 = vadd.f32 %v1944, %v1963
    %1965 = vdwg.mxu0
    %1966 = vmatpush.msra.mxu0 %v354
    %1967 = vmatpush.msra.mxu0 %v352
    %1968 = vmatpush.msra.mxu0 %v350
    %1969 = vmatpush.msra.mxu0 %v348
    %1970 = vmatpush.msra.mxu0 %v346
    %1971 = vmatpush.msra.mxu0 %v344
    %1972 = vmatpush.msra.mxu0 %v342
    %1973 = vmatpush.msra.mxu0 %v340
    %1974 = vmatpush.msra.mxu0 %v338
    %1975 = vmatpush.msra.mxu0 %v336
    %1976 = vmatpush.msra.mxu0 %v334
    %1977 = vmatpush.msra.mxu0 %v332
    %1978 = vmatpush.msra.mxu0 %v330
    %1979 = vmatpush.msra.mxu0 %v328
    %1980 = vmatpush.msra.mxu0 %v326
    %1981 = vmatpush.msra.mxu0 %v324
    %1982 = vmatmul.f32.gmra.mxu0 %v1087
    %v1983 = vpop.f32.mrf.mxu0
    %v1984 = vadd.f32 %v1964, %v1983
    %1985 = vdwg.mxu0
    %1986 = vmatpush.msra.mxu0 %v386
    %1987 = vmatpush.msra.mxu0 %v384
    %1988 = vmatpush.msra.mxu0 %v382
    %1989 = vmatpush.msra.mxu0 %v380
    %1990 = vmatpush.msra.mxu0 %v378
    %1991 = vmatpush.msra.mxu0 %v376
    %1992 = vmatpush.msra.mxu0 %v374
    %1993 = vmatpush.msra.mxu0 %v372
    %1994 = vmatpush.msra.mxu0 %v370
    %1995 = vmatpush.msra.mxu0 %v368
    %1996 = vmatpush.msra.mxu0 %v366
    %1997 = vmatpush.msra.mxu0 %v364
    %1998 = vmatpush.msra.mxu0 %v362
    %1999 = vmatpush.msra.mxu0 %v360
    %2000 = vmatpush.msra.mxu0 %v358
    %2001 = vmatpush.msra.mxu0 %v356
    %2002 = vmatmul.f32.gmra.mxu0 %v1088
    %v2003 = vpop.f32.mrf.mxu0
    %v2004 = vadd.f32 %v1984, %v2003
    %2005 = vdwg.mxu0
    %2006 = vmatpush.msra.mxu0 %v418
    %2007 = vmatpush.msra.mxu0 %v416
    %2008 = vmatpush.msra.mxu0 %v414
    %2009 = vmatpush.msra.mxu0 %v412
    %2010 = vmatpush.msra.mxu0 %v410
    %2011 = vmatpush.msra.mxu0 %v408
    %2012 = vmatpush.msra.mxu0 %v406
    %2013 = vmatpush.msra.mxu0 %v404
    %2014 = vmatpush.msra.mxu0 %v402
    %2015 = vmatpush.msra.mxu0 %v400
    %2016 = vmatpush.msra.mxu0 %v398
    %2017 = vmatpush.msra.mxu0 %v396
    %2018 = vmatpush.msra.mxu0 %v394
    %2019 = vmatpush.msra.mxu0 %v392
    %2020 = vmatpush.msra.mxu0 %v390
    %2021 = vmatpush.msra.mxu0 %v388
    %2022 = vmatmul.f32.gmra.mxu0 %v1089
    %v2023 = vpop.f32.mrf.mxu0
    %v2024 = vadd.f32 %v2004, %v2023
    %2025 = vdwg.mxu0
    %2026 = vmatpush.msra.mxu0 %v450
    %2027 = vmatpush.msra.mxu0 %v448
    %2028 = vmatpush.msra.mxu0 %v446
    %2029 = vmatpush.msra.mxu0 %v444
    %2030 = vmatpush.msra.mxu0 %v442
    %2031 = vmatpush.msra.mxu0 %v440
    %2032 = vmatpush.msra.mxu0 %v438
    %2033 = vmatpush.msra.mxu0 %v436
    %2034 = vmatpush.msra.mxu0 %v434
    %2035 = vmatpush.msra.mxu0 %v432
    %2036 = vmatpush.msra.mxu0 %v430
    %2037 = vmatpush.msra.mxu0 %v428
    %2038 = vmatpush.msra.mxu0 %v426
    %2039 = vmatpush.msra.mxu0 %v424
    %2040 = vmatpush.msra.mxu0 %v422
    %2041 = vmatpush.msra.mxu0 %v420
    %2042 = vmatmul.f32.gmra.mxu0 %v1090
    %v2043 = vpop.f32.mrf.mxu0
    %v2044 = vadd.f32 %v2024, %v2043
    %2045 = vdwg.mxu0
    %2046 = vmatpush.msra.mxu0 %v482
    %2047 = vmatpush.msra.mxu0 %v480
    %2048 = vmatpush.msra.mxu0 %v478
    %2049 = vmatpush.msra.mxu0 %v476
    %2050 = vmatpush.msra.mxu0 %v474
    %2051 = vmatpush.msra.mxu0 %v472
    %2052 = vmatpush.msra.mxu0 %v470
    %2053 = vmatpush.msra.mxu0 %v468
    %2054 = vmatpush.msra.mxu0 %v466
    %2055 = vmatpush.msra.mxu0 %v464
    %2056 = vmatpush.msra.mxu0 %v462
    %2057 = vmatpush.msra.mxu0 %v460
    %2058 = vmatpush.msra.mxu0 %v458
    %2059 = vmatpush.msra.mxu0 %v456
    %2060 = vmatpush.msra.mxu0 %v454
    %2061 = vmatpush.msra.mxu0 %v452
    %2062 = vmatmul.f32.gmra.mxu0 %v1091
    %v2063 = vpop.f32.mrf.mxu0
    %v2064 = vadd.f32 %v2044, %v2063
    %2065 = vdwg.mxu0
    %2066 = vmatpush.msra.mxu0 %v514
    %2067 = vmatpush.msra.mxu0 %v512
    %2068 = vmatpush.msra.mxu0 %v510
    %2069 = vmatpush.msra.mxu0 %v508
    %2070 = vmatpush.msra.mxu0 %v506
    %2071 = vmatpush.msra.mxu0 %v504
    %2072 = vmatpush.msra.mxu0 %v502
    %2073 = vmatpush.msra.mxu0 %v500
    %2074 = vmatpush.msra.mxu0 %v498
    %2075 = vmatpush.msra.mxu0 %v496
    %2076 = vmatpush.msra.mxu0 %v494
    %2077 = vmatpush.msra.mxu0 %v492
    %2078 = vmatpush.msra.mxu0 %v490
    %2079 = vmatpush.msra.mxu0 %v488
    %2080 = vmatpush.msra.mxu0 %v486
    %2081 = vmatpush.msra.mxu0 %v484
    %2082 = vmatmul.f32.gmra.mxu0 %v1092
    %v2083 = vpop.f32.mrf.mxu0
    %v2084 = vadd.f32 %v2064, %v2083
    %2085 = vdwg.mxu0
    %2086 = vmatpush.msra.mxu0 %v546
    %2087 = vmatpush.msra.mxu0 %v544
    %2088 = vmatpush.msra.mxu0 %v542
    %2089 = vmatpush.msra.mxu0 %v540
    %2090 = vmatpush.msra.mxu0 %v538
    %2091 = vmatpush.msra.mxu0 %v536
    %2092 = vmatpush.msra.mxu0 %v534
    %2093 = vmatpush.msra.mxu0 %v532
    %2094 = vmatpush.msra.mxu0 %v530
    %2095 = vmatpush.msra.mxu0 %v528
    %2096 = vmatpush.msra.mxu0 %v526
    %2097 = vmatpush.msra.mxu0 %v524
    %2098 = vmatpush.msra.mxu0 %v522
    %2099 = vmatpush.msra.mxu0 %v520
    %2100 = vmatpush.msra.mxu0 %v518
    %2101 = vmatpush.msra.mxu0 %v516
    %2102 = vmatmul.f32.gmra.mxu0 %v1093
    %v2103 = vpop.f32.mrf.mxu0
    %v2104 = vadd.f32 %v2084, %v2103
    %2105 = vdwg.mxu0
    %2106 = vmatpush.msra.mxu0 %v578
    %2107 = vmatpush.msra.mxu0 %v576
    %2108 = vmatpush.msra.mxu0 %v574
    %2109 = vmatpush.msra.mxu0 %v572
    %2110 = vmatpush.msra.mxu0 %v570
    %2111 = vmatpush.msra.mxu0 %v568
    %2112 = vmatpush.msra.mxu0 %v566
    %2113 = vmatpush.msra.mxu0 %v564
    %2114 = vmatpush.msra.mxu0 %v562
    %2115 = vmatpush.msra.mxu0 %v560
    %2116 = vmatpush.msra.mxu0 %v558
    %2117 = vmatpush.msra.mxu0 %v556
    %2118 = vmatpush.msra.mxu0 %v554
    %2119 = vmatpush.msra.mxu0 %v552
    %2120 = vmatpush.msra.mxu0 %v550
    %2121 = vmatpush.msra.mxu0 %v548
    %2122 = vmatmul.f32.gmra.mxu0 %v1096
    %v2123 = vpop.f32.mrf.mxu0
    %v2124 = vadd.f32 %v2104, %v2123
    %2125 = vdwg.mxu0
    %2126 = vmatpush.msra.mxu0 %v610
    %2127 = vmatpush.msra.mxu0 %v608
    %2128 = vmatpush.msra.mxu0 %v606
    %2129 = vmatpush.msra.mxu0 %v604
    %2130 = vmatpush.msra.mxu0 %v602
    %2131 = vmatpush.msra.mxu0 %v600
    %2132 = vmatpush.msra.mxu0 %v598
    %2133 = vmatpush.msra.mxu0 %v596
    %2134 = vmatpush.msra.mxu0 %v594
    %2135 = vmatpush.msra.mxu0 %v592
    %2136 = vmatpush.msra.mxu0 %v590
    %2137 = vmatpush.msra.mxu0 %v588
    %2138 = vmatpush.msra.mxu0 %v586
    %2139 = vmatpush.msra.mxu0 %v584
    %2140 = vmatpush.msra.mxu0 %v582
    %2141 = vmatpush.msra.mxu0 %v580
    %2142 = vmatmul.f32.gmra.mxu0 %v1097
    %v2143 = vpop.f32.mrf.mxu0
    %v2144 = vadd.f32 %v2124, %v2143
    %2145 = vdwg.mxu0
    %2146 = vmatpush.msra.mxu0 %v642
    %2147 = vmatpush.msra.mxu0 %v640
    %2148 = vmatpush.msra.mxu0 %v638
    %2149 = vmatpush.msra.mxu0 %v636
    %2150 = vmatpush.msra.mxu0 %v634
    %2151 = vmatpush.msra.mxu0 %v632
    %2152 = vmatpush.msra.mxu0 %v630
    %2153 = vmatpush.msra.mxu0 %v628
    %2154 = vmatpush.msra.mxu0 %v626
    %2155 = vmatpush.msra.mxu0 %v624
    %2156 = vmatpush.msra.mxu0 %v622
    %2157 = vmatpush.msra.mxu0 %v620
    %2158 = vmatpush.msra.mxu0 %v618
    %2159 = vmatpush.msra.mxu0 %v616
    %2160 = vmatpush.msra.mxu0 %v614
    %2161 = vmatpush.msra.mxu0 %v612
    %2162 = vmatmul.f32.gmra.mxu0 %v1098
    %v2163 = vpop.f32.mrf.mxu0
    %v2164 = vadd.f32 %v2144, %v2163
    %2165 = vdwg.mxu0
    %2166 = vmatpush.msra.mxu0 %v674
    %2167 = vmatpush.msra.mxu0 %v672
    %2168 = vmatpush.msra.mxu0 %v670
    %2169 = vmatpush.msra.mxu0 %v668
    %2170 = vmatpush.msra.mxu0 %v666
    %2171 = vmatpush.msra.mxu0 %v664
    %2172 = vmatpush.msra.mxu0 %v662
    %2173 = vmatpush.msra.mxu0 %v660
    %2174 = vmatpush.msra.mxu0 %v658
    %2175 = vmatpush.msra.mxu0 %v656
    %2176 = vmatpush.msra.mxu0 %v654
    %2177 = vmatpush.msra.mxu0 %v652
    %2178 = vmatpush.msra.mxu0 %v650
    %2179 = vmatpush.msra.mxu0 %v648
    %2180 = vmatpush.msra.mxu0 %v646
    %2181 = vmatpush.msra.mxu0 %v644
    %2182 = vmatmul.f32.gmra.mxu0 %v1099
    %v2183 = vpop.f32.mrf.mxu0
    %v2184 = vadd.f32 %v2164, %v2183
    %2185 = vdwg.mxu0
    %2186 = vmatpush.msra.mxu0 %v706
    %2187 = vmatpush.msra.mxu0 %v704
    %2188 = vmatpush.msra.mxu0 %v702
    %2189 = vmatpush.msra.mxu0 %v700
    %2190 = vmatpush.msra.mxu0 %v698
    %2191 = vmatpush.msra.mxu0 %v696
    %2192 = vmatpush.msra.mxu0 %v694
    %2193 = vmatpush.msra.mxu0 %v692
    %2194 = vmatpush.msra.mxu0 %v690
    %2195 = vmatpush.msra.mxu0 %v688
    %2196 = vmatpush.msra.mxu0 %v686
    %2197 = vmatpush.msra.mxu0 %v684
    %2198 = vmatpush.msra.mxu0 %v682
    %2199 = vmatpush.msra.mxu0 %v680
    %2200 = vmatpush.msra.mxu0 %v678
    %2201 = vmatpush.msra.mxu0 %v676
    %2202 = vmatmul.f32.gmra.mxu0 %v1100
    %v2203 = vpop.f32.mrf.mxu0
    %v2204 = vadd.f32 %v2184, %v2203
    %2205 = vdwg.mxu0
    %2206 = vmatpush.msra.mxu0 %v738
    %2207 = vmatpush.msra.mxu0 %v736
    %2208 = vmatpush.msra.mxu0 %v734
    %2209 = vmatpush.msra.mxu0 %v732
    %2210 = vmatpush.msra.mxu0 %v730
    %2211 = vmatpush.msra.mxu0 %v728
    %2212 = vmatpush.msra.mxu0 %v726
    %2213 = vmatpush.msra.mxu0 %v724
    %2214 = vmatpush.msra.mxu0 %v722
    %2215 = vmatpush.msra.mxu0 %v720
    %2216 = vmatpush.msra.mxu0 %v718
    %2217 = vmatpush.msra.mxu0 %v716
    %2218 = vmatpush.msra.mxu0 %v714
    %2219 = vmatpush.msra.mxu0 %v712
    %2220 = vmatpush.msra.mxu0 %v710
    %2221 = vmatpush.msra.mxu0 %v708
    %2222 = vmatmul.f32.gmra.mxu0 %v1101
    %v2223 = vpop.f32.mrf.mxu0
    %v2224 = vadd.f32 %v2204, %v2223
    %2225 = vdwg.mxu0
    %2226 = vmatpush.msra.mxu0 %v770
    %2227 = vmatpush.msra.mxu0 %v768
    %2228 = vmatpush.msra.mxu0 %v766
    %2229 = vmatpush.msra.mxu0 %v764
    %2230 = vmatpush.msra.mxu0 %v762
    %2231 = vmatpush.msra.mxu0 %v760
    %2232 = vmatpush.msra.mxu0 %v758
    %2233 = vmatpush.msra.mxu0 %v756
    %2234 = vmatpush.msra.mxu0 %v754
    %2235 = vmatpush.msra.mxu0 %v752
    %2236 = vmatpush.msra.mxu0 %v750
    %2237 = vmatpush.msra.mxu0 %v748
    %2238 = vmatpush.msra.mxu0 %v746
    %2239 = vmatpush.msra.mxu0 %v744
    %2240 = vmatpush.msra.mxu0 %v742
    %2241 = vmatpush.msra.mxu0 %v740
    %2242 = vmatmul.f32.gmra.mxu0 %v1102
    %v2243 = vpop.f32.mrf.mxu0
    %v2244 = vadd.f32 %v2224, %v2243
    %2245 = vdwg.mxu0
    %2246 = vmatpush.msra.mxu0 %v802
    %2247 = vmatpush.msra.mxu0 %v800
    %2248 = vmatpush.msra.mxu0 %v798
    %2249 = vmatpush.msra.mxu0 %v796
    %2250 = vmatpush.msra.mxu0 %v794
    %2251 = vmatpush.msra.mxu0 %v792
    %2252 = vmatpush.msra.mxu0 %v790
    %2253 = vmatpush.msra.mxu0 %v788
    %2254 = vmatpush.msra.mxu0 %v786
    %2255 = vmatpush.msra.mxu0 %v784
    %2256 = vmatpush.msra.mxu0 %v782
    %2257 = vmatpush.msra.mxu0 %v780
    %2258 = vmatpush.msra.mxu0 %v778
    %2259 = vmatpush.msra.mxu0 %v776
    %2260 = vmatpush.msra.mxu0 %v774
    %2261 = vmatpush.msra.mxu0 %v772
    %2262 = vmatmul.f32.gmra.mxu0 %v1103
    %v2263 = vpop.f32.mrf.mxu0
    %v2264 = vadd.f32 %v2244, %v2263
    %2265 = vdwg.mxu0
    %2266 = vmatpush.msra.mxu0 %v834
    %2267 = vmatpush.msra.mxu0 %v832
    %2268 = vmatpush.msra.mxu0 %v830
    %2269 = vmatpush.msra.mxu0 %v828
    %2270 = vmatpush.msra.mxu0 %v826
    %2271 = vmatpush.msra.mxu0 %v824
    %2272 = vmatpush.msra.mxu0 %v822
    %2273 = vmatpush.msra.mxu0 %v820
    %2274 = vmatpush.msra.mxu0 %v818
    %2275 = vmatpush.msra.mxu0 %v816
    %2276 = vmatpush.msra.mxu0 %v814
    %2277 = vmatpush.msra.mxu0 %v812
    %2278 = vmatpush.msra.mxu0 %v810
    %2279 = vmatpush.msra.mxu0 %v808
    %2280 = vmatpush.msra.mxu0 %v806
    %2281 = vmatpush.msra.mxu0 %v804
    %2282 = vmatmul.f32.gmra.mxu0 %v1106
    %v2283 = vpop.f32.mrf.mxu0
    %v2284 = vadd.f32 %v2264, %v2283
    %2285 = vdwg.mxu0
    %2286 = vmatpush.msra.mxu0 %v866
    %2287 = vmatpush.msra.mxu0 %v864
    %2288 = vmatpush.msra.mxu0 %v862
    %2289 = vmatpush.msra.mxu0 %v860
    %2290 = vmatpush.msra.mxu0 %v858
    %2291 = vmatpush.msra.mxu0 %v856
    %2292 = vmatpush.msra.mxu0 %v854
    %2293 = vmatpush.msra.mxu0 %v852
    %2294 = vmatpush.msra.mxu0 %v850
    %2295 = vmatpush.msra.mxu0 %v848
    %2296 = vmatpush.msra.mxu0 %v846
    %2297 = vmatpush.msra.mxu0 %v844
    %2298 = vmatpush.msra.mxu0 %v842
    %2299 = vmatpush.msra.mxu0 %v840
    %2300 = vmatpush.msra.mxu0 %v838
    %2301 = vmatpush.msra.mxu0 %v836
    %2302 = vmatmul.f32.gmra.mxu0 %v1107
    %v2303 = vpop.f32.mrf.mxu0
    %v2304 = vadd.f32 %v2284, %v2303
    %2305 = vdwg.mxu0
    %2306 = vmatpush.msra.mxu0 %v898
    %2307 = vmatpush.msra.mxu0 %v896
    %2308 = vmatpush.msra.mxu0 %v894
    %2309 = vmatpush.msra.mxu0 %v892
    %2310 = vmatpush.msra.mxu0 %v890
    %2311 = vmatpush.msra.mxu0 %v888
    %2312 = vmatpush.msra.mxu0 %v886
    %2313 = vmatpush.msra.mxu0 %v884
    %2314 = vmatpush.msra.mxu0 %v882
    %2315 = vmatpush.msra.mxu0 %v880
    %2316 = vmatpush.msra.mxu0 %v878
    %2317 = vmatpush.msra.mxu0 %v876
    %2318 = vmatpush.msra.mxu0 %v874
    %2319 = vmatpush.msra.mxu0 %v872
    %2320 = vmatpush.msra.mxu0 %v870
    %2321 = vmatpush.msra.mxu0 %v868
    %2322 = vmatmul.f32.gmra.mxu0 %v1108
    %v2323 = vpop.f32.mrf.mxu0
    %v2324 = vadd.f32 %v2304, %v2323
    %2325 = vdwg.mxu0
    %2326 = vmatpush.msra.mxu0 %v930
    %2327 = vmatpush.msra.mxu0 %v928
    %2328 = vmatpush.msra.mxu0 %v926
    %2329 = vmatpush.msra.mxu0 %v924
    %2330 = vmatpush.msra.mxu0 %v922
    %2331 = vmatpush.msra.mxu0 %v920
    %2332 = vmatpush.msra.mxu0 %v918
    %2333 = vmatpush.msra.mxu0 %v916
    %2334 = vmatpush.msra.mxu0 %v914
    %2335 = vmatpush.msra.mxu0 %v912
    %2336 = vmatpush.msra.mxu0 %v910
    %2337 = vmatpush.msra.mxu0 %v908
    %2338 = vmatpush.msra.mxu0 %v906
    %2339 = vmatpush.msra.mxu0 %v904
    %2340 = vmatpush.msra.mxu0 %v902
    %2341 = vmatpush.msra.mxu0 %v900
    %2342 = vmatmul.f32.gmra.mxu0 %v1109
    %v2343 = vpop.f32.mrf.mxu0
    %v2344 = vadd.f32 %v2324, %v2343
    %2345 = vdwg.mxu0
    %2346 = vmatpush.msra.mxu0 %v962
    %2347 = vmatpush.msra.mxu0 %v960
    %2348 = vmatpush.msra.mxu0 %v958
    %2349 = vmatpush.msra.mxu0 %v956
    %2350 = vmatpush.msra.mxu0 %v954
    %2351 = vmatpush.msra.mxu0 %v952
    %2352 = vmatpush.msra.mxu0 %v950
    %2353 = vmatpush.msra.mxu0 %v948
    %2354 = vmatpush.msra.mxu0 %v946
    %2355 = vmatpush.msra.mxu0 %v944
    %2356 = vmatpush.msra.mxu0 %v942
    %2357 = vmatpush.msra.mxu0 %v940
    %2358 = vmatpush.msra.mxu0 %v938
    %2359 = vmatpush.msra.mxu0 %v936
    %2360 = vmatpush.msra.mxu0 %v934
    %2361 = vmatpush.msra.mxu0 %v932
    %2362 = vmatmul.f32.gmra.mxu0 %v1110
    %v2363 = vpop.f32.mrf.mxu0
    %v2364 = vadd.f32 %v2344, %v2363
    %2365 = vdwg.mxu0
    %2366 = vmatpush.msra.mxu0 %v994
    %2367 = vmatpush.msra.mxu0 %v992
    %2368 = vmatpush.msra.mxu0 %v990
    %2369 = vmatpush.msra.mxu0 %v988
    %2370 = vmatpush.msra.mxu0 %v986
    %2371 = vmatpush.msra.mxu0 %v984
    %2372 = vmatpush.msra.mxu0 %v982
    %2373 = vmatpush.msra.mxu0 %v980
    %2374 = vmatpush.msra.mxu0 %v978
    %2375 = vmatpush.msra.mxu0 %v976
    %2376 = vmatpush.msra.mxu0 %v974
    %2377 = vmatpush.msra.mxu0 %v972
    %2378 = vmatpush.msra.mxu0 %v970
    %2379 = vmatpush.msra.mxu0 %v968
    %2380 = vmatpush.msra.mxu0 %v966
    %2381 = vmatpush.msra.mxu0 %v964
    %2382 = vmatmul.f32.gmra.mxu0 %v1111
    %v2383 = vpop.f32.mrf.mxu0
    %v2384 = vadd.f32 %v2364, %v2383
    %2385 = vdwg.mxu0
    %2386 = vmatpush.msra.mxu0 %v1026
    %2387 = vmatpush.msra.mxu0 %v1024
    %2388 = vmatpush.msra.mxu0 %v1022
    %2389 = vmatpush.msra.mxu0 %v1020
    %2390 = vmatpush.msra.mxu0 %v1018
    %2391 = vmatpush.msra.mxu0 %v1016
    %2392 = vmatpush.msra.mxu0 %v1014
    %2393 = vmatpush.msra.mxu0 %v1012
    %2394 = vmatpush.msra.mxu0 %v1010
    %2395 = vmatpush.msra.mxu0 %v1008
    %2396 = vmatpush.msra.mxu0 %v1006
    %2397 = vmatpush.msra.mxu0 %v1004
    %2398 = vmatpush.msra.mxu0 %v1002
    %2399 = vmatpush.msra.mxu0 %v1000
    %2400 = vmatpush.msra.mxu0 %v998
    %2401 = vmatpush.msra.mxu0 %v996
    %2402 = vmatmul.f32.gmra.mxu0 %v1112
    %v2403 = vpop.f32.mrf.mxu0
    %v2404 = vadd.f32 %v2384, %v2403
    %2405 = vdwg.mxu0
    %2406 = vmatpush.msra.mxu0 %v1058
    %2407 = vmatpush.msra.mxu0 %v1056
    %2408 = vmatpush.msra.mxu0 %v1054
    %2409 = vmatpush.msra.mxu0 %v1052
    %2410 = vmatpush.msra.mxu0 %v1050
    %2411 = vmatpush.msra.mxu0 %v1048
    %2412 = vmatpush.msra.mxu0 %v1046
    %2413 = vmatpush.msra.mxu0 %v1044
    %2414 = vmatpush.msra.mxu0 %v1042
    %2415 = vmatpush.msra.mxu0 %v1040
    %2416 = vmatpush.msra.mxu0 %v1038
    %2417 = vmatpush.msra.mxu0 %v1036
    %2418 = vmatpush.msra.mxu0 %v1034
    %2419 = vmatpush.msra.mxu0 %v1032
    %2420 = vmatpush.msra.mxu0 %v1030
    %2421 = vmatpush.msra.mxu0 %v1028
    %2422 = vmatmul.f32.gmra.mxu0 %v1113
    %v2423 = vpop.f32.mrf.mxu0
    %v2424 = vadd.f32 %v2404, %v2423
    %2425 = vdwg.mxu0
    %v2426 = vmax.f32 %v1784, 0.0
    %v2427 = vmax.f32 %v2424, 0.0
    %v2428 = vld [vmem:[%s3] sm:$0x3]
    %v2430 = vperm.slane %v2428, 0
    %v2431 = vperm.slane %v2428, 1
    %v2434 = vmul.f32 %v2426, %v2430
    %v2435 = vmul.f32 %v2427, %v2431
    %v2436 = vld [vmem:[%s4] sm:$0x3]
    %v2438 = vperm.slane %v2436, 0
    %v2439 = vperm.slane %v2436, 1
    %v2442 = vadd.f32 %v2434, %v2438
    %v2443 = vadd.f32 %v2435, %v2439
    %v2444 = vld [vmem:[%s5] sm:$0xff]
    %v2445 = vld [vmem:[%s5 + $0x8] sm:$0xff]
    %v2446 = vld [vmem:[%s5 + $0x10] sm:$0xff]
    %v2447 = vld [vmem:[%s5 + $0x18] sm:$0xff]
    %v2448 = vld [vmem:[%s5 + $0x20] sm:$0xff]
    %v2449 = vld [vmem:[%s5 + $0x28] sm:$0xff]
    %v2450 = vld [vmem:[%s5 + $0x30] sm:$0xff]
    %v2451 = vld [vmem:[%s5 + $0x38] sm:$0xff]
    %v2452 = vld [vmem:[%s5 + $0x40] sm:$0xff]
    %v2453 = vld [vmem:[%s5 + $0x48] sm:$0xff]
    %v2454 = vld [vmem:[%s5 + $0x50] sm:$0xff]
    %v2455 = vld [vmem:[%s5 + $0x58] sm:$0xff]
    %v2456 = vld [vmem:[%s5 + $0x60] sm:$0xff]
    %v2457 = vld [vmem:[%s5 + $0x68] sm:$0xff]
    %v2458 = vld [vmem:[%s5 + $0x70] sm:$0xff]
    %v2459 = vld [vmem:[%s5 + $0x78] sm:$0xff]
    %v2460 = vld [vmem:[%s5 + $0x80] sm:$0xff]
    %v2461 = vld [vmem:[%s5 + $0x88] sm:$0xff]
    %v2462 = vld [vmem:[%s5 + $0x90] sm:$0xff]
    %v2463 = vld [vmem:[%s5 + $0x98] sm:$0xff]
    %v2464 = vld [vmem:[%s5 + $0xa0] sm:$0xff]
    %v2465 = vld [vmem:[%s5 + $0xa8] sm:$0xff]
    %v2466 = vld [vmem:[%s5 + $0xb0] sm:$0xff]
    %v2467 = vld [vmem:[%s5 + $0xb8] sm:$0xff]
    %v2468 = vld [vmem:[%s5 + $0xc0] sm:$0xff]
    %v2469 = vld [vmem:[%s5 + $0xc8] sm:$0xff]
    %v2470 = vld [vmem:[%s5 + $0xd0] sm:$0xff]
    %v2471 = vld [vmem:[%s5 + $0xd8] sm:$0xff]
    %v2472 = vld [vmem:[%s5 + $0xe0] sm:$0xff]
    %v2473 = vld [vmem:[%s5 + $0xe8] sm:$0xff]
    %v2474 = vld [vmem:[%s5 + $0xf0] sm:$0xff]
    %v2475 = vld [vmem:[%s5 + $0xf8] sm:$0xff]
    %v2476 = vld [vmem:[%s5 + $0x100] sm:$0xff]
    %v2477 = vld [vmem:[%s5 + $0x108] sm:$0xff]
    %v2478 = vld [vmem:[%s5 + $0x110] sm:$0xff]
    %v2479 = vld [vmem:[%s5 + $0x118] sm:$0xff]
    %v2480 = vld [vmem:[%s5 + $0x120] sm:$0xff]
    %v2481 = vld [vmem:[%s5 + $0x128] sm:$0xff]
    %v2482 = vld [vmem:[%s5 + $0x130] sm:$0xff]
    %v2483 = vld [vmem:[%s5 + $0x138] sm:$0xff]
    %v2484 = vld [vmem:[%s5 + $0x140] sm:$0xff]
    %v2485 = vld [vmem:[%s5 + $0x148] sm:$0xff]
    %v2486 = vld [vmem:[%s5 + $0x150] sm:$0xff]
    %v2487 = vld [vmem:[%s5 + $0x158] sm:$0xff]
    %v2488 = vld [vmem:[%s5 + $0x160] sm:$0xff]
    %v2489 = vld [vmem:[%s5 + $0x168] sm:$0xff]
    %v2490 = vld [vmem:[%s5 + $0x170] sm:$0xff]
    %v2491 = vld [vmem:[%s5 + $0x178] sm:$0xff]
    %v2492 = vld [vmem:[%s5 + $0x180] sm:$0xff]
    %v2493 = vld [vmem:[%s5 + $0x188] sm:$0xff]
    %v2494 = vld [vmem:[%s5 + $0x190] sm:$0xff]
    %v2495 = vld [vmem:[%s5 + $0x198] sm:$0xff]
    %v2496 = vld [vmem:[%s5 + $0x1a0] sm:$0xff]
    %v2497 = vld [vmem:[%s5 + $0x1a8] sm:$0xff]
    %v2498 = vld [vmem:[%s5 + $0x1b0] sm:$0xff]
    %v2499 = vld [vmem:[%s5 + $0x1b8] sm:$0xff]
    %v2500 = vld [vmem:[%s5 + $0x1c0] sm:$0xff]
    %v2501 = vld [vmem:[%s5 + $0x1c8] sm:$0xff]
    %v2502 = vld [vmem:[%s5 + $0x1d0] sm:$0xff]
    %v2503 = vld [vmem:[%s5 + $0x1d8] sm:$0xff]
    %v2504 = vld [vmem:[%s5 + $0x1e0] sm:$0xff]
    %v2505 = vld [vmem:[%s5 + $0x1e8] sm:$0xff]
    %v2506 = vld [vmem:[%s5 + $0x1f0] sm:$0xff]
    %v2507 = vld [vmem:[%s5 + $0x1f8] sm:$0xff]
    %v2508 = vld [vmem:[%s6] sm:$0x3]
    %v2510 = vperm.slane %v2508, 0
    %v2511 = vperm.slane %v2508, 1
    %2514 = vmatpush.msra.mxu0 %v2474
    %2515 = vmatpush.msra.mxu0 %v2472
    %2516 = vmatpush.msra.mxu0 %v2470
    %2517 = vmatpush.msra.mxu0 %v2468
    %2518 = vmatpush.msra.mxu0 %v2466
    %2519 = vmatpush.msra.mxu0 %v2464
    %2520 = vmatpush.msra.mxu0 %v2462
    %2521 = vmatpush.msra.mxu0 %v2460
    %2522 = vmatpush.msra.mxu0 %v2458
    %2523 = vmatpush.msra.mxu0 %v2456
    %2524 = vmatpush.msra.mxu0 %v2454
    %2525 = vmatpush.msra.mxu0 %v2452
    %2526 = vmatpush.msra.mxu0 %v2450
    %2527 = vmatpush.msra.mxu0 %v2448
    %2528 = vmatpush.msra.mxu0 %v2446
    %2529 = vmatpush.msra.mxu0 %v2444
    %2530 = vmatmul.f32.gmra.mxu0 %v2442
    %v2531 = vpop.f32.mrf.mxu0
    %v2532 = vadd.f32 %v2510, %v2531
    %2533 = vdwg.mxu0
    %2534 = vmatpush.msra.mxu0 %v2506
    %2535 = vmatpush.msra.mxu0 %v2504
    %2536 = vmatpush.msra.mxu0 %v2502
    %2537 = vmatpush.msra.mxu0 %v2500
    %2538 = vmatpush.msra.mxu0 %v2498
    %2539 = vmatpush.msra.mxu0 %v2496
    %2540 = vmatpush.msra.mxu0 %v2494
    %2541 = vmatpush.msra.mxu0 %v2492
    %2542 = vmatpush.msra.mxu0 %v2490
    %2543 = vmatpush.msra.mxu0 %v2488
    %2544 = vmatpush.msra.mxu0 %v2486
    %2545 = vmatpush.msra.mxu0 %v2484
    %2546 = vmatpush.msra.mxu0 %v2482
    %2547 = vmatpush.msra.mxu0 %v2480
    %2548 = vmatpush.msra.mxu0 %v2478
    %2549 = vmatpush.msra.mxu0 %v2476
    %2550 = vmatmul.f32.gmra.mxu0 %v2443
    %v2551 = vpop.f32.mrf.mxu0
    %v2552 = vadd.f32 %v2532, %v2551
    %2553 = vdwg.mxu0
    %2554 = vmatpush.msra.mxu0 %v2475
    %2555 = vmatpush.msra.mxu0 %v2473
    %2556 = vmatpush.msra.mxu0 %v2471
    %2557 = vmatpush.msra.mxu0 %v2469
    %2558 = vmatpush.msra.mxu0 %v2467
    %2559 = vmatpush.msra.mxu0 %v2465
    %2560 = vmatpush.msra.mxu0 %v2463
    %2561 = vmatpush.msra.mxu0 %v2461
    %2562 = vmatpush.msra.mxu0 %v2459
    %2563 = vmatpush.msra.mxu0 %v2457
    %2564 = vmatpush.msra.mxu0 %v2455
    %2565 = vmatpush.msra.mxu0 %v2453
    %2566 = vmatpush.msra.mxu0 %v2451
    %2567 = vmatpush.msra.mxu0 %v2449
    %2568 = vmatpush.msra.mxu0 %v2447
    %2569 = vmatpush.msra.mxu0 %v2445
    %2570 = vmatmul.f32.gmra.mxu0 %v2442
    %v2571 = vpop.f32.mrf.mxu0
    %v2572 = vadd.f32 %v2511, %v2571
    %2573 = vdwg.mxu0
    %2574 = vmatpush.msra.mxu0 %v2507
    %2575 = vmatpush.msra.mxu0 %v2505
    %2576 = vmatpush.msra.mxu0 %v2503
    %2577 = vmatpush.msra.mxu0 %v2501
    %2578 = vmatpush.msra.mxu0 %v2499
    %2579 = vmatpush.msra.mxu0 %v2497
    %2580 = vmatpush.msra.mxu0 %v2495
    %2581 = vmatpush.msra.mxu0 %v2493
    %2582 = vmatpush.msra.mxu0 %v2491
    %2583 = vmatpush.msra.mxu0 %v2489
    %2584 = vmatpush.msra.mxu0 %v2487
    %2585 = vmatpush.msra.mxu0 %v2485
    %2586 = vmatpush.msra.mxu0 %v2483
    %2587 = vmatpush.msra.mxu0 %v2481
    %2588 = vmatpush.msra.mxu0 %v2479
    %2589 = vmatpush.msra.mxu0 %v2477
    %2590 = vmatmul.f32.gmra.mxu0 %v2443
    %v2591 = vpop.f32.mrf.mxu0
    %v2592 = vadd.f32 %v2572, %v2591
    %2593 = vdwg.mxu0
    %v2594 = vsub.f32 0.0, %v2552
    %v2595 = vsub.f32 0.0, %v2592
    %v2596 = vmul.f32 %v2594, 1.442695
    %v2597 = vpow.pop %v2596
    %v2598 = vmul.f32 %v2595, 1.442695
    %v2599 = vpow.pop %v2598
    %v2600 = vadd.f32 %v2597, 1.0
    %v2601 = vadd.f32 %v2599, 1.0
    %v2602 = vrcp.pop %v2600
    %v2603 = vrcp.pop %v2601
    %v2606 = vrot.slane %v2603, 6
    %vm2607 = vcmask 1041408
    %v2608 = vsel %vm2607, %v2602, %v2606
    %2610 = vst [vmem:[#allocation2] sm:$0xf] %v2608
    // Predicated region
    $region30: #{cnn_forward.5} parent=1 // pred_check
      _
    $region31: #{cnn_forward.5} parent=1 // pred_check_branch
      %2612 = sbr.rel (0) target = $region33
    $region32: #{cnn_forward.5} parent=1 // pred_region
      %2614 = vsyncadd [#allocation3], 0
      %s2616 = sshll.u32 [#allocation2], 4
      %s2617 = int_to_ptr.vmem [resolvable:$true] %s2616
      %s2618 = sshll.u32 %s7, 4
      %s2619 = int_to_ptr.hbm [resolvable:$true] %s2618
      %2621 = dma.vmem_to_hbm [thread:$0]  %s2617, 64, %s2619, [#allocation3]
    $region33: #{cnn_forward.5} parent=1 // pred_fallthru
      _
    // Predicated region
    $region34: #{cnn_forward.5} parent=1 // pred_check
      _
    $region35: #{cnn_forward.5} parent=1 // pred_check_branch
      %2623 = sbr.rel (0) target = $region37
    $region36: #{cnn_forward.5} parent=1 // pred_region
      %2625 = dma.done [#allocation3], 64
    $region37: #{cnn_forward.5} parent=1 // pred_fallthru
      _
    %2626 = vsyncpa [#allocation3], 1

</llo_original>
